<compile_context>
chip_gen: v6e
topology: v6e:2x2x1
jax: 0.10.0
libtpu: 0.0.40
codegen_flags: <defaults>
</compile_context>

<pallas_src>
import jax
import jax.numpy as jnp
from jax.experimental import pallas as pl
from jax.experimental.pallas import tpu as pltpu


def _round_up(n, m):
    return ((n + m - 1) // m) * m


# ---------------------------------------------------------------------------
# Fused kernel: per-time-slab input projection + LSTM recurrence + FC epilogue
# ---------------------------------------------------------------------------
def lstm_fused_kernel(maxlen_ref,                       # scalar-prefetch (SMEM): per-b-block max length
                      x_ref, len_ref, wih_ref, bias_ref, whh_ref, fcw_ref, fcb_ref,
                      out_ref,
                      xg_sc, h_sc, c_sc):
    b_idx = pl.program_id(0)
    t_idx = pl.program_id(1)
    t_blk, b_blk, i_pad = x_ref.shape
    h_pad = whh_ref.shape[0]

    @pl.when(t_idx == 0)
    def _init():
        h_sc[...] = jnp.zeros_like(h_sc)
        c_sc[...] = jnp.zeros_like(c_sc)

    t0 = t_idx * t_blk

    # Skip fully-masked time blocks: state is already frozen for every row in this
    # batch block once t0 >= max(lengths) of the block.
    @pl.when(t0 < maxlen_ref[b_idx])
    def _compute():
        # ---- fused input projection for this slab (one MXU-shaped matmul) ----
        x_slab = x_ref[...].reshape(t_blk * b_blk, i_pad)            # bf16
        xg = (jnp.dot(x_slab, wih_ref[...],
                      preferred_element_type=jnp.float32)
              + bias_ref[...])                                       # f32 accum, f32 bias
        xg_sc[...] = xg.reshape(t_blk, b_blk, 4 * h_pad)

        lengths = len_ref[...]                                       # (b_blk, 1) int32

        def _sigmoid(v):
            # 1 tanh (EUP) instead of exp + divide.
            return 0.5 * jnp.tanh(0.5 * v) + 0.5

        def step(tt, carry):
            gates = xg_sc[tt] + jnp.dot(h_sc[...].astype(jnp.bfloat16),
                                        whh_ref[...],
                                        preferred_element_type=jnp.float32)
            # Lane-aligned gate tiles (each slice is a full 128-lane multiple).
            i_g = _sigmoid(gates[:, 0 * h_pad:1 * h_pad])
            f_g = _sigmoid(gates[:, 1 * h_pad:2 * h_pad])
            g_g = jnp.tanh(gates[:, 2 * h_pad:3 * h_pad])
            o_g = _sigmoid(gates[:, 3 * h_pad:4 * h_pad])
            c_new = f_g * c_sc[...] + i_g * g_g
            h_new = o_g * jnp.tanh(c_new)
            # pack_padded_sequence semantics: only update state while t < length[b].
            valid = (t0 + tt) < lengths                              # (b_blk, 1) bool
            c_sc[...] = jnp.where(valid, c_new, c_sc[...])
            h_sc[...] = jnp.where(valid, h_new, h_sc[...])
            return carry

        jax.lax.fori_loop(0, t_blk, step, 0, unroll=True)

    @pl.when(t_idx == pl.num_programs(1) - 1)
    def _finalize():
        # h_sc == h_{lengths[b]-1}; fused FC: out = h_last @ fcW^T + fc_b
        out_ref[...] = (jnp.dot(h_sc[...].astype(jnp.bfloat16), fcw_ref[...],
                                preferred_element_type=jnp.float32)
                        + fcb_ref[...]).astype(out_ref.dtype)


# ---------------------------------------------------------------------------
# Parameter padding helpers (gate-blocked so each gate lands on its own lane tile)
# ---------------------------------------------------------------------------
def _pad_gate_matrix(w, h, h_pad, k, k_pad):
    """w: (4h, k) PyTorch gate-stacked matrix -> (k_pad, 4*h_pad) transposed, zero-padded."""
    w4 = w.reshape(4, h, k)
    w4p = jnp.zeros((4, h_pad, k_pad), w.dtype).at[:, :h, :k].set(w4)
    return w4p.reshape(4 * h_pad, k_pad).T


def _pad_gate_bias(b, h, h_pad):
    b4 = b.reshape(4, h)
    b4p = jnp.zeros((4, h_pad), b.dtype).at[:, :h].set(b4)
    return b4p.reshape(1, 4 * h_pad)


# ---------------------------------------------------------------------------
# Wrapper
# ---------------------------------------------------------------------------
def lstm_classifier_forward(x, lengths, params, *, t_blk=16, b_blk=None):
    """x: (B, T, I) float32, lengths: (B,) int. Returns (B, num_classes) float32."""
    B, T, I = x.shape
    H = params["w_hh"].shape[1]
    C = params["fc_w"].shape[0]

    # --- padded / aligned sizes ------------------------------------------------
    B_pad = _round_up(B, 8)
    H_pad = _round_up(H, 128)
    I_pad = _round_up(I, 128)
    C_pad = _round_up(C, 128)
    G_pad = 4 * H_pad
    t_blk = max(1, min(t_blk, T))         # sweep: larger t_blk amortizes grid overhead,
    T_pad = _round_up(T, t_blk)           #        but xg scratch VMEM grows linearly.

    if b_blk is None:
        b_blk = B_pad
        # v7x has 2 TensorCores: give the "parallel" batch axis extent >= 2 so the
        # second core isn't idle. v5e/v6e have 1 TC -> keep the full batch in one
        # block (max MXU M-dim fill for the serial recurrence matmul).
        try:
            kind = jax.devices()[0].device_kind.lower()
        except Exception:
            kind = ""
        if ("v7" in kind) and B_pad >= 16 and (B_pad // 2) % 8 == 0:
            b_blk = B_pad // 2
    assert B_pad % b_blk == 0 and b_blk % 8 == 0
    nb = B_pad // b_blk

    # --- weights: gate-blocked padding, pre-transposed, bf16 (f32 bias/accum) ---
    wih_t = _pad_gate_matrix(params["w_ih"], H, H_pad, I, I_pad).astype(jnp.bfloat16)
    whh_t = _pad_gate_matrix(params["w_hh"], H, H_pad, H, H_pad).astype(jnp.bfloat16)
    bias = _pad_gate_bias((params["b_ih"] + params["b_hh"]).astype(jnp.float32), H, H_pad)
    fcw_t = (jnp.zeros((H_pad, C_pad), jnp.float32)
             .at[:H, :C].set(params["fc_w"].T).astype(jnp.bfloat16))
    fcb = jnp.zeros((1, C_pad), jnp.float32).at[0, :C].set(params["fc_b"])

    # --- inputs: time-major, zero-padded, bf16 ----------------------------------
    x_tm = jnp.swapaxes(x, 0, 1)                                        # (T, B, I)
    x_pad = (jnp.zeros((T_pad, B_pad, I_pad), jnp.float32)
             .at[:T, :B, :I].set(x_tm).astype(jnp.bfloat16))
    len_pad = jnp.zeros((B_pad, 1), jnp.int32).at[:B, 0].set(lengths.astype(jnp.int32))
    # Per-batch-block max length (scalar-prefetched) -> skip fully-masked time blocks.
    maxlen = jnp.max(len_pad.reshape(nb, b_blk), axis=1).astype(jnp.int32)

    # --- explicit VMEM budget (review item) --------------------------------------
    vmem_needed = (
        2 * t_blk * b_blk * I_pad * 2        # x slab, bf16, double-buffered
        + I_pad * G_pad * 2                  # W_ih^T, bf16, single-buffered
        + H_pad * G_pad * 2                  # W_hh^T, bf16, single-buffered
        + H_pad * C_pad * 2                  # fc W^T, bf16, single-buffered
        + 8 * G_pad * 4 + 8 * C_pad * 4      # biases (sublane-padded)
        + 2 * b_blk * 128 * 4                # lengths (lane-padded), double-buffered
        + t_blk * b_blk * G_pad * 4          # xg scratch (f32)
        + 2 * b_blk * H_pad * 4              # h, c scratch
        + 2 * b_blk * C_pad * 4              # out, double-buffered
    )
    vmem_limit = int(min(96 * 1024 * 1024, 2 * vmem_needed + (8 << 20)))

    const_buf = pl.Buffered(1)               # never re-DMA'd -> no double-buffer VMEM

    out_pad = pl.pallas_call(
        lstm_fused_kernel,
        out_shape=jax.ShapeDtypeStruct((B_pad, C_pad), jnp.float32),
        grid_spec=pltpu.PrefetchScalarGridSpec(
            num_scalar_prefetch=1,
            grid=(nb, T_pad // t_blk),
            in_specs=[
                pl.BlockSpec((t_blk, b_blk, I_pad), lambda b, t, ml: (t, b, 0)),   # x slab
                pl.BlockSpec((b_blk, 1), lambda b, t, ml: (b, 0)),                 # lengths
                pl.BlockSpec((I_pad, G_pad), lambda b, t, ml: (0, 0),
                             pipeline_mode=const_buf),                             # W_ih^T
                pl.BlockSpec((1, G_pad), lambda b, t, ml: (0, 0),
                             pipeline_mode=const_buf),                             # bias
                pl.BlockSpec((H_pad, G_pad), lambda b, t, ml: (0, 0),
                             pipeline_mode=const_buf),                             # W_hh^T
                pl.BlockSpec((H_pad, C_pad), lambda b, t, ml: (0, 0),
                             pipeline_mode=const_buf),                             # fc W^T
                pl.BlockSpec((1, C_pad), lambda b, t, ml: (0, 0),
                             pipeline_mode=const_buf),                             # fc b
            ],
            out_specs=pl.BlockSpec((b_blk, C_pad), lambda b, t, ml: (b, 0)),
            scratch_shapes=[
                pltpu.VMEM((t_blk, b_blk, G_pad), jnp.float32),   # xg slab (fused projection)
                pltpu.VMEM((b_blk, H_pad), jnp.float32),          # h state
                pltpu.VMEM((b_blk, H_pad), jnp.float32),          # c state
            ],
        ),
        compiler_params=pltpu.CompilerParams(
            dimension_semantics=("parallel", "arbitrary"),  # time MUST stay serial/innermost
            vmem_limit_bytes=vmem_limit,
        ),
    )(maxlen, x_pad, len_pad, wih_t, bias, whh_t, fcw_t, fcb)

    return out_pad[:B, :C]


# ---------------------------------------------------------------------------
# Init + pure-JAX reference (same mixed-precision scheme as the kernel)
# ---------------------------------------------------------------------------
def init_params(key, input_size, hidden_size, num_classes):
    k = 1.0 / jnp.sqrt(hidden_size)
    keys = jax.random.split(key, 6)
    u = lambda kk, shape: jax.random.uniform(kk, shape, jnp.float32, -k, k)
    return {
        "w_ih": u(keys[0], (4 * hidden_size, input_size)),
        "w_hh": u(keys[1], (4 * hidden_size, hidden_size)),
        "b_ih": u(keys[2], (4 * hidden_size,)),
        "b_hh": u(keys[3], (4 * hidden_size,)),
        "fc_w": u(keys[4], (num_classes, hidden_size)),
        "fc_b": u(keys[5], (num_classes,)),
    }


def reference_forward(x, lengths, params):
    """Packed-LSTM + last-valid-step + FC reference, mirroring the kernel's
    bf16-weight / f32-state-and-accumulation scheme."""
    B, T, I = x.shape
    H = params["w_hh"].shape[1]
    bf = lambda a: a.astype(jnp.bfloat16)
    w_ih, w_hh, fc_w = bf(params["w_ih"]), bf(params["w_hh"]), bf(params["fc_w"])
    bias = (params["b_ih"] + params["b_hh"]).astype(jnp.float32)

    xg = jnp.einsum("bti,gi->tbg", bf(x), w_ih,
                    preferred_element_type=jnp.float32) + bias      # (T, B, 4H)

    def step(carry, inp):
        h, c = carry
        xg_t, t = inp
        gates = xg_t + jnp.dot(bf(h), w_hh.T, preferred_element_type=jnp.float32)
        i_g = jax.nn.sigmoid(gates[:, 0 * H:1 * H])
        f_g = jax.nn.sigmoid(gates[:, 1 * H:2 * H])
        g_g = jnp.tanh(gates[:, 2 * H:3 * H])
        o_g = jax.nn.sigmoid(gates[:, 3 * H:4 * H])
        c_new = f_g * c + i_g * g_g
        h_new = o_g * jnp.tanh(c_new)
        valid = (t < lengths)[:, None]
        return (jnp.where(valid, h_new, h), jnp.where(valid, c_new, c)), None

    h0 = jnp.zeros((B, H), jnp.float32)
    c0 = jnp.zeros((B, H), jnp.float32)
    (h_last, _), _ = jax.lax.scan(step, (h0, c0), (xg, jnp.arange(T)))
    return (jnp.dot(bf(h_last), fc_w.T, preferred_element_type=jnp.float32)
            + params["fc_b"])


if __name__ == "__main__":
    B, T, I, H, C = 4, 8, 16, 32, 8

    key = jax.random.PRNGKey(0)
    k_x, k_p = jax.random.split(key)
    x = jax.random.normal(k_x, (B, T, I), jnp.float32)
    lengths = jnp.array([8, 5, 3, 6], dtype=jnp.int32)
    params = init_params(k_p, I, H, C)

    out = lstm_classifier_forward(x, lengths, params)
    out = jax.block_until_ready(out)

    ref = reference_forward(x, lengths, params)
    assert out.shape == (B, C)
    max_err = float(jnp.max(jnp.abs(out - ref)))
    assert jnp.allclose(out, ref, atol=2e-3, rtol=2e-3), f"mismatch vs reference, max_err={max_err}"

    print("KERNEL_OK")
</pallas_src>

<mosaic_0001>
module attributes {stable_mosaic.version = 11 : i64} {
  func.func @lstm_fused_kernel(%arg0: i32, %arg1: i32, %arg2: memref<1xi32, #tpu.memory_space<smem>>, %arg3: memref<8x8x128xbf16, #tpu.memory_space<vmem>>, %arg4: memref<8x1xi32, #tpu.memory_space<vmem>>, %arg5: memref<128x512xbf16, #tpu.memory_space<vmem>>, %arg6: memref<1x512xf32, #tpu.memory_space<vmem>>, %arg7: memref<128x512xbf16, #tpu.memory_space<vmem>>, %arg8: memref<128x128xbf16, #tpu.memory_space<vmem>>, %arg9: memref<1x128xf32, #tpu.memory_space<vmem>>, %arg10: memref<8x128xf32, #tpu.memory_space<vmem>>, %arg11: memref<8x8x512xf32, #tpu.memory_space<vmem>>, %arg12: memref<8x128xf32, #tpu.memory_space<vmem>>, %arg13: memref<8x128xf32, #tpu.memory_space<vmem>>) attributes {dimension_semantics = [#tpu.dimension_semantics<parallel>, #tpu.dimension_semantics<arbitrary>], iteration_bounds = array<i64: 1, 1>, scalar_prefetch = 1 : i64, scratch_operands = 3 : i64, tpu.core_type = #tpu.core_type<tc>, window_params = [{transform_indices = @transform_0, window_bounds = array<i64: 8, 8, 128>}, {transform_indices = @transform_1, window_bounds = array<i64: 8, 1>}, {pipeline_mode = #tpu.pipeline_mode<synchronous>, transform_indices = @transform_2, window_bounds = array<i64: 128, 512>}, {pipeline_mode = #tpu.pipeline_mode<synchronous>, transform_indices = @transform_3, window_bounds = array<i64: 1, 512>}, {pipeline_mode = #tpu.pipeline_mode<synchronous>, transform_indices = @transform_4, window_bounds = array<i64: 128, 512>}, {pipeline_mode = #tpu.pipeline_mode<synchronous>, transform_indices = @transform_5, window_bounds = array<i64: 128, 128>}, {pipeline_mode = #tpu.pipeline_mode<synchronous>, transform_indices = @transform_6, window_bounds = array<i64: 1, 128>}, {transform_indices = @transform_7, window_bounds = array<i64: 8, 128>}]} {
    %c0_i32 = arith.constant 0 : i32
    %0 = arith.cmpi eq, %arg1, %c0_i32 : i32
    %1 = arith.extui %0 : i1 to i32
    %c0_i32_0 = arith.constant 0 : i32
    %2 = arith.cmpi ne, %1, %c0_i32_0 : i32
    scf.if %2 {
      %cst = arith.constant 0.000000e+00 : f32
      %12 = vector.broadcast %cst : f32 to vector<8x128xf32>
      %c0 = arith.constant 0 : index
      %c0_4 = arith.constant 0 : index
      %13 = vector.load %arg12[%c0, %c0_4] : memref<8x128xf32, #tpu.memory_space<vmem>>, vector<8x128xf32>
      tpu.vector_store %arg12[%c0, %c0_4], %12 {strides = array<i32>} : memref<8x128xf32, #tpu.memory_space<vmem>>, vector<8x128xf32>,
      %cst_5 = arith.constant 0.000000e+00 : f32
      %14 = vector.broadcast %cst_5 : f32 to vector<8x128xf32>
      %c0_6 = arith.constant 0 : index
      %c0_7 = arith.constant 0 : index
      %15 = vector.load %arg13[%c0_6, %c0_7] : memref<8x128xf32, #tpu.memory_space<vmem>>, vector<8x128xf32>
      tpu.vector_store %arg13[%c0_6, %c0_7], %14 {strides = array<i32>} : memref<8x128xf32, #tpu.memory_space<vmem>>, vector<8x128xf32>,
    } else {
    }
    %c8_i32 = arith.constant 8 : i32
    %3 = arith.muli %arg1, %c8_i32 : i32
    %4 = arith.index_cast %arg0 : i32 to index
    %5 = memref.load %arg2[%4] : memref<1xi32, #tpu.memory_space<smem>>
    %6 = arith.cmpi slt, %3, %5 : i32
    %7 = arith.extui %6 : i1 to i32
    %c0_i32_1 = arith.constant 0 : i32
    %8 = arith.cmpi ne, %7, %c0_i32_1 : i32
    scf.if %8 {
      %c0 = arith.constant 0 : index
      %c0_4 = arith.constant 0 : index
      %c0_5 = arith.constant 0 : index
      %12 = vector.load %arg3[%c0, %c0_4, %c0_5] : memref<8x8x128xbf16, #tpu.memory_space<vmem>>, vector<8x8x128xbf16>
      %13 = vector.shape_cast %12 : vector<8x8x128xbf16> to vector<64x128xbf16>
      %c0_6 = arith.constant 0 : index
      %c0_7 = arith.constant 0 : index
      %14 = vector.load %arg5[%c0_6, %c0_7] : memref<128x512xbf16, #tpu.memory_space<vmem>>, vector<128x512xbf16>
      %cst = arith.constant dense<0.000000e+00> : vector<64x512xf32>
      %15 = tpu.matmul %13, %14, %cst {dimension_numbers = #tpu.dot_dimension_numbers<[1], [0], [0], [1], [0, 0, 1, 1], [], []>} : vector<64x128xbf16>, vector<128x512xbf16>, vector<64x512xf32> -> vector<64x512xf32>
      %c0_8 = arith.constant 0 : index
      %c0_9 = arith.constant 0 : index
      %16 = vector.load %arg6[%c0_8, %c0_9] : memref<1x512xf32, #tpu.memory_space<vmem>>, vector<1x512xf32>
      %17 = vector.broadcast %16 : vector<1x512xf32> to vector<64x512xf32>
      %18 = arith.addf %15, %17 : vector<64x512xf32>
      %19 = vector.shape_cast %18 : vector<64x512xf32> to vector<8x8x512xf32>
      %c0_10 = arith.constant 0 : index
      %c0_11 = arith.constant 0 : index
      %c0_12 = arith.constant 0 : index
      %20 = vector.load %arg11[%c0_10, %c0_11, %c0_12] : memref<8x8x512xf32, #tpu.memory_space<vmem>>, vector<8x8x512xf32>
      tpu.vector_store %arg11[%c0_10, %c0_11, %c0_12], %19 {strides = array<i32>} : memref<8x8x512xf32, #tpu.memory_space<vmem>>, vector<8x8x512xf32>,
      %c0_13 = arith.constant 0 : index
      %c0_14 = arith.constant 0 : index
      %21 = vector.load %arg4[%c0_13, %c0_14] : memref<8x1xi32, #tpu.memory_space<vmem>>, vector<8x1xi32>
      %c0_i32_15 = arith.constant 0 : i32
      %22 = arith.index_cast %c0_i32_15 : i32 to index
      %c0_16 = arith.constant 0 : index
      %c0_17 = arith.constant 0 : index
      %23 = vector.load %arg11[%22, %c0_16, %c0_17] : memref<8x8x512xf32, #tpu.memory_space<vmem>>, vector<1x8x512xf32>
      %24 = vector.shape_cast %23 : vector<1x8x512xf32> to vector<8x512xf32>
      %c0_18 = arith.constant 0 : index
      %c0_19 = arith.constant 0 : index
      %25 = vector.load %arg12[%c0_18, %c0_19] : memref<8x128xf32, #tpu.memory_space<vmem>>, vector<8x128xf32>
      %26 = arith.truncf %25 : vector<8x128xf32> to vector<8x128xbf16>
      %c0_20 = arith.constant 0 : index
      %c0_21 = arith.constant 0 : index
      %27 = vector.load %arg7[%c0_20, %c0_21] : memref<128x512xbf16, #tpu.memory_space<vmem>>, vector<128x512xbf16>
      %cst_22 = arith.constant dense<0.000000e+00> : vector<8x512xf32>
      %28 = tpu.matmul %26, %27, %cst_22 {dimension_numbers = #tpu.dot_dimension_numbers<[1], [0], [0], [1], [0, 0, 1, 1], [], []>} : vector<8x128xbf16>, vector<128x512xbf16>, vector<8x512xf32> -> vector<8x512xf32>
      %29 = arith.addf %24, %28 : vector<8x512xf32>
      %30 = vector.extract_strided_slice %29 {offsets = [0, 0], sizes = [8, 128], strides = [1, 1]} : vector<8x512xf32> to vector<8x128xf32>
      %cst_23 = arith.constant 5.000000e-01 : f32
      %31 = vector.broadcast %cst_23 : f32 to vector<8x128xf32>
      %32 = arith.mulf %31, %30 : vector<8x128xf32>
      %33 = math.tanh %32 : vector<8x128xf32>
      %cst_24 = arith.constant 5.000000e-01 : f32
      %34 = vector.broadcast %cst_24 : f32 to vector<8x128xf32>
      %35 = arith.mulf %34, %33 : vector<8x128xf32>
      %cst_25 = arith.constant 5.000000e-01 : f32
      %36 = vector.broadcast %cst_25 : f32 to vector<8x128xf32>
      %37 = arith.addf %35, %36 : vector<8x128xf32>
      %38 = vector.extract_strided_slice %29 {offsets = [0, 128], sizes = [8, 128], strides = [1, 1]} : vector<8x512xf32> to vector<8x128xf32>
      %cst_26 = arith.constant 5.000000e-01 : f32
      %39 = vector.broadcast %cst_26 : f32 to vector<8x128xf32>
      %40 = arith.mulf %39, %38 : vector<8x128xf32>
      %41 = math.tanh %40 : vector<8x128xf32>
      %cst_27 = arith.constant 5.000000e-01 : f32
      %42 = vector.broadcast %cst_27 : f32 to vector<8x128xf32>
      %43 = arith.mulf %42, %41 : vector<8x128xf32>
      %cst_28 = arith.constant 5.000000e-01 : f32
      %44 = vector.broadcast %cst_28 : f32 to vector<8x128xf32>
      %45 = arith.addf %43, %44 : vector<8x128xf32>
      %46 = vector.extract_strided_slice %29 {offsets = [0, 256], sizes = [8, 128], strides = [1, 1]} : vector<8x512xf32> to vector<8x128xf32>
      %47 = math.tanh %46 : vector<8x128xf32>
      %48 = vector.extract_strided_slice %29 {offsets = [0, 384], sizes = [8, 128], strides = [1, 1]} : vector<8x512xf32> to vector<8x128xf32>
      %cst_29 = arith.constant 5.000000e-01 : f32
      %49 = vector.broadcast %cst_29 : f32 to vector<8x128xf32>
      %50 = arith.mulf %49, %48 : vector<8x128xf32>
      %51 = math.tanh %50 : vector<8x128xf32>
      %cst_30 = arith.constant 5.000000e-01 : f32
      %52 = vector.broadcast %cst_30 : f32 to vector<8x128xf32>
      %53 = arith.mulf %52, %51 : vector<8x128xf32>
      %cst_31 = arith.constant 5.000000e-01 : f32
      %54 = vector.broadcast %cst_31 : f32 to vector<8x128xf32>
      %55 = arith.addf %53, %54 : vector<8x128xf32>
      %c0_32 = arith.constant 0 : index
      %c0_33 = arith.constant 0 : index
      %56 = vector.load %arg13[%c0_32, %c0_33] : memref<8x128xf32, #tpu.memory_space<vmem>>, vector<8x128xf32>
      %57 = arith.mulf %45, %56 : vector<8x128xf32>
      %58 = arith.mulf %37, %47 : vector<8x128xf32>
      %59 = arith.addf %57, %58 : vector<8x128xf32>
      %60 = math.tanh %59 : vector<8x128xf32>
      %61 = arith.mulf %55, %60 : vector<8x128xf32>
      %62 = arith.addi %3, %c0_i32_15 : i32
      %63 = vector.broadcast %62 : i32 to vector<8x1xi32>
      %64 = arith.cmpi slt, %63, %21 : vector<8x1xi32>
      %c0_34 = arith.constant 0 : index
      %c0_35 = arith.constant 0 : index
      %65 = vector.load %arg13[%c0_34, %c0_35] : memref<8x128xf32, #tpu.memory_space<vmem>>, vector<8x128xf32>
      %66 = vector.shape_cast %64 : vector<8x1xi1> to vector<8x1xi1>
      %67 = vector.broadcast %66 : vector<8x1xi1> to vector<8x128xi1>
      %68 = arith.select %67, %59, %65 : vector<8x128xi1>, vector<8x128xf32>
      %c0_36 = arith.constant 0 : index
      %c0_37 = arith.constant 0 : index
      %69 = vector.load %arg13[%c0_36, %c0_37] : memref<8x128xf32, #tpu.memory_space<vmem>>, vector<8x128xf32>
      tpu.vector_store %arg13[%c0_36, %c0_37], %68 {strides = array<i32>} : memref<8x128xf32, #tpu.memory_space<vmem>>, vector<8x128xf32>,
      %c0_38 = arith.constant 0 : index
      %c0_39 = arith.constant 0 : index
      %70 = vector.load %arg12[%c0_38, %c0_39] : memref<8x128xf32, #tpu.memory_space<vmem>>, vector<8x128xf32>
      %71 = vector.shape_cast %64 : vector<8x1xi1> to vector<8x1xi1>
      %72 = vector.broadcast %71 : vector<8x1xi1> to vector<8x128xi1>
      %73 = arith.select %72, %61, %70 : vector<8x128xi1>, vector<8x128xf32>
      %c0_40 = arith.constant 0 : index
      %c0_41 = arith.constant 0 : index
      %74 = vector.load %arg12[%c0_40, %c0_41] : memref<8x128xf32, #tpu.memory_space<vmem>>, vector<8x128xf32>
      tpu.vector_store %arg12[%c0_40, %c0_41], %73 {strides = array<i32>} : memref<8x128xf32, #tpu.memory_space<vmem>>, vector<8x128xf32>,
      %c1_i32 = arith.constant 1 : i32
      %75 = arith.index_cast %c1_i32 : i32 to index
      %c0_42 = arith.constant 0 : index
      %c0_43 = arith.constant 0 : index
      %76 = vector.load %arg11[%75, %c0_42, %c0_43] : memref<8x8x512xf32, #tpu.memory_space<vmem>>, vector<1x8x512xf32>
      %77 = vector.shape_cast %76 : vector<1x8x512xf32> to vector<8x512xf32>
      %c0_44 = arith.constant 0 : index
      %c0_45 = arith.constant 0 : index
      %78 = vector.load %arg12[%c0_44, %c0_45] : memref<8x128xf32, #tpu.memory_space<vmem>>, vector<8x128xf32>
      %79 = arith.truncf %78 : vector<8x128xf32> to vector<8x128xbf16>
      %c0_46 = arith.constant 0 : index
      %c0_47 = arith.constant 0 : index
      %80 = vector.load %arg7[%c0_46, %c0_47] : memref<128x512xbf16, #tpu.memory_space<vmem>>, vector<128x512xbf16>
      %cst_48 = arith.constant dense<0.000000e+00> : vector<8x512xf32>
      %81 = tpu.matmul %79, %80, %cst_48 {dimension_numbers = #tpu.dot_dimension_numbers<[1], [0], [0], [1], [0, 0, 1, 1], [], []>} : vector<8x128xbf16>, vector<128x512xbf16>, vector<8x512xf32> -> vector<8x512xf32>
      %82 = arith.addf %77, %81 : vector<8x512xf32>
      %83 = vector.extract_strided_slice %82 {offsets = [0, 0], sizes = [8, 128], strides = [1, 1]} : vector<8x512xf32> to vector<8x128xf32>
      %cst_49 = arith.constant 5.000000e-01 : f32
      %84 = vector.broadcast %cst_49 : f32 to vector<8x128xf32>
      %85 = arith.mulf %84, %83 : vector<8x128xf32>
      %86 = math.tanh %85 : vector<8x128xf32>
      %cst_50 = arith.constant 5.000000e-01 : f32
      %87 = vector.broadcast %cst_50 : f32 to vector<8x128xf32>
      %88 = arith.mulf %87, %86 : vector<8x128xf32>
      %cst_51 = arith.constant 5.000000e-01 : f32
      %89 = vector.broadcast %cst_51 : f32 to vector<8x128xf32>
      %90 = arith.addf %88, %89 : vector<8x128xf32>
      %91 = vector.extract_strided_slice %82 {offsets = [0, 128], sizes = [8, 128], strides = [1, 1]} : vector<8x512xf32> to vector<8x128xf32>
      %cst_52 = arith.constant 5.000000e-01 : f32
      %92 = vector.broadcast %cst_52 : f32 to vector<8x128xf32>
      %93 = arith.mulf %92, %91 : vector<8x128xf32>
      %94 = math.tanh %93 : vector<8x128xf32>
      %cst_53 = arith.constant 5.000000e-01 : f32
      %95 = vector.broadcast %cst_53 : f32 to vector<8x128xf32>
      %96 = arith.mulf %95, %94 : vector<8x128xf32>
      %cst_54 = arith.constant 5.000000e-01 : f32
      %97 = vector.broadcast %cst_54 : f32 to vector<8x128xf32>
      %98 = arith.addf %96, %97 : vector<8x128xf32>
      %99 = vector.extract_strided_slice %82 {offsets = [0, 256], sizes = [8, 128], strides = [1, 1]} : vector<8x512xf32> to vector<8x128xf32>
      %100 = math.tanh %99 : vector<8x128xf32>
      %101 = vector.extract_strided_slice %82 {offsets = [0, 384], sizes = [8, 128], strides = [1, 1]} : vector<8x512xf32> to vector<8x128xf32>
      %cst_55 = arith.constant 5.000000e-01 : f32
      %102 = vector.broadcast %cst_55 : f32 to vector<8x128xf32>
      %103 = arith.mulf %102, %101 : vector<8x128xf32>
      %104 = math.tanh %103 : vector<8x128xf32>
      %cst_56 = arith.constant 5.000000e-01 : f32
      %105 = vector.broadcast %cst_56 : f32 to vector<8x128xf32>
      %106 = arith.mulf %105, %104 : vector<8x128xf32>
      %cst_57 = arith.constant 5.000000e-01 : f32
      %107 = vector.broadcast %cst_57 : f32 to vector<8x128xf32>
      %108 = arith.addf %106, %107 : vector<8x128xf32>
      %c0_58 = arith.constant 0 : index
      %c0_59 = arith.constant 0 : index
      %109 = vector.load %arg13[%c0_58, %c0_59] : memref<8x128xf32, #tpu.memory_space<vmem>>, vector<8x128xf32>
      %110 = arith.mulf %98, %109 : vector<8x128xf32>
      %111 = arith.mulf %90, %100 : vector<8x128xf32>
      %112 = arith.addf %110, %111 : vector<8x128xf32>
      %113 = math.tanh %112 : vector<8x128xf32>
      %114 = arith.mulf %108, %113 : vector<8x128xf32>
      %115 = arith.addi %3, %c1_i32 : i32
      %116 = vector.broadcast %115 : i32 to vector<8x1xi32>
      %117 = arith.cmpi slt, %116, %21 : vector<8x1xi32>
      %c0_60 = arith.constant 0 : index
      %c0_61 = arith.constant 0 : index
      %118 = vector.load %arg13[%c0_60, %c0_61] : memref<8x128xf32, #tpu.memory_space<vmem>>, vector<8x128xf32>
      %119 = vector.shape_cast %117 : vector<8x1xi1> to vector<8x1xi1>
      %120 = vector.broadcast %119 : vector<8x1xi1> to vector<8x128xi1>
      %121 = arith.select %120, %112, %118 : vector<8x128xi1>, vector<8x128xf32>
      %c0_62 = arith.constant 0 : index
      %c0_63 = arith.constant 0 : index
      %122 = vector.load %arg13[%c0_62, %c0_63] : memref<8x128xf32, #tpu.memory_space<vmem>>, vector<8x128xf32>
      tpu.vector_store %arg13[%c0_62, %c0_63], %121 {strides = array<i32>} : memref<8x128xf32, #tpu.memory_space<vmem>>, vector<8x128xf32>,
      %c0_64 = arith.constant 0 : index
      %c0_65 = arith.constant 0 : index
      %123 = vector.load %arg12[%c0_64, %c0_65] : memref<8x128xf32, #tpu.memory_space<vmem>>, vector<8x128xf32>
      %124 = vector.shape_cast %117 : vector<8x1xi1> to vector<8x1xi1>
      %125 = vector.broadcast %124 : vector<8x1xi1> to vector<8x128xi1>
      %126 = arith.select %125, %114, %123 : vector<8x128xi1>, vector<8x128xf32>
      %c0_66 = arith.constant 0 : index
      %c0_67 = arith.constant 0 : index
      %127 = vector.load %arg12[%c0_66, %c0_67] : memref<8x128xf32, #tpu.memory_space<vmem>>, vector<8x128xf32>
      tpu.vector_store %arg12[%c0_66, %c0_67], %126 {strides = array<i32>} : memref<8x128xf32, #tpu.memory_space<vmem>>, vector<8x128xf32>,
      %c2_i32 = arith.constant 2 : i32
      %128 = arith.index_cast %c2_i32 : i32 to index
      %c0_68 = arith.constant 0 : index
      %c0_69 = arith.constant 0 : index
      %129 = vector.load %arg11[%128, %c0_68, %c0_69] : memref<8x8x512xf32, #tpu.memory_space<vmem>>, vector<1x8x512xf32>
      %130 = vector.shape_cast %129 : vector<1x8x512xf32> to vector<8x512xf32>
      %c0_70 = arith.constant 0 : index
      %c0_71 = arith.constant 0 : index
      %131 = vector.load %arg12[%c0_70, %c0_71] : memref<8x128xf32, #tpu.memory_space<vmem>>, vector<8x128xf32>
      %132 = arith.truncf %131 : vector<8x128xf32> to vector<8x128xbf16>
      %c0_72 = arith.constant 0 : index
      %c0_73 = arith.constant 0 : index
      %133 = vector.load %arg7[%c0_72, %c0_73] : memref<128x512xbf16, #tpu.memory_space<vmem>>, vector<128x512xbf16>
      %cst_74 = arith.constant dense<0.000000e+00> : vector<8x512xf32>
      %134 = tpu.matmul %132, %133, %cst_74 {dimension_numbers = #tpu.dot_dimension_numbers<[1], [0], [0], [1], [0, 0, 1, 1], [], []>} : vector<8x128xbf16>, vector<128x512xbf16>, vector<8x512xf32> -> vector<8x512xf32>
      %135 = arith.addf %130, %134 : vector<8x512xf32>
      %136 = vector.extract_strided_slice %135 {offsets = [0, 0], sizes = [8, 128], strides = [1, 1]} : vector<8x512xf32> to vector<8x128xf32>
      %cst_75 = arith.constant 5.000000e-01 : f32
      %137 = vector.broadcast %cst_75 : f32 to vector<8x128xf32>
      %138 = arith.mulf %137, %136 : vector<8x128xf32>
      %139 = math.tanh %138 : vector<8x128xf32>
      %cst_76 = arith.constant 5.000000e-01 : f32
      %140 = vector.broadcast %cst_76 : f32 to vector<8x128xf32>
      %141 = arith.mulf %140, %139 : vector<8x128xf32>
      %cst_77 = arith.constant 5.000000e-01 : f32
      %142 = vector.broadcast %cst_77 : f32 to vector<8x128xf32>
      %143 = arith.addf %141, %142 : vector<8x128xf32>
      %144 = vector.extract_strided_slice %135 {offsets = [0, 128], sizes = [8, 128], strides = [1, 1]} : vector<8x512xf32> to vector<8x128xf32>
      %cst_78 = arith.constant 5.000000e-01 : f32
      %145 = vector.broadcast %cst_78 : f32 to vector<8x128xf32>
      %146 = arith.mulf %145, %144 : vector<8x128xf32>
      %147 = math.tanh %146 : vector<8x128xf32>
      %cst_79 = arith.constant 5.000000e-01 : f32
      %148 = vector.broadcast %cst_79 : f32 to vector<8x128xf32>
      %149 = arith.mulf %148, %147 : vector<8x128xf32>
      %cst_80 = arith.constant 5.000000e-01 : f32
      %150 = vector.broadcast %cst_80 : f32 to vector<8x128xf32>
      %151 = arith.addf %149, %150 : vector<8x128xf32>
      %152 = vector.extract_strided_slice %135 {offsets = [0, 256], sizes = [8, 128], strides = [1, 1]} : vector<8x512xf32> to vector<8x128xf32>
      %153 = math.tanh %152 : vector<8x128xf32>
      %154 = vector.extract_strided_slice %135 {offsets = [0, 384], sizes = [8, 128], strides = [1, 1]} : vector<8x512xf32> to vector<8x128xf32>
      %cst_81 = arith.constant 5.000000e-01 : f32
      %155 = vector.broadcast %cst_81 : f32 to vector<8x128xf32>
      %156 = arith.mulf %155, %154 : vector<8x128xf32>
      %157 = math.tanh %156 : vector<8x128xf32>
      %cst_82 = arith.constant 5.000000e-01 : f32
      %158 = vector.broadcast %cst_82 : f32 to vector<8x128xf32>
      %159 = arith.mulf %158, %157 : vector<8x128xf32>
      %cst_83 = arith.constant 5.000000e-01 : f32
      %160 = vector.broadcast %cst_83 : f32 to vector<8x128xf32>
      %161 = arith.addf %159, %160 : vector<8x128xf32>
      %c0_84 = arith.constant 0 : index
      %c0_85 = arith.constant 0 : index
      %162 = vector.load %arg13[%c0_84, %c0_85] : memref<8x128xf32, #tpu.memory_space<vmem>>, vector<8x128xf32>
      %163 = arith.mulf %151, %162 : vector<8x128xf32>
      %164 = arith.mulf %143, %153 : vector<8x128xf32>
      %165 = arith.addf %163, %164 : vector<8x128xf32>
      %166 = math.tanh %165 : vector<8x128xf32>
      %167 = arith.mulf %161, %166 : vector<8x128xf32>
      %168 = arith.addi %3, %c2_i32 : i32
      %169 = vector.broadcast %168 : i32 to vector<8x1xi32>
      %170 = arith.cmpi slt, %169, %21 : vector<8x1xi32>
      %c0_86 = arith.constant 0 : index
      %c0_87 = arith.constant 0 : index
      %171 = vector.load %arg13[%c0_86, %c0_87] : memref<8x128xf32, #tpu.memory_space<vmem>>, vector<8x128xf32>
      %172 = vector.shape_cast %170 : vector<8x1xi1> to vector<8x1xi1>
      %173 = vector.broadcast %172 : vector<8x1xi1> to vector<8x128xi1>
      %174 = arith.select %173, %165, %171 : vector<8x128xi1>, vector<8x128xf32>
      %c0_88 = arith.constant 0 : index
      %c0_89 = arith.constant 0 : index
      %175 = vector.load %arg13[%c0_88, %c0_89] : memref<8x128xf32, #tpu.memory_space<vmem>>, vector<8x128xf32>
      tpu.vector_store %arg13[%c0_88, %c0_89], %174 {strides = array<i32>} : memref<8x128xf32, #tpu.memory_space<vmem>>, vector<8x128xf32>,
      %c0_90 = arith.constant 0 : index
      %c0_91 = arith.constant 0 : index
      %176 = vector.load %arg12[%c0_90, %c0_91] : memref<8x128xf32, #tpu.memory_space<vmem>>, vector<8x128xf32>
      %177 = vector.shape_cast %170 : vector<8x1xi1> to vector<8x1xi1>
      %178 = vector.broadcast %177 : vector<8x1xi1> to vector<8x128xi1>
      %179 = arith.select %178, %167, %176 : vector<8x128xi1>, vector<8x128xf32>
      %c0_92 = arith.constant 0 : index
      %c0_93 = arith.constant 0 : index
      %180 = vector.load %arg12[%c0_92, %c0_93] : memref<8x128xf32, #tpu.memory_space<vmem>>, vector<8x128xf32>
      tpu.vector_store %arg12[%c0_92, %c0_93], %179 {strides = array<i32>} : memref<8x128xf32, #tpu.memory_space<vmem>>, vector<8x128xf32>,
      %c3_i32 = arith.constant 3 : i32
      %181 = arith.index_cast %c3_i32 : i32 to index
      %c0_94 = arith.constant 0 : index
      %c0_95 = arith.constant 0 : index
      %182 = vector.load %arg11[%181, %c0_94, %c0_95] : memref<8x8x512xf32, #tpu.memory_space<vmem>>, vector<1x8x512xf32>
      %183 = vector.shape_cast %182 : vector<1x8x512xf32> to vector<8x512xf32>
      %c0_96 = arith.constant 0 : index
      %c0_97 = arith.constant 0 : index
      %184 = vector.load %arg12[%c0_96, %c0_97] : memref<8x128xf32, #tpu.memory_space<vmem>>, vector<8x128xf32>
      %185 = arith.truncf %184 : vector<8x128xf32> to vector<8x128xbf16>
      %c0_98 = arith.constant 0 : index
      %c0_99 = arith.constant 0 : index
      %186 = vector.load %arg7[%c0_98, %c0_99] : memref<128x512xbf16, #tpu.memory_space<vmem>>, vector<128x512xbf16>
      %cst_100 = arith.constant dense<0.000000e+00> : vector<8x512xf32>
      %187 = tpu.matmul %185, %186, %cst_100 {dimension_numbers = #tpu.dot_dimension_numbers<[1], [0], [0], [1], [0, 0, 1, 1], [], []>} : vector<8x128xbf16>, vector<128x512xbf16>, vector<8x512xf32> -> vector<8x512xf32>
      %188 = arith.addf %183, %187 : vector<8x512xf32>
      %189 = vector.extract_strided_slice %188 {offsets = [0, 0], sizes = [8, 128], strides = [1, 1]} : vector<8x512xf32> to vector<8x128xf32>
      %cst_101 = arith.constant 5.000000e-01 : f32
      %190 = vector.broadcast %cst_101 : f32 to vector<8x128xf32>
      %191 = arith.mulf %190, %189 : vector<8x128xf32>
      %192 = math.tanh %191 : vector<8x128xf32>
      %cst_102 = arith.constant 5.000000e-01 : f32
      %193 = vector.broadcast %cst_102 : f32 to vector<8x128xf32>
      %194 = arith.mulf %193, %192 : vector<8x128xf32>
      %cst_103 = arith.constant 5.000000e-01 : f32
      %195 = vector.broadcast %cst_103 : f32 to vector<8x128xf32>
      %196 = arith.addf %194, %195 : vector<8x128xf32>
      %197 = vector.extract_strided_slice %188 {offsets = [0, 128], sizes = [8, 128], strides = [1, 1]} : vector<8x512xf32> to vector<8x128xf32>
      %cst_104 = arith.constant 5.000000e-01 : f32
      %198 = vector.broadcast %cst_104 : f32 to vector<8x128xf32>
      %199 = arith.mulf %198, %197 : vector<8x128xf32>
      %200 = math.tanh %199 : vector<8x128xf32>
      %cst_105 = arith.constant 5.000000e-01 : f32
      %201 = vector.broadcast %cst_105 : f32 to vector<8x128xf32>
      %202 = arith.mulf %201, %200 : vector<8x128xf32>
      %cst_106 = arith.constant 5.000000e-01 : f32
      %203 = vector.broadcast %cst_106 : f32 to vector<8x128xf32>
      %204 = arith.addf %202, %203 : vector<8x128xf32>
      %205 = vector.extract_strided_slice %188 {offsets = [0, 256], sizes = [8, 128], strides = [1, 1]} : vector<8x512xf32> to vector<8x128xf32>
      %206 = math.tanh %205 : vector<8x128xf32>
      %207 = vector.extract_strided_slice %188 {offsets = [0, 384], sizes = [8, 128], strides = [1, 1]} : vector<8x512xf32> to vector<8x128xf32>
      %cst_107 = arith.constant 5.000000e-01 : f32
      %208 = vector.broadcast %cst_107 : f32 to vector<8x128xf32>
      %209 = arith.mulf %208, %207 : vector<8x128xf32>
      %210 = math.tanh %209 : vector<8x128xf32>
      %cst_108 = arith.constant 5.000000e-01 : f32
      %211 = vector.broadcast %cst_108 : f32 to vector<8x128xf32>
      %212 = arith.mulf %211, %210 : vector<8x128xf32>
      %cst_109 = arith.constant 5.000000e-01 : f32
      %213 = vector.broadcast %cst_109 : f32 to vector<8x128xf32>
      %214 = arith.addf %212, %213 : vector<8x128xf32>
      %c0_110 = arith.constant 0 : index
      %c0_111 = arith.constant 0 : index
      %215 = vector.load %arg13[%c0_110, %c0_111] : memref<8x128xf32, #tpu.memory_space<vmem>>, vector<8x128xf32>
      %216 = arith.mulf %204, %215 : vector<8x128xf32>
      %217 = arith.mulf %196, %206 : vector<8x128xf32>
      %218 = arith.addf %216, %217 : vector<8x128xf32>
      %219 = math.tanh %218 : vector<8x128xf32>
      %220 = arith.mulf %214, %219 : vector<8x128xf32>
      %221 = arith.addi %3, %c3_i32 : i32
      %222 = vector.broadcast %221 : i32 to vector<8x1xi32>
      %223 = arith.cmpi slt, %222, %21 : vector<8x1xi32>
      %c0_112 = arith.constant 0 : index
      %c0_113 = arith.constant 0 : index
      %224 = vector.load %arg13[%c0_112, %c0_113] : memref<8x128xf32, #tpu.memory_space<vmem>>, vector<8x128xf32>
      %225 = vector.shape_cast %223 : vector<8x1xi1> to vector<8x1xi1>
      %226 = vector.broadcast %225 : vector<8x1xi1> to vector<8x128xi1>
      %227 = arith.select %226, %218, %224 : vector<8x128xi1>, vector<8x128xf32>
      %c0_114 = arith.constant 0 : index
      %c0_115 = arith.constant 0 : index
      %228 = vector.load %arg13[%c0_114, %c0_115] : memref<8x128xf32, #tpu.memory_space<vmem>>, vector<8x128xf32>
      tpu.vector_store %arg13[%c0_114, %c0_115], %227 {strides = array<i32>} : memref<8x128xf32, #tpu.memory_space<vmem>>, vector<8x128xf32>,
      %c0_116 = arith.constant 0 : index
      %c0_117 = arith.constant 0 : index
      %229 = vector.load %arg12[%c0_116, %c0_117] : memref<8x128xf32, #tpu.memory_space<vmem>>, vector<8x128xf32>
      %230 = vector.shape_cast %223 : vector<8x1xi1> to vector<8x1xi1>
      %231 = vector.broadcast %230 : vector<8x1xi1> to vector<8x128xi1>
      %232 = arith.select %231, %220, %229 : vector<8x128xi1>, vector<8x128xf32>
      %c0_118 = arith.constant 0 : index
      %c0_119 = arith.constant 0 : index
      %233 = vector.load %arg12[%c0_118, %c0_119] : memref<8x128xf32, #tpu.memory_space<vmem>>, vector<8x128xf32>
      tpu.vector_store %arg12[%c0_118, %c0_119], %232 {strides = array<i32>} : memref<8x128xf32, #tpu.memory_space<vmem>>, vector<8x128xf32>,
      %c4_i32 = arith.constant 4 : i32
      %234 = arith.index_cast %c4_i32 : i32 to index
      %c0_120 = arith.constant 0 : index
      %c0_121 = arith.constant 0 : index
      %235 = vector.load %arg11[%234, %c0_120, %c0_121] : memref<8x8x512xf32, #tpu.memory_space<vmem>>, vector<1x8x512xf32>
      %236 = vector.shape_cast %235 : vector<1x8x512xf32> to vector<8x512xf32>
      %c0_122 = arith.constant 0 : index
      %c0_123 = arith.constant 0 : index
      %237 = vector.load %arg12[%c0_122, %c0_123] : memref<8x128xf32, #tpu.memory_space<vmem>>, vector<8x128xf32>
      %238 = arith.truncf %237 : vector<8x128xf32> to vector<8x128xbf16>
      %c0_124 = arith.constant 0 : index
      %c0_125 = arith.constant 0 : index
      %239 = vector.load %arg7[%c0_124, %c0_125] : memref<128x512xbf16, #tpu.memory_space<vmem>>, vector<128x512xbf16>
      %cst_126 = arith.constant dense<0.000000e+00> : vector<8x512xf32>
      %240 = tpu.matmul %238, %239, %cst_126 {dimension_numbers = #tpu.dot_dimension_numbers<[1], [0], [0], [1], [0, 0, 1, 1], [], []>} : vector<8x128xbf16>, vector<128x512xbf16>, vector<8x512xf32> -> vector<8x512xf32>
      %241 = arith.addf %236, %240 : vector<8x512xf32>
      %242 = vector.extract_strided_slice %241 {offsets = [0, 0], sizes = [8, 128], strides = [1, 1]} : vector<8x512xf32> to vector<8x128xf32>
      %cst_127 = arith.constant 5.000000e-01 : f32
      %243 = vector.broadcast %cst_127 : f32 to vector<8x128xf32>
      %244 = arith.mulf %243, %242 : vector<8x128xf32>
      %245 = math.tanh %244 : vector<8x128xf32>
      %cst_128 = arith.constant 5.000000e-01 : f32
      %246 = vector.broadcast %cst_128 : f32 to vector<8x128xf32>
      %247 = arith.mulf %246, %245 : vector<8x128xf32>
      %cst_129 = arith.constant 5.000000e-01 : f32
      %248 = vector.broadcast %cst_129 : f32 to vector<8x128xf32>
      %249 = arith.addf %247, %248 : vector<8x128xf32>
      %250 = vector.extract_strided_slice %241 {offsets = [0, 128], sizes = [8, 128], strides = [1, 1]} : vector<8x512xf32> to vector<8x128xf32>
      %cst_130 = arith.constant 5.000000e-01 : f32
      %251 = vector.broadcast %cst_130 : f32 to vector<8x128xf32>
      %252 = arith.mulf %251, %250 : vector<8x128xf32>
      %253 = math.tanh %252 : vector<8x128xf32>
      %cst_131 = arith.constant 5.000000e-01 : f32
      %254 = vector.broadcast %cst_131 : f32 to vector<8x128xf32>
      %255 = arith.mulf %254, %253 : vector<8x128xf32>
      %cst_132 = arith.constant 5.000000e-01 : f32
      %256 = vector.broadcast %cst_132 : f32 to vector<8x128xf32>
      %257 = arith.addf %255, %256 : vector<8x128xf32>
      %258 = vector.extract_strided_slice %241 {offsets = [0, 256], sizes = [8, 128], strides = [1, 1]} : vector<8x512xf32> to vector<8x128xf32>
      %259 = math.tanh %258 : vector<8x128xf32>
      %260 = vector.extract_strided_slice %241 {offsets = [0, 384], sizes = [8, 128], strides = [1, 1]} : vector<8x512xf32> to vector<8x128xf32>
      %cst_133 = arith.constant 5.000000e-01 : f32
      %261 = vector.broadcast %cst_133 : f32 to vector<8x128xf32>
      %262 = arith.mulf %261, %260 : vector<8x128xf32>
      %263 = math.tanh %262 : vector<8x128xf32>
      %cst_134 = arith.constant 5.000000e-01 : f32
      %264 = vector.broadcast %cst_134 : f32 to vector<8x128xf32>
      %265 = arith.mulf %264, %263 : vector<8x128xf32>
      %cst_135 = arith.constant 5.000000e-01 : f32
      %266 = vector.broadcast %cst_135 : f32 to vector<8x128xf32>
      %267 = arith.addf %265, %266 : vector<8x128xf32>
      %c0_136 = arith.constant 0 : index
      %c0_137 = arith.constant 0 : index
      %268 = vector.load %arg13[%c0_136, %c0_137] : memref<8x128xf32, #tpu.memory_space<vmem>>, vector<8x128xf32>
      %269 = arith.mulf %257, %268 : vector<8x128xf32>
      %270 = arith.mulf %249, %259 : vector<8x128xf32>
      %271 = arith.addf %269, %270 : vector<8x128xf32>
      %272 = math.tanh %271 : vector<8x128xf32>
      %273 = arith.mulf %267, %272 : vector<8x128xf32>
      %274 = arith.addi %3, %c4_i32 : i32
      %275 = vector.broadcast %274 : i32 to vector<8x1xi32>
      %276 = arith.cmpi slt, %275, %21 : vector<8x1xi32>
      %c0_138 = arith.constant 0 : index
      %c0_139 = arith.constant 0 : index
      %277 = vector.load %arg13[%c0_138, %c0_139] : memref<8x128xf32, #tpu.memory_space<vmem>>, vector<8x128xf32>
      %278 = vector.shape_cast %276 : vector<8x1xi1> to vector<8x1xi1>
      %279 = vector.broadcast %278 : vector<8x1xi1> to vector<8x128xi1>
      %280 = arith.select %279, %271, %277 : vector<8x128xi1>, vector<8x128xf32>
      %c0_140 = arith.constant 0 : index
      %c0_141 = arith.constant 0 : index
      %281 = vector.load %arg13[%c0_140, %c0_141] : memref<8x128xf32, #tpu.memory_space<vmem>>, vector<8x128xf32>
      tpu.vector_store %arg13[%c0_140, %c0_141], %280 {strides = array<i32>} : memref<8x128xf32, #tpu.memory_space<vmem>>, vector<8x128xf32>,
      %c0_142 = arith.constant 0 : index
      %c0_143 = arith.constant 0 : index
      %282 = vector.load %arg12[%c0_142, %c0_143] : memref<8x128xf32, #tpu.memory_space<vmem>>, vector<8x128xf32>
      %283 = vector.shape_cast %276 : vector<8x1xi1> to vector<8x1xi1>
      %284 = vector.broadcast %283 : vector<8x1xi1> to vector<8x128xi1>
      %285 = arith.select %284, %273, %282 : vector<8x128xi1>, vector<8x128xf32>
      %c0_144 = arith.constant 0 : index
      %c0_145 = arith.constant 0 : index
      %286 = vector.load %arg12[%c0_144, %c0_145] : memref<8x128xf32, #tpu.memory_space<vmem>>, vector<8x128xf32>
      tpu.vector_store %arg12[%c0_144, %c0_145], %285 {strides = array<i32>} : memref<8x128xf32, #tpu.memory_space<vmem>>, vector<8x128xf32>,
      %c5_i32 = arith.constant 5 : i32
      %287 = arith.index_cast %c5_i32 : i32 to index
      %c0_146 = arith.constant 0 : index
      %c0_147 = arith.constant 0 : index
      %288 = vector.load %arg11[%287, %c0_146, %c0_147] : memref<8x8x512xf32, #tpu.memory_space<vmem>>, vector<1x8x512xf32>
      %289 = vector.shape_cast %288 : vector<1x8x512xf32> to vector<8x512xf32>
      %c0_148 = arith.constant 0 : index
      %c0_149 = arith.constant 0 : index
      %290 = vector.load %arg12[%c0_148, %c0_149] : memref<8x128xf32, #tpu.memory_space<vmem>>, vector<8x128xf32>
      %291 = arith.truncf %290 : vector<8x128xf32> to vector<8x128xbf16>
      %c0_150 = arith.constant 0 : index
      %c0_151 = arith.constant 0 : index
      %292 = vector.load %arg7[%c0_150, %c0_151] : memref<128x512xbf16, #tpu.memory_space<vmem>>, vector<128x512xbf16>
      %cst_152 = arith.constant dense<0.000000e+00> : vector<8x512xf32>
      %293 = tpu.matmul %291, %292, %cst_152 {dimension_numbers = #tpu.dot_dimension_numbers<[1], [0], [0], [1], [0, 0, 1, 1], [], []>} : vector<8x128xbf16>, vector<128x512xbf16>, vector<8x512xf32> -> vector<8x512xf32>
      %294 = arith.addf %289, %293 : vector<8x512xf32>
      %295 = vector.extract_strided_slice %294 {offsets = [0, 0], sizes = [8, 128], strides = [1, 1]} : vector<8x512xf32> to vector<8x128xf32>
      %cst_153 = arith.constant 5.000000e-01 : f32
      %296 = vector.broadcast %cst_153 : f32 to vector<8x128xf32>
      %297 = arith.mulf %296, %295 : vector<8x128xf32>
      %298 = math.tanh %297 : vector<8x128xf32>
      %cst_154 = arith.constant 5.000000e-01 : f32
      %299 = vector.broadcast %cst_154 : f32 to vector<8x128xf32>
      %300 = arith.mulf %299, %298 : vector<8x128xf32>
      %cst_155 = arith.constant 5.000000e-01 : f32
      %301 = vector.broadcast %cst_155 : f32 to vector<8x128xf32>
      %302 = arith.addf %300, %301 : vector<8x128xf32>
      %303 = vector.extract_strided_slice %294 {offsets = [0, 128], sizes = [8, 128], strides = [1, 1]} : vector<8x512xf32> to vector<8x128xf32>
      %cst_156 = arith.constant 5.000000e-01 : f32
      %304 = vector.broadcast %cst_156 : f32 to vector<8x128xf32>
      %305 = arith.mulf %304, %303 : vector<8x128xf32>
      %306 = math.tanh %305 : vector<8x128xf32>
      %cst_157 = arith.constant 5.000000e-01 : f32
      %307 = vector.broadcast %cst_157 : f32 to vector<8x128xf32>
      %308 = arith.mulf %307, %306 : vector<8x128xf32>
      %cst_158 = arith.constant 5.000000e-01 : f32
      %309 = vector.broadcast %cst_158 : f32 to vector<8x128xf32>
      %310 = arith.addf %308, %309 : vector<8x128xf32>
      %311 = vector.extract_strided_slice %294 {offsets = [0, 256], sizes = [8, 128], strides = [1, 1]} : vector<8x512xf32> to vector<8x128xf32>
      %312 = math.tanh %311 : vector<8x128xf32>
      %313 = vector.extract_strided_slice %294 {offsets = [0, 384], sizes = [8, 128], strides = [1, 1]} : vector<8x512xf32> to vector<8x128xf32>
      %cst_159 = arith.constant 5.000000e-01 : f32
      %314 = vector.broadcast %cst_159 : f32 to vector<8x128xf32>
      %315 = arith.mulf %314, %313 : vector<8x128xf32>
      %316 = math.tanh %315 : vector<8x128xf32>
      %cst_160 = arith.constant 5.000000e-01 : f32
      %317 = vector.broadcast %cst_160 : f32 to vector<8x128xf32>
      %318 = arith.mulf %317, %316 : vector<8x128xf32>
      %cst_161 = arith.constant 5.000000e-01 : f32
      %319 = vector.broadcast %cst_161 : f32 to vector<8x128xf32>
      %320 = arith.addf %318, %319 : vector<8x128xf32>
      %c0_162 = arith.constant 0 : index
      %c0_163 = arith.constant 0 : index
      %321 = vector.load %arg13[%c0_162, %c0_163] : memref<8x128xf32, #tpu.memory_space<vmem>>, vector<8x128xf32>
      %322 = arith.mulf %310, %321 : vector<8x128xf32>
      %323 = arith.mulf %302, %312 : vector<8x128xf32>
      %324 = arith.addf %322, %323 : vector<8x128xf32>
      %325 = math.tanh %324 : vector<8x128xf32>
      %326 = arith.mulf %320, %325 : vector<8x128xf32>
      %327 = arith.addi %3, %c5_i32 : i32
      %328 = vector.broadcast %327 : i32 to vector<8x1xi32>
      %329 = arith.cmpi slt, %328, %21 : vector<8x1xi32>
      %c0_164 = arith.constant 0 : index
      %c0_165 = arith.constant 0 : index
      %330 = vector.load %arg13[%c0_164, %c0_165] : memref<8x128xf32, #tpu.memory_space<vmem>>, vector<8x128xf32>
      %331 = vector.shape_cast %329 : vector<8x1xi1> to vector<8x1xi1>
      %332 = vector.broadcast %331 : vector<8x1xi1> to vector<8x128xi1>
      %333 = arith.select %332, %324, %330 : vector<8x128xi1>, vector<8x128xf32>
      %c0_166 = arith.constant 0 : index
      %c0_167 = arith.constant 0 : index
      %334 = vector.load %arg13[%c0_166, %c0_167] : memref<8x128xf32, #tpu.memory_space<vmem>>, vector<8x128xf32>
      tpu.vector_store %arg13[%c0_166, %c0_167], %333 {strides = array<i32>} : memref<8x128xf32, #tpu.memory_space<vmem>>, vector<8x128xf32>,
      %c0_168 = arith.constant 0 : index
      %c0_169 = arith.constant 0 : index
      %335 = vector.load %arg12[%c0_168, %c0_169] : memref<8x128xf32, #tpu.memory_space<vmem>>, vector<8x128xf32>
      %336 = vector.shape_cast %329 : vector<8x1xi1> to vector<8x1xi1>
      %337 = vector.broadcast %336 : vector<8x1xi1> to vector<8x128xi1>
      %338 = arith.select %337, %326, %335 : vector<8x128xi1>, vector<8x128xf32>
      %c0_170 = arith.constant 0 : index
      %c0_171 = arith.constant 0 : index
      %339 = vector.load %arg12[%c0_170, %c0_171] : memref<8x128xf32, #tpu.memory_space<vmem>>, vector<8x128xf32>
      tpu.vector_store %arg12[%c0_170, %c0_171], %338 {strides = array<i32>} : memref<8x128xf32, #tpu.memory_space<vmem>>, vector<8x128xf32>,
      %c6_i32 = arith.constant 6 : i32
      %340 = arith.index_cast %c6_i32 : i32 to index
      %c0_172 = arith.constant 0 : index
      %c0_173 = arith.constant 0 : index
      %341 = vector.load %arg11[%340, %c0_172, %c0_173] : memref<8x8x512xf32, #tpu.memory_space<vmem>>, vector<1x8x512xf32>
      %342 = vector.shape_cast %341 : vector<1x8x512xf32> to vector<8x512xf32>
      %c0_174 = arith.constant 0 : index
      %c0_175 = arith.constant 0 : index
      %343 = vector.load %arg12[%c0_174, %c0_175] : memref<8x128xf32, #tpu.memory_space<vmem>>, vector<8x128xf32>
      %344 = arith.truncf %343 : vector<8x128xf32> to vector<8x128xbf16>
      %c0_176 = arith.constant 0 : index
      %c0_177 = arith.constant 0 : index
      %345 = vector.load %arg7[%c0_176, %c0_177] : memref<128x512xbf16, #tpu.memory_space<vmem>>, vector<128x512xbf16>
      %cst_178 = arith.constant dense<0.000000e+00> : vector<8x512xf32>
      %346 = tpu.matmul %344, %345, %cst_178 {dimension_numbers = #tpu.dot_dimension_numbers<[1], [0], [0], [1], [0, 0, 1, 1], [], []>} : vector<8x128xbf16>, vector<128x512xbf16>, vector<8x512xf32> -> vector<8x512xf32>
      %347 = arith.addf %342, %346 : vector<8x512xf32>
      %348 = vector.extract_strided_slice %347 {offsets = [0, 0], sizes = [8, 128], strides = [1, 1]} : vector<8x512xf32> to vector<8x128xf32>
      %cst_179 = arith.constant 5.000000e-01 : f32
      %349 = vector.broadcast %cst_179 : f32 to vector<8x128xf32>
      %350 = arith.mulf %349, %348 : vector<8x128xf32>
      %351 = math.tanh %350 : vector<8x128xf32>
      %cst_180 = arith.constant 5.000000e-01 : f32
      %352 = vector.broadcast %cst_180 : f32 to vector<8x128xf32>
      %353 = arith.mulf %352, %351 : vector<8x128xf32>
      %cst_181 = arith.constant 5.000000e-01 : f32
      %354 = vector.broadcast %cst_181 : f32 to vector<8x128xf32>
      %355 = arith.addf %353, %354 : vector<8x128xf32>
      %356 = vector.extract_strided_slice %347 {offsets = [0, 128], sizes = [8, 128], strides = [1, 1]} : vector<8x512xf32> to vector<8x128xf32>
      %cst_182 = arith.constant 5.000000e-01 : f32
      %357 = vector.broadcast %cst_182 : f32 to vector<8x128xf32>
      %358 = arith.mulf %357, %356 : vector<8x128xf32>
      %359 = math.tanh %358 : vector<8x128xf32>
      %cst_183 = arith.constant 5.000000e-01 : f32
      %360 = vector.broadcast %cst_183 : f32 to vector<8x128xf32>
      %361 = arith.mulf %360, %359 : vector<8x128xf32>
      %cst_184 = arith.constant 5.000000e-01 : f32
      %362 = vector.broadcast %cst_184 : f32 to vector<8x128xf32>
      %363 = arith.addf %361, %362 : vector<8x128xf32>
      %364 = vector.extract_strided_slice %347 {offsets = [0, 256], sizes = [8, 128], strides = [1, 1]} : vector<8x512xf32> to vector<8x128xf32>
      %365 = math.tanh %364 : vector<8x128xf32>
      %366 = vector.extract_strided_slice %347 {offsets = [0, 384], sizes = [8, 128], strides = [1, 1]} : vector<8x512xf32> to vector<8x128xf32>
      %cst_185 = arith.constant 5.000000e-01 : f32
      %367 = vector.broadcast %cst_185 : f32 to vector<8x128xf32>
      %368 = arith.mulf %367, %366 : vector<8x128xf32>
      %369 = math.tanh %368 : vector<8x128xf32>
      %cst_186 = arith.constant 5.000000e-01 : f32
      %370 = vector.broadcast %cst_186 : f32 to vector<8x128xf32>
      %371 = arith.mulf %370, %369 : vector<8x128xf32>
      %cst_187 = arith.constant 5.000000e-01 : f32
      %372 = vector.broadcast %cst_187 : f32 to vector<8x128xf32>
      %373 = arith.addf %371, %372 : vector<8x128xf32>
      %c0_188 = arith.constant 0 : index
      %c0_189 = arith.constant 0 : index
      %374 = vector.load %arg13[%c0_188, %c0_189] : memref<8x128xf32, #tpu.memory_space<vmem>>, vector<8x128xf32>
      %375 = arith.mulf %363, %374 : vector<8x128xf32>
      %376 = arith.mulf %355, %365 : vector<8x128xf32>
      %377 = arith.addf %375, %376 : vector<8x128xf32>
      %378 = math.tanh %377 : vector<8x128xf32>
      %379 = arith.mulf %373, %378 : vector<8x128xf32>
      %380 = arith.addi %3, %c6_i32 : i32
      %381 = vector.broadcast %380 : i32 to vector<8x1xi32>
      %382 = arith.cmpi slt, %381, %21 : vector<8x1xi32>
      %c0_190 = arith.constant 0 : index
      %c0_191 = arith.constant 0 : index
      %383 = vector.load %arg13[%c0_190, %c0_191] : memref<8x128xf32, #tpu.memory_space<vmem>>, vector<8x128xf32>
      %384 = vector.shape_cast %382 : vector<8x1xi1> to vector<8x1xi1>
      %385 = vector.broadcast %384 : vector<8x1xi1> to vector<8x128xi1>
      %386 = arith.select %385, %377, %383 : vector<8x128xi1>, vector<8x128xf32>
      %c0_192 = arith.constant 0 : index
      %c0_193 = arith.constant 0 : index
      %387 = vector.load %arg13[%c0_192, %c0_193] : memref<8x128xf32, #tpu.memory_space<vmem>>, vector<8x128xf32>
      tpu.vector_store %arg13[%c0_192, %c0_193], %386 {strides = array<i32>} : memref<8x128xf32, #tpu.memory_space<vmem>>, vector<8x128xf32>,
      %c0_194 = arith.constant 0 : index
      %c0_195 = arith.constant 0 : index
      %388 = vector.load %arg12[%c0_194, %c0_195] : memref<8x128xf32, #tpu.memory_space<vmem>>, vector<8x128xf32>
      %389 = vector.shape_cast %382 : vector<8x1xi1> to vector<8x1xi1>
      %390 = vector.broadcast %389 : vector<8x1xi1> to vector<8x128xi1>
      %391 = arith.select %390, %379, %388 : vector<8x128xi1>, vector<8x128xf32>
      %c0_196 = arith.constant 0 : index
      %c0_197 = arith.constant 0 : index
      %392 = vector.load %arg12[%c0_196, %c0_197] : memref<8x128xf32, #tpu.memory_space<vmem>>, vector<8x128xf32>
      tpu.vector_store %arg12[%c0_196, %c0_197], %391 {strides = array<i32>} : memref<8x128xf32, #tpu.memory_space<vmem>>, vector<8x128xf32>,
      %c7_i32 = arith.constant 7 : i32
      %393 = arith.index_cast %c7_i32 : i32 to index
      %c0_198 = arith.constant 0 : index
      %c0_199 = arith.constant 0 : index
      %394 = vector.load %arg11[%393, %c0_198, %c0_199] : memref<8x8x512xf32, #tpu.memory_space<vmem>>, vector<1x8x512xf32>
      %395 = vector.shape_cast %394 : vector<1x8x512xf32> to vector<8x512xf32>
      %c0_200 = arith.constant 0 : index
      %c0_201 = arith.constant 0 : index
      %396 = vector.load %arg12[%c0_200, %c0_201] : memref<8x128xf32, #tpu.memory_space<vmem>>, vector<8x128xf32>
      %397 = arith.truncf %396 : vector<8x128xf32> to vector<8x128xbf16>
      %c0_202 = arith.constant 0 : index
      %c0_203 = arith.constant 0 : index
      %398 = vector.load %arg7[%c0_202, %c0_203] : memref<128x512xbf16, #tpu.memory_space<vmem>>, vector<128x512xbf16>
      %cst_204 = arith.constant dense<0.000000e+00> : vector<8x512xf32>
      %399 = tpu.matmul %397, %398, %cst_204 {dimension_numbers = #tpu.dot_dimension_numbers<[1], [0], [0], [1], [0, 0, 1, 1], [], []>} : vector<8x128xbf16>, vector<128x512xbf16>, vector<8x512xf32> -> vector<8x512xf32>
      %400 = arith.addf %395, %399 : vector<8x512xf32>
      %401 = vector.extract_strided_slice %400 {offsets = [0, 0], sizes = [8, 128], strides = [1, 1]} : vector<8x512xf32> to vector<8x128xf32>
      %cst_205 = arith.constant 5.000000e-01 : f32
      %402 = vector.broadcast %cst_205 : f32 to vector<8x128xf32>
      %403 = arith.mulf %402, %401 : vector<8x128xf32>
      %404 = math.tanh %403 : vector<8x128xf32>
      %cst_206 = arith.constant 5.000000e-01 : f32
      %405 = vector.broadcast %cst_206 : f32 to vector<8x128xf32>
      %406 = arith.mulf %405, %404 : vector<8x128xf32>
      %cst_207 = arith.constant 5.000000e-01 : f32
      %407 = vector.broadcast %cst_207 : f32 to vector<8x128xf32>
      %408 = arith.addf %406, %407 : vector<8x128xf32>
      %409 = vector.extract_strided_slice %400 {offsets = [0, 128], sizes = [8, 128], strides = [1, 1]} : vector<8x512xf32> to vector<8x128xf32>
      %cst_208 = arith.constant 5.000000e-01 : f32
      %410 = vector.broadcast %cst_208 : f32 to vector<8x128xf32>
      %411 = arith.mulf %410, %409 : vector<8x128xf32>
      %412 = math.tanh %411 : vector<8x128xf32>
      %cst_209 = arith.constant 5.000000e-01 : f32
      %413 = vector.broadcast %cst_209 : f32 to vector<8x128xf32>
      %414 = arith.mulf %413, %412 : vector<8x128xf32>
      %cst_210 = arith.constant 5.000000e-01 : f32
      %415 = vector.broadcast %cst_210 : f32 to vector<8x128xf32>
      %416 = arith.addf %414, %415 : vector<8x128xf32>
      %417 = vector.extract_strided_slice %400 {offsets = [0, 256], sizes = [8, 128], strides = [1, 1]} : vector<8x512xf32> to vector<8x128xf32>
      %418 = math.tanh %417 : vector<8x128xf32>
      %419 = vector.extract_strided_slice %400 {offsets = [0, 384], sizes = [8, 128], strides = [1, 1]} : vector<8x512xf32> to vector<8x128xf32>
      %cst_211 = arith.constant 5.000000e-01 : f32
      %420 = vector.broadcast %cst_211 : f32 to vector<8x128xf32>
      %421 = arith.mulf %420, %419 : vector<8x128xf32>
      %422 = math.tanh %421 : vector<8x128xf32>
      %cst_212 = arith.constant 5.000000e-01 : f32
      %423 = vector.broadcast %cst_212 : f32 to vector<8x128xf32>
      %424 = arith.mulf %423, %422 : vector<8x128xf32>
      %cst_213 = arith.constant 5.000000e-01 : f32
      %425 = vector.broadcast %cst_213 : f32 to vector<8x128xf32>
      %426 = arith.addf %424, %425 : vector<8x128xf32>
      %c0_214 = arith.constant 0 : index
      %c0_215 = arith.constant 0 : index
      %427 = vector.load %arg13[%c0_214, %c0_215] : memref<8x128xf32, #tpu.memory_space<vmem>>, vector<8x128xf32>
      %428 = arith.mulf %416, %427 : vector<8x128xf32>
      %429 = arith.mulf %408, %418 : vector<8x128xf32>
      %430 = arith.addf %428, %429 : vector<8x128xf32>
      %431 = math.tanh %430 : vector<8x128xf32>
      %432 = arith.mulf %426, %431 : vector<8x128xf32>
      %433 = arith.addi %3, %c7_i32 : i32
      %434 = vector.broadcast %433 : i32 to vector<8x1xi32>
      %435 = arith.cmpi slt, %434, %21 : vector<8x1xi32>
      %c0_216 = arith.constant 0 : index
      %c0_217 = arith.constant 0 : index
      %436 = vector.load %arg13[%c0_216, %c0_217] : memref<8x128xf32, #tpu.memory_space<vmem>>, vector<8x128xf32>
      %437 = vector.shape_cast %435 : vector<8x1xi1> to vector<8x1xi1>
      %438 = vector.broadcast %437 : vector<8x1xi1> to vector<8x128xi1>
      %439 = arith.select %438, %430, %436 : vector<8x128xi1>, vector<8x128xf32>
      %c0_218 = arith.constant 0 : index
      %c0_219 = arith.constant 0 : index
      %440 = vector.load %arg13[%c0_218, %c0_219] : memref<8x128xf32, #tpu.memory_space<vmem>>, vector<8x128xf32>
      tpu.vector_store %arg13[%c0_218, %c0_219], %439 {strides = array<i32>} : memref<8x128xf32, #tpu.memory_space<vmem>>, vector<8x128xf32>,
      %c0_220 = arith.constant 0 : index
      %c0_221 = arith.constant 0 : index
      %441 = vector.load %arg12[%c0_220, %c0_221] : memref<8x128xf32, #tpu.memory_space<vmem>>, vector<8x128xf32>
      %442 = vector.shape_cast %435 : vector<8x1xi1> to vector<8x1xi1>
      %443 = vector.broadcast %442 : vector<8x1xi1> to vector<8x128xi1>
      %444 = arith.select %443, %432, %441 : vector<8x128xi1>, vector<8x128xf32>
      %c0_222 = arith.constant 0 : index
      %c0_223 = arith.constant 0 : index
      %445 = vector.load %arg12[%c0_222, %c0_223] : memref<8x128xf32, #tpu.memory_space<vmem>>, vector<8x128xf32>
      tpu.vector_store %arg12[%c0_222, %c0_223], %444 {strides = array<i32>} : memref<8x128xf32, #tpu.memory_space<vmem>>, vector<8x128xf32>,
      %c8_i32_224 = arith.constant 8 : i32
    } else {
    }
    %c0_i32_2 = arith.constant 0 : i32
    %9 = arith.cmpi eq, %arg1, %c0_i32_2 : i32
    %10 = arith.extui %9 : i1 to i32
    %c0_i32_3 = arith.constant 0 : i32
    %11 = arith.cmpi ne, %10, %c0_i32_3 : i32
    scf.if %11 {
      %c0 = arith.constant 0 : index
      %c0_4 = arith.constant 0 : index
      %12 = vector.load %arg12[%c0, %c0_4] : memref<8x128xf32, #tpu.memory_space<vmem>>, vector<8x128xf32>
      %13 = arith.truncf %12 : vector<8x128xf32> to vector<8x128xbf16>
      %c0_5 = arith.constant 0 : index
      %c0_6 = arith.constant 0 : index
      %14 = vector.load %arg8[%c0_5, %c0_6] : memref<128x128xbf16, #tpu.memory_space<vmem>>, vector<128x128xbf16>
      %cst = arith.constant dense<0.000000e+00> : vector<8x128xf32>
      %15 = tpu.matmul %13, %14, %cst {dimension_numbers = #tpu.dot_dimension_numbers<[1], [0], [0], [1], [0, 0, 1, 1], [], []>} : vector<8x128xbf16>, vector<128x128xbf16>, vector<8x128xf32> -> vector<8x128xf32>
      %c0_7 = arith.constant 0 : index
      %c0_8 = arith.constant 0 : index
      %16 = vector.load %arg9[%c0_7, %c0_8] : memref<1x128xf32, #tpu.memory_space<vmem>>, vector<1x128xf32>
      %17 = vector.broadcast %16 : vector<1x128xf32> to vector<8x128xf32>
      %18 = arith.addf %15, %17 : vector<8x128xf32>
      %c0_9 = arith.constant 0 : index
      %c0_10 = arith.constant 0 : index
      %19 = vector.load %arg10[%c0_9, %c0_10] : memref<8x128xf32, #tpu.memory_space<vmem>>, vector<8x128xf32>
      tpu.vector_store %arg10[%c0_9, %c0_10], %18 {strides = array<i32>} : memref<8x128xf32, #tpu.memory_space<vmem>>, vector<8x128xf32>,
    } else {
    }
    return
  }
  func.func @transform_0(%arg0: i32, %arg1: i32, %arg2: memref<1xi32, #tpu.memory_space<smem>>) -> (i32, i32, i32) {
    %c0_i32 = arith.constant 0 : i32
    %c0_i32_0 = arith.constant 0 : i32
    return %arg1, %arg0, %c0_i32 : i32, i32, i32
  }
  func.func @transform_1(%arg0: i32, %arg1: i32, %arg2: memref<1xi32, #tpu.memory_space<smem>>) -> (i32, i32) {
    %c0_i32 = arith.constant 0 : i32
    %c0_i32_0 = arith.constant 0 : i32
    return %arg0, %c0_i32 : i32, i32
  }
  func.func @transform_2(%arg0: i32, %arg1: i32, %arg2: memref<1xi32, #tpu.memory_space<smem>>) -> (i32, i32) {
    %c0_i32 = arith.constant 0 : i32
    %c0_i32_0 = arith.constant 0 : i32
    %c0_i32_1 = arith.constant 0 : i32
    return %c0_i32, %c0_i32_0 : i32, i32
  }
  func.func @transform_3(%arg0: i32, %arg1: i32, %arg2: memref<1xi32, #tpu.memory_space<smem>>) -> (i32, i32) {
    %c0_i32 = arith.constant 0 : i32
    %c0_i32_0 = arith.constant 0 : i32
    %c0_i32_1 = arith.constant 0 : i32
    return %c0_i32, %c0_i32_0 : i32, i32
  }
  func.func @transform_4(%arg0: i32, %arg1: i32, %arg2: memref<1xi32, #tpu.memory_space<smem>>) -> (i32, i32) {
    %c0_i32 = arith.constant 0 : i32
    %c0_i32_0 = arith.constant 0 : i32
    %c0_i32_1 = arith.constant 0 : i32
    return %c0_i32, %c0_i32_0 : i32, i32
  }
  func.func @transform_5(%arg0: i32, %arg1: i32, %arg2: memref<1xi32, #tpu.memory_space<smem>>) -> (i32, i32) {
    %c0_i32 = arith.constant 0 : i32
    %c0_i32_0 = arith.constant 0 : i32
    %c0_i32_1 = arith.constant 0 : i32
    return %c0_i32, %c0_i32_0 : i32, i32
  }
  func.func @transform_6(%arg0: i32, %arg1: i32, %arg2: memref<1xi32, #tpu.memory_space<smem>>) -> (i32, i32) {
    %c0_i32 = arith.constant 0 : i32
    %c0_i32_0 = arith.constant 0 : i32
    %c0_i32_1 = arith.constant 0 : i32
    return %c0_i32, %c0_i32_0 : i32, i32
  }
  func.func @transform_7(%arg0: i32, %arg1: i32, %arg2: memref<1xi32, #tpu.memory_space<smem>>) -> (i32, i32) {
    %c0_i32 = arith.constant 0 : i32
    %c0_i32_0 = arith.constant 0 : i32
    return %arg0, %c0_i32 : i32, i32
  }
}

</mosaic_0001>

<llo_original>
// kernel: tpu_custom_call.1
$region0: #{tpu_custom_call.1}
  #allocation0 [shape = 'u32[]', space=smem, size = 0x4, offset = 0x4, fixed_abs, tag = 'smem constant byte address 0x4 - core index']
  #allocation1 [shape = 'u32[144,128]{1,0:T(1,128)}', space=vmem, size = 0x12000, scoped, tag = 'internal scratch']
  #allocation2 [shape = 'f32[8,8,512]{2,1,0:T(8,128)}', space=vmem, size = 0x20000, scoped, tag = 'scratch operand']
  #allocation3 [shape = 'f32[8,128]{1,0:T(8,128)}', space=vmem, size = 0x1000, scoped, tag = 'scratch operand']
  #allocation4 [shape = 'f32[8,128]{1,0:T(8,128)}', space=vmem, size = 0x1000, scoped, tag = 'scratch operand']
  #allocation5 [shape = 's32[1]{0}', space=sflag, size = 0x4, scoped, tag = 'scoped memory for tpu_custom_call.1']
  #allocation6 [shape = 's32[1]{0:T(128)S(6)}', space=smem, size = 0x200, scoped, tag = 'prefetched SMEM operand 0']
  %s0 = inlined_call_operand.<no memory space> [shape: s32[1], index: 0, kind: input, shape index: {}]
  %s1 = inlined_call_operand.hbm [shape: bf16[8,8,128], index: 1, kind: input, shape index: {}]
  %s2 = inlined_call_operand.vmem [shape: s32[8,1], index: 2, kind: input, shape index: {}]
  %s3 = inlined_call_operand.hbm [shape: bf16[128,512], index: 3, kind: input, shape index: {}]
  %s4 = inlined_call_operand.vmem [shape: f32[1,512], index: 4, kind: input, shape index: {}]
  %s5 = inlined_call_operand.hbm [shape: bf16[128,512], index: 5, kind: input, shape index: {}]
  %s6 = inlined_call_operand.hbm [shape: bf16[128,128], index: 6, kind: input, shape index: {}]
  %s7 = inlined_call_operand.vmem [shape: f32[1,128], index: 7, kind: input, shape index: {}]
  %s8 = inlined_call_operand.hbm [shape: f32[8,128], index: 8, kind: output, shape index: {}]
  %s9 = sld [smem:[#allocation0]]
  $region66: #{tpu_custom_call.1} parent=0
    _
  %s11 = ssub.s32 1, %s9
  %s12 = scalar_select 0, %s11, %s9
  %13 = sst [smem:[#allocation6]] %s0
  $region1: #{tpu_custom_call.1} parent=0
    #allocation7 [shape = 'u8[16384]{0}', space=vmem, size = 0x4000, scoped, tag = 'input window, operand 1, single buffered']
    #allocation8 [shape = 's32[1]{0}', space=sflag, size = 0x4, scoped, tag = 'scoped memory for tpu_custom_call.1']
    #allocation9 [shape = 's32[1]{0}', space=sflag, size = 0x4, scoped, tag = 'scoped memory for tpu_custom_call.1']
    #allocation10 [shape = 'u8[131072]{0}', space=vmem, size = 0x20000, scoped, tag = 'input window, operand 3, single buffered']
    #allocation11 [shape = 's32[1]{0}', space=sflag, size = 0x4, scoped, tag = 'scoped memory for tpu_custom_call.1']
    #allocation12 [shape = 'u8[131072]{0}', space=vmem, size = 0x20000, scoped, tag = 'input window, operand 5, single buffered']
    #allocation13 [shape = 'u8[32768]{0}', space=vmem, size = 0x8000, scoped, tag = 'input window, operand 6, single buffered']
    #allocation14 [shape = 's32[1]{0}', space=sflag, size = 0x4, scoped, tag = 'scoped memory for tpu_custom_call.1']
    #allocation15 [shape = 'u8[4096]{0}', space=vmem, size = 0x1000, scoped, tag = 'output window, operand 0, single buffered']
    %14 = vsyncpa [#allocation8], 0
    %15 = vsyncpa [#allocation11], 0
    %16 = vsyncpa [#allocation14], 0
    %17 = vsyncpa [#allocation9], 0
    // Predicated region
    $region2: #{tpu_custom_call.1} parent=1 // pred_check
      _
    $region3: #{tpu_custom_call.1} parent=1 // pred_check_branch
      %19 = sbr.rel (0) target = $region5
    $region4: #{tpu_custom_call.1} parent=1 // pred_region
      %s21 = ssub.s32 512, 512
      %22 = vsyncadd [#allocation8], %s21
      %s23 = sshll.u32 [#allocation7], 4
      %s24 = int_to_ptr.vmem [resolvable:$true] %s23
      %29 = dma.hbm_to_vmem [thread:$0]  %s1, 512, %s24, [#allocation8], 64, 64, 4
    $region5: #{tpu_custom_call.1} parent=1 // pred_fallthru
      _
    // Predicated region
    $region6: #{tpu_custom_call.1} parent=1 // pred_check
      _
    $region7: #{tpu_custom_call.1} parent=1 // pred_check_branch
      %31 = sbr.rel (0) target = $region9
    $region8: #{tpu_custom_call.1} parent=1 // pred_region
      _
    $region9: #{tpu_custom_call.1} parent=1 // pred_fallthru
      _
    // Predicated region
    $region10: #{tpu_custom_call.1} parent=1 // pred_check
      _
    $region11: #{tpu_custom_call.1} parent=1 // pred_check_branch
      %33 = sbr.rel (0) target = $region13
    $region12: #{tpu_custom_call.1} parent=1 // pred_region
      %s35 = ssub.s32 4096, 4096
      %36 = vsyncadd [#allocation11], %s35
      %s37 = sshll.u32 [#allocation10], 4
      %s38 = int_to_ptr.vmem [resolvable:$true] %s37
      %43 = dma.hbm_to_vmem [thread:$0]  %s3, 4096, %s38, [#allocation11], 256, 256, 16
    $region13: #{tpu_custom_call.1} parent=1 // pred_fallthru
      _
    // Predicated region
    $region14: #{tpu_custom_call.1} parent=1 // pred_check
      _
    $region15: #{tpu_custom_call.1} parent=1 // pred_check_branch
      %45 = sbr.rel (0) target = $region17
    $region16: #{tpu_custom_call.1} parent=1 // pred_region
      _
    $region17: #{tpu_custom_call.1} parent=1 // pred_fallthru
      _
    // Predicated region
    $region18: #{tpu_custom_call.1} parent=1 // pred_check
      _
    $region19: #{tpu_custom_call.1} parent=1 // pred_check_branch
      %47 = sbr.rel (0) target = $region21
    $region20: #{tpu_custom_call.1} parent=1 // pred_region
      %s49 = ssub.s32 4096, 4096
      %50 = vsyncadd [#allocation11], %s49
      %s51 = sshll.u32 [#allocation12], 4
      %s52 = int_to_ptr.vmem [resolvable:$true] %s51
      %57 = dma.hbm_to_vmem [thread:$0]  %s5, 4096, %s52, [#allocation11], 256, 256, 16
    $region21: #{tpu_custom_call.1} parent=1 // pred_fallthru
      _
    // Predicated region
    $region22: #{tpu_custom_call.1} parent=1 // pred_check
      _
    $region23: #{tpu_custom_call.1} parent=1 // pred_check_branch
      %59 = sbr.rel (0) target = $region25
    $region24: #{tpu_custom_call.1} parent=1 // pred_region
      %s61 = ssub.s32 1024, 1024
      %62 = vsyncadd [#allocation14], %s61
      %s63 = sshll.u32 [#allocation13], 4
      %s64 = int_to_ptr.vmem [resolvable:$true] %s63
      %69 = dma.hbm_to_vmem [thread:$0]  %s6, 1024, %s64, [#allocation14], 64, 64, 4
    $region25: #{tpu_custom_call.1} parent=1 // pred_fallthru
      _
    // Predicated region
    $region26: #{tpu_custom_call.1} parent=1 // pred_check
      _
    $region27: #{tpu_custom_call.1} parent=1 // pred_check_branch
      %71 = sbr.rel (0) target = $region29
    $region28: #{tpu_custom_call.1} parent=1 // pred_region
      _
    $region29: #{tpu_custom_call.1} parent=1 // pred_fallthru
      _
    // Predicated region
    $region30: #{tpu_custom_call.1} parent=1 // pred_check
      _
    $region31: #{tpu_custom_call.1} parent=1 // pred_check_branch
      %73 = sbr.rel (0) target = $region33
    $region32: #{tpu_custom_call.1} parent=1 // pred_region
      %74 = dma.done [#allocation8], 512
    $region33: #{tpu_custom_call.1} parent=1 // pred_fallthru
      _
    // Predicated region
    $region34: #{tpu_custom_call.1} parent=1 // pred_check
      _
    $region35: #{tpu_custom_call.1} parent=1 // pred_check_branch
      %76 = sbr.rel (0) target = $region37
    $region36: #{tpu_custom_call.1} parent=1 // pred_region
      %77 = dma.done [#allocation11], 4096
    $region37: #{tpu_custom_call.1} parent=1 // pred_fallthru
      _
    // Predicated region
    $region38: #{tpu_custom_call.1} parent=1 // pred_check
      _
    $region39: #{tpu_custom_call.1} parent=1 // pred_check_branch
      %79 = sbr.rel (0) target = $region41
    $region40: #{tpu_custom_call.1} parent=1 // pred_region
      %80 = dma.done [#allocation11], 4096
    $region41: #{tpu_custom_call.1} parent=1 // pred_fallthru
      _
    // Predicated region
    $region42: #{tpu_custom_call.1} parent=1 // pred_check
      _
    $region43: #{tpu_custom_call.1} parent=1 // pred_check_branch
      %82 = sbr.rel (0) target = $region45
    $region44: #{tpu_custom_call.1} parent=1 // pred_region
      %83 = dma.done [#allocation14], 1024
    $region45: #{tpu_custom_call.1} parent=1 // pred_fallthru
      _
    %p85 = scmp.eq.s32.totalorder 0, 0
    // Predicated region
    $region46: #{tpu_custom_call.1} parent=1 // pred_check
      %p86 = pneg %p85
    $region47: #{tpu_custom_call.1} parent=1 // pred_check_branch
      %88 = sbr.rel (%p86) target = $region49
    $region48: #{tpu_custom_call.1} parent=1 // pred_region
      %89 = vst [vmem:[#allocation3] sm:$0xff] 0.0
      %90 = vst [vmem:[#allocation4] sm:$0xff] 0.0
    $region49: #{tpu_custom_call.1} parent=1 // pred_fallthru
      _
    %s91 = smul.u32 0, 8
    %s92 = sld [smem:[#allocation6]]
    %p93 = scmp.lt.s32.totalorder %s91, %s92
    // Predicated region
    $region50: #{tpu_custom_call.1} parent=1 // pred_check
      %p94 = pneg %p93
    $region51: #{tpu_custom_call.1} parent=1 // pred_check_branch
      %96 = sbr.rel (%p94) target = $region53
    $region52: #{tpu_custom_call.1} parent=1 // pred_region
      %v97 = vld [vmem:[#allocation7] sm:$0xf]
      %v98 = vld [vmem:[#allocation7 + $0x4] sm:$0xf]
      %v99 = vld [vmem:[#allocation7 + $0x8] sm:$0xf]
      %v100 = vld [vmem:[#allocation7 + $0xc] sm:$0xf]
      %v101 = vld [vmem:[#allocation7 + $0x10] sm:$0xf]
      %v102 = vld [vmem:[#allocation7 + $0x14] sm:$0xf]
      %v103 = vld [vmem:[#allocation7 + $0x18] sm:$0xf]
      %v104 = vld [vmem:[#allocation7 + $0x1c] sm:$0xf]
      %v105 = vld [vmem:[#allocation10] sm:$0xff]
      %v106 = vld [vmem:[#allocation10 + $0x8] sm:$0xff]
      %v107 = vld [vmem:[#allocation10 + $0x10] sm:$0xff]
      %v108 = vld [vmem:[#allocation10 + $0x18] sm:$0xff]
      %v109 = vld [vmem:[#allocation10 + $0x20] sm:$0xff]
      %v110 = vld [vmem:[#allocation10 + $0x28] sm:$0xff]
      %v111 = vld [vmem:[#allocation10 + $0x30] sm:$0xff]
      %v112 = vld [vmem:[#allocation10 + $0x38] sm:$0xff]
      %v113 = vld [vmem:[#allocation10 + $0x40] sm:$0xff]
      %v114 = vld [vmem:[#allocation10 + $0x48] sm:$0xff]
      %v115 = vld [vmem:[#allocation10 + $0x50] sm:$0xff]
      %v116 = vld [vmem:[#allocation10 + $0x58] sm:$0xff]
      %v117 = vld [vmem:[#allocation10 + $0x60] sm:$0xff]
      %v118 = vld [vmem:[#allocation10 + $0x68] sm:$0xff]
      %v119 = vld [vmem:[#allocation10 + $0x70] sm:$0xff]
      %v120 = vld [vmem:[#allocation10 + $0x78] sm:$0xff]
      %v121 = vld [vmem:[#allocation10 + $0x80] sm:$0xff]
      %v122 = vld [vmem:[#allocation10 + $0x88] sm:$0xff]
      %v123 = vld [vmem:[#allocation10 + $0x90] sm:$0xff]
      %v124 = vld [vmem:[#allocation10 + $0x98] sm:$0xff]
      %v125 = vld [vmem:[#allocation10 + $0xa0] sm:$0xff]
      %v126 = vld [vmem:[#allocation10 + $0xa8] sm:$0xff]
      %v127 = vld [vmem:[#allocation10 + $0xb0] sm:$0xff]
      %v128 = vld [vmem:[#allocation10 + $0xb8] sm:$0xff]
      %v129 = vld [vmem:[#allocation10 + $0xc0] sm:$0xff]
      %v130 = vld [vmem:[#allocation10 + $0xc8] sm:$0xff]
      %v131 = vld [vmem:[#allocation10 + $0xd0] sm:$0xff]
      %v132 = vld [vmem:[#allocation10 + $0xd8] sm:$0xff]
      %v133 = vld [vmem:[#allocation10 + $0xe0] sm:$0xff]
      %v134 = vld [vmem:[#allocation10 + $0xe8] sm:$0xff]
      %v135 = vld [vmem:[#allocation10 + $0xf0] sm:$0xff]
      %v136 = vld [vmem:[#allocation10 + $0xf8] sm:$0xff]
      %v137 = vld [vmem:[%s4] sm:$0xf]
      %v139 = vlaneseq
      %v140 = vshrl.u32 %v139, 7
      %v141 = vsub.s32 0, %v140
      %v142 = vrot.slane %v137, %v141
      %v143 = vlaneseq
      %v144 = vshrl.u32 %v143, 7
      %v145 = vsub.s32 1, %v144
      %v146 = vrot.slane %v137, %v145
      %v147 = vlaneseq
      %v148 = vshrl.u32 %v147, 7
      %v149 = vsub.s32 2, %v148
      %v150 = vrot.slane %v137, %v149
      %v151 = vlaneseq
      %v152 = vshrl.u32 %v151, 7
      %v153 = vsub.s32 3, %v152
      %v154 = vrot.slane %v137, %v153
      %v167 = vunpack.c.l.b16 %v97
      %v168 = vunpack.c.l.b16 %v98
      %v169 = vunpack.c.l.b16 %v99
      %v170 = vunpack.c.l.b16 %v100
      %v171 = vunpack.c.l.b16 %v101
      %v172 = vunpack.c.l.b16 %v102
      %v173 = vunpack.c.l.b16 %v103
      %v174 = vunpack.c.l.b16 %v104
      %v175 = vpack.c.b16 %v168, %v167
      %v176 = vpack.c.b16 %v170, %v169
      %v177 = vpack.c.b16 %v172, %v171
      %v178 = vpack.c.b16 %v174, %v173
      %v215 = vunpack.c.l.b16 %v105
      %v216 = vunpack.c.h.b16 %v105
      %v217 = vunpack.c.l.b16 %v106
      %v218 = vunpack.c.h.b16 %v106
      %v219 = vunpack.c.l.b16 %v107
      %v220 = vunpack.c.h.b16 %v107
      %v221 = vunpack.c.l.b16 %v108
      %v222 = vunpack.c.h.b16 %v108
      %v223 = vunpack.c.l.b16 %v109
      %v224 = vunpack.c.h.b16 %v109
      %v225 = vunpack.c.l.b16 %v110
      %v226 = vunpack.c.h.b16 %v110
      %v227 = vunpack.c.l.b16 %v111
      %v228 = vunpack.c.h.b16 %v111
      %v229 = vunpack.c.l.b16 %v112
      %v230 = vunpack.c.h.b16 %v112
      %v231 = vunpack.c.l.b16 %v113
      %v232 = vunpack.c.h.b16 %v113
      %v233 = vunpack.c.l.b16 %v114
      %v234 = vunpack.c.h.b16 %v114
      %v235 = vunpack.c.l.b16 %v115
      %v236 = vunpack.c.h.b16 %v115
      %v237 = vunpack.c.l.b16 %v116
      %v238 = vunpack.c.h.b16 %v116
      %v239 = vunpack.c.l.b16 %v117
      %v240 = vunpack.c.h.b16 %v117
      %v241 = vunpack.c.l.b16 %v118
      %v242 = vunpack.c.h.b16 %v118
      %v243 = vunpack.c.l.b16 %v119
      %v244 = vunpack.c.h.b16 %v119
      %v245 = vunpack.c.l.b16 %v120
      %v246 = vunpack.c.h.b16 %v120
      %v247 = vunpack.c.l.b16 %v121
      %v248 = vunpack.c.h.b16 %v121
      %v249 = vunpack.c.l.b16 %v122
      %v250 = vunpack.c.h.b16 %v122
      %v251 = vunpack.c.l.b16 %v123
      %v252 = vunpack.c.h.b16 %v123
      %v253 = vunpack.c.l.b16 %v124
      %v254 = vunpack.c.h.b16 %v124
      %v255 = vunpack.c.l.b16 %v125
      %v256 = vunpack.c.h.b16 %v125
      %v257 = vunpack.c.l.b16 %v126
      %v258 = vunpack.c.h.b16 %v126
      %v259 = vunpack.c.l.b16 %v127
      %v260 = vunpack.c.h.b16 %v127
      %v261 = vunpack.c.l.b16 %v128
      %v262 = vunpack.c.h.b16 %v128
      %v263 = vunpack.c.l.b16 %v129
      %v264 = vunpack.c.h.b16 %v129
      %v265 = vunpack.c.l.b16 %v130
      %v266 = vunpack.c.h.b16 %v130
      %v267 = vunpack.c.l.b16 %v131
      %v268 = vunpack.c.h.b16 %v131
      %v269 = vunpack.c.l.b16 %v132
      %v270 = vunpack.c.h.b16 %v132
      %v271 = vunpack.c.l.b16 %v133
      %v272 = vunpack.c.h.b16 %v133
      %v273 = vunpack.c.l.b16 %v134
      %v274 = vunpack.c.h.b16 %v134
      %v275 = vunpack.c.l.b16 %v135
      %v276 = vunpack.c.h.b16 %v135
      %v277 = vunpack.c.l.b16 %v136
      %v278 = vunpack.c.h.b16 %v136
      %v279 = vpack.c.b16 %v219, %v215
      %v280 = vpack.c.b16 %v220, %v216
      %v281 = vpack.c.b16 %v221, %v217
      %v282 = vpack.c.b16 %v222, %v218
      %v283 = vpack.c.b16 %v227, %v223
      %v284 = vpack.c.b16 %v228, %v224
      %v285 = vpack.c.b16 %v229, %v225
      %v286 = vpack.c.b16 %v230, %v226
      %v287 = vpack.c.b16 %v235, %v231
      %v288 = vpack.c.b16 %v236, %v232
      %v289 = vpack.c.b16 %v237, %v233
      %v290 = vpack.c.b16 %v238, %v234
      %v291 = vpack.c.b16 %v243, %v239
      %v292 = vpack.c.b16 %v244, %v240
      %v293 = vpack.c.b16 %v245, %v241
      %v294 = vpack.c.b16 %v246, %v242
      %v295 = vpack.c.b16 %v251, %v247
      %v296 = vpack.c.b16 %v252, %v248
      %v297 = vpack.c.b16 %v253, %v249
      %v298 = vpack.c.b16 %v254, %v250
      %v299 = vpack.c.b16 %v259, %v255
      %v300 = vpack.c.b16 %v260, %v256
      %v301 = vpack.c.b16 %v261, %v257
      %v302 = vpack.c.b16 %v262, %v258
      %v303 = vpack.c.b16 %v267, %v263
      %v304 = vpack.c.b16 %v268, %v264
      %v305 = vpack.c.b16 %v269, %v265
      %v306 = vpack.c.b16 %v270, %v266
      %v307 = vpack.c.b16 %v275, %v271
      %v308 = vpack.c.b16 %v276, %v272
      %v309 = vpack.c.b16 %v277, %v273
      %v310 = vpack.c.b16 %v278, %v274
      %343 = vmatprep.subr.bf16.mxu0 %v308
      %344 = vmatpush1.bf16.msra.mxu0 %v307
      %345 = vmatprep.subr.bf16.mxu0 %v304
      %346 = vmatpush1.bf16.msra.mxu0 %v303
      %347 = vmatprep.subr.bf16.mxu0 %v300
      %348 = vmatpush1.bf16.msra.mxu0 %v299
      %349 = vmatprep.subr.bf16.mxu0 %v296
      %350 = vmatpush1.bf16.msra.mxu0 %v295
      %351 = vmatprep.subr.bf16.mxu0 %v292
      %352 = vmatpush1.bf16.msra.mxu0 %v291
      %353 = vmatprep.subr.bf16.mxu0 %v288
      %354 = vmatpush1.bf16.msra.mxu0 %v287
      %355 = vmatprep.subr.bf16.mxu0 %v284
      %356 = vmatpush1.bf16.msra.mxu0 %v283
      %357 = vmatprep.subr.bf16.mxu0 %v280
      %358 = vmatpush1.bf16.msra.mxu0 %v279
      %359 = vmatprep.subr.bf16.mxu0 0
      %360 = vmatpush2.bf16.msra.mxu0 0
      %361 = vmatprep.subr.bf16.mxu0 0
      %362 = vmatpush2.bf16.msra.mxu0 0
      %363 = vmatprep.subr.bf16.mxu0 0
      %364 = vmatpush2.bf16.msra.mxu0 0
      %365 = vmatprep.subr.bf16.mxu0 0
      %366 = vmatpush2.bf16.msra.mxu0 0
      %367 = vmatprep.subr.bf16.mxu0 0
      %368 = vmatpush2.bf16.msra.mxu0 0
      %369 = vmatprep.subr.bf16.mxu0 0
      %370 = vmatpush2.bf16.msra.mxu0 0
      %371 = vmatprep.subr.bf16.mxu0 0
      %372 = vmatpush2.bf16.msra.mxu0 0
      %373 = vmatprep.subr.bf16.mxu0 0
      %374 = vmatpush2.bf16.msra.mxu0 0
      %375 = vmatprep.mubr.bf16.mxu0 0
      %376 = vmatmul.mubr.bf16.gmra.mxu0 %v175
      %v377 = vpop.f32.mrf.mxu0
      %v378 = vadd.f32 %v142, %v377
      %v379 = vpop.f32.mrf.mxu0
      %v380 = vadd.f32 %v146, %v379
      %v381 = vpop.f32.mrf.mxu0
      %v382 = vadd.f32 %v142, %v381
      %v383 = vpop.f32.mrf.mxu0
      %v384 = vadd.f32 %v146, %v383
      %385 = vmatprep.mubr.bf16.mxu0 0
      %386 = vmatmul.mubr.bf16.gmra.mxu0 %v176
      %v387 = vpop.f32.mrf.mxu0
      %v388 = vadd.f32 %v142, %v387
      %v389 = vpop.f32.mrf.mxu0
      %v390 = vadd.f32 %v146, %v389
      %v391 = vpop.f32.mrf.mxu0
      %v392 = vadd.f32 %v142, %v391
      %v393 = vpop.f32.mrf.mxu0
      %v394 = vadd.f32 %v146, %v393
      %395 = vmatprep.mubr.bf16.mxu0 0
      %396 = vmatmul.mubr.bf16.gmra.mxu0 %v177
      %v397 = vpop.f32.mrf.mxu0
      %v398 = vadd.f32 %v142, %v397
      %v399 = vpop.f32.mrf.mxu0
      %v400 = vadd.f32 %v146, %v399
      %v401 = vpop.f32.mrf.mxu0
      %v402 = vadd.f32 %v142, %v401
      %v403 = vpop.f32.mrf.mxu0
      %v404 = vadd.f32 %v146, %v403
      %405 = vmatprep.mubr.bf16.mxu0 0
      %406 = vmatmul.mubr.bf16.gmra.mxu0 %v178
      %v407 = vpop.f32.mrf.mxu0
      %v408 = vadd.f32 %v142, %v407
      %v409 = vpop.f32.mrf.mxu0
      %v410 = vadd.f32 %v146, %v409
      %v411 = vpop.f32.mrf.mxu0
      %v412 = vadd.f32 %v142, %v411
      %v413 = vpop.f32.mrf.mxu0
      %v414 = vadd.f32 %v146, %v413
      %415 = vdwg.mxu0
      %416 = vmatprep.subr.bf16.mxu0 %v310
      %417 = vmatpush1.bf16.msra.mxu0 %v309
      %418 = vmatprep.subr.bf16.mxu0 %v306
      %419 = vmatpush1.bf16.msra.mxu0 %v305
      %420 = vmatprep.subr.bf16.mxu0 %v302
      %421 = vmatpush1.bf16.msra.mxu0 %v301
      %422 = vmatprep.subr.bf16.mxu0 %v298
      %423 = vmatpush1.bf16.msra.mxu0 %v297
      %424 = vmatprep.subr.bf16.mxu0 %v294
      %425 = vmatpush1.bf16.msra.mxu0 %v293
      %426 = vmatprep.subr.bf16.mxu0 %v290
      %427 = vmatpush1.bf16.msra.mxu0 %v289
      %428 = vmatprep.subr.bf16.mxu0 %v286
      %429 = vmatpush1.bf16.msra.mxu0 %v285
      %430 = vmatprep.subr.bf16.mxu0 %v282
      %431 = vmatpush1.bf16.msra.mxu0 %v281
      %432 = vmatprep.subr.bf16.mxu0 0
      %433 = vmatpush2.bf16.msra.mxu0 0
      %434 = vmatprep.subr.bf16.mxu0 0
      %435 = vmatpush2.bf16.msra.mxu0 0
      %436 = vmatprep.subr.bf16.mxu0 0
      %437 = vmatpush2.bf16.msra.mxu0 0
      %438 = vmatprep.subr.bf16.mxu0 0
      %439 = vmatpush2.bf16.msra.mxu0 0
      %440 = vmatprep.subr.bf16.mxu0 0
      %441 = vmatpush2.bf16.msra.mxu0 0
      %442 = vmatprep.subr.bf16.mxu0 0
      %443 = vmatpush2.bf16.msra.mxu0 0
      %444 = vmatprep.subr.bf16.mxu0 0
      %445 = vmatpush2.bf16.msra.mxu0 0
      %446 = vmatprep.subr.bf16.mxu0 0
      %447 = vmatpush2.bf16.msra.mxu0 0
      %448 = vmatprep.mubr.bf16.mxu0 0
      %449 = vmatmul.mubr.bf16.gmra.mxu0 %v175
      %v450 = vpop.f32.mrf.mxu0
      %v451 = vadd.f32 %v150, %v450
      %v452 = vpop.f32.mrf.mxu0
      %v453 = vadd.f32 %v154, %v452
      %v454 = vpop.f32.mrf.mxu0
      %v455 = vadd.f32 %v150, %v454
      %v456 = vpop.f32.mrf.mxu0
      %v457 = vadd.f32 %v154, %v456
      %458 = vmatprep.mubr.bf16.mxu0 0
      %459 = vmatmul.mubr.bf16.gmra.mxu0 %v176
      %v460 = vpop.f32.mrf.mxu0
      %v461 = vadd.f32 %v150, %v460
      %v462 = vpop.f32.mrf.mxu0
      %v463 = vadd.f32 %v154, %v462
      %v464 = vpop.f32.mrf.mxu0
      %v465 = vadd.f32 %v150, %v464
      %v466 = vpop.f32.mrf.mxu0
      %v467 = vadd.f32 %v154, %v466
      %468 = vmatprep.mubr.bf16.mxu0 0
      %469 = vmatmul.mubr.bf16.gmra.mxu0 %v177
      %v470 = vpop.f32.mrf.mxu0
      %v471 = vadd.f32 %v150, %v470
      %v472 = vpop.f32.mrf.mxu0
      %v473 = vadd.f32 %v154, %v472
      %v474 = vpop.f32.mrf.mxu0
      %v475 = vadd.f32 %v150, %v474
      %v476 = vpop.f32.mrf.mxu0
      %v477 = vadd.f32 %v154, %v476
      %478 = vmatprep.mubr.bf16.mxu0 0
      %479 = vmatmul.mubr.bf16.gmra.mxu0 %v178
      %v480 = vpop.f32.mrf.mxu0
      %v481 = vadd.f32 %v150, %v480
      %v482 = vpop.f32.mrf.mxu0
      %v483 = vadd.f32 %v154, %v482
      %v484 = vpop.f32.mrf.mxu0
      %v485 = vadd.f32 %v150, %v484
      %v486 = vpop.f32.mrf.mxu0
      %v487 = vadd.f32 %v154, %v486
      %488 = vdwg.mxu0
      %489 = vst [vmem:[#allocation2] sm:$0xff] %v378
      %490 = vst [vmem:[#allocation2 + $0x8] sm:$0xff] %v380
      %491 = vst [vmem:[#allocation2 + $0x10] sm:$0xff] %v451
      %492 = vst [vmem:[#allocation2 + $0x18] sm:$0xff] %v453
      %493 = vst [vmem:[#allocation2 + $0x20] sm:$0xff] %v382
      %494 = vst [vmem:[#allocation2 + $0x28] sm:$0xff] %v384
      %495 = vst [vmem:[#allocation2 + $0x30] sm:$0xff] %v455
      %496 = vst [vmem:[#allocation2 + $0x38] sm:$0xff] %v457
      %497 = vst [vmem:[#allocation2 + $0x40] sm:$0xff] %v388
      %498 = vst [vmem:[#allocation2 + $0x48] sm:$0xff] %v390
      %499 = vst [vmem:[#allocation2 + $0x50] sm:$0xff] %v461
      %500 = vst [vmem:[#allocation2 + $0x58] sm:$0xff] %v463
      %501 = vst [vmem:[#allocation2 + $0x60] sm:$0xff] %v392
      %502 = vst [vmem:[#allocation2 + $0x68] sm:$0xff] %v394
      %503 = vst [vmem:[#allocation2 + $0x70] sm:$0xff] %v465
      %504 = vst [vmem:[#allocation2 + $0x78] sm:$0xff] %v467
      %505 = vst [vmem:[#allocation2 + $0x80] sm:$0xff] %v398
      %506 = vst [vmem:[#allocation2 + $0x88] sm:$0xff] %v400
      %507 = vst [vmem:[#allocation2 + $0x90] sm:$0xff] %v471
      %508 = vst [vmem:[#allocation2 + $0x98] sm:$0xff] %v473
      %509 = vst [vmem:[#allocation2 + $0xa0] sm:$0xff] %v402
      %510 = vst [vmem:[#allocation2 + $0xa8] sm:$0xff] %v404
      %511 = vst [vmem:[#allocation2 + $0xb0] sm:$0xff] %v475
      %512 = vst [vmem:[#allocation2 + $0xb8] sm:$0xff] %v477
      %513 = vst [vmem:[#allocation2 + $0xc0] sm:$0xff] %v408
      %514 = vst [vmem:[#allocation2 + $0xc8] sm:$0xff] %v410
      %515 = vst [vmem:[#allocation2 + $0xd0] sm:$0xff] %v481
      %516 = vst [vmem:[#allocation2 + $0xd8] sm:$0xff] %v483
      %517 = vst [vmem:[#allocation2 + $0xe0] sm:$0xff] %v412
      %518 = vst [vmem:[#allocation2 + $0xe8] sm:$0xff] %v414
      %519 = vst [vmem:[#allocation2 + $0xf0] sm:$0xff] %v485
      %520 = vst [vmem:[#allocation2 + $0xf8] sm:$0xff] %v487
      %v521 = vld [vmem:[%s2] sm:$0xff]
      %v522 = vld [vmem:[#allocation2] sm:$0xff]
      %v523 = vld [vmem:[#allocation2 + $0x8] sm:$0xff]
      %v524 = vld [vmem:[#allocation2 + $0x10] sm:$0xff]
      %v525 = vld [vmem:[#allocation2 + $0x18] sm:$0xff]
      %v526 = vld [vmem:[#allocation3] sm:$0xff]
      %v527 = vpack.c.bf16 %v526, %v526
      %v528 = vld [vmem:[#allocation12] sm:$0xff]
      %v529 = vld [vmem:[#allocation12 + $0x8] sm:$0xff]
      %v530 = vld [vmem:[#allocation12 + $0x10] sm:$0xff]
      %v531 = vld [vmem:[#allocation12 + $0x18] sm:$0xff]
      %v532 = vld [vmem:[#allocation12 + $0x20] sm:$0xff]
      %v533 = vld [vmem:[#allocation12 + $0x28] sm:$0xff]
      %v534 = vld [vmem:[#allocation12 + $0x30] sm:$0xff]
      %v535 = vld [vmem:[#allocation12 + $0x38] sm:$0xff]
      %v536 = vld [vmem:[#allocation12 + $0x40] sm:$0xff]
      %v537 = vld [vmem:[#allocation12 + $0x48] sm:$0xff]
      %v538 = vld [vmem:[#allocation12 + $0x50] sm:$0xff]
      %v539 = vld [vmem:[#allocation12 + $0x58] sm:$0xff]
      %v540 = vld [vmem:[#allocation12 + $0x60] sm:$0xff]
      %v541 = vld [vmem:[#allocation12 + $0x68] sm:$0xff]
      %v542 = vld [vmem:[#allocation12 + $0x70] sm:$0xff]
      %v543 = vld [vmem:[#allocation12 + $0x78] sm:$0xff]
      %v544 = vld [vmem:[#allocation12 + $0x80] sm:$0xff]
      %v545 = vld [vmem:[#allocation12 + $0x88] sm:$0xff]
      %v546 = vld [vmem:[#allocation12 + $0x90] sm:$0xff]
      %v547 = vld [vmem:[#allocation12 + $0x98] sm:$0xff]
      %v548 = vld [vmem:[#allocation12 + $0xa0] sm:$0xff]
      %v549 = vld [vmem:[#allocation12 + $0xa8] sm:$0xff]
      %v550 = vld [vmem:[#allocation12 + $0xb0] sm:$0xff]
      %v551 = vld [vmem:[#allocation12 + $0xb8] sm:$0xff]
      %v552 = vld [vmem:[#allocation12 + $0xc0] sm:$0xff]
      %v553 = vld [vmem:[#allocation12 + $0xc8] sm:$0xff]
      %v554 = vld [vmem:[#allocation12 + $0xd0] sm:$0xff]
      %v555 = vld [vmem:[#allocation12 + $0xd8] sm:$0xff]
      %v556 = vld [vmem:[#allocation12 + $0xe0] sm:$0xff]
      %v557 = vld [vmem:[#allocation12 + $0xe8] sm:$0xff]
      %v558 = vld [vmem:[#allocation12 + $0xf0] sm:$0xff]
      %v559 = vld [vmem:[#allocation12 + $0xf8] sm:$0xff]
      %v592 = vunpack.c.l.b16 %v528
      %v593 = vunpack.c.h.b16 %v528
      %v594 = vunpack.c.l.b16 %v529
      %v595 = vunpack.c.h.b16 %v529
      %v596 = vunpack.c.l.b16 %v530
      %v597 = vunpack.c.h.b16 %v530
      %v598 = vunpack.c.l.b16 %v531
      %v599 = vunpack.c.h.b16 %v531
      %v600 = vunpack.c.l.b16 %v532
      %v601 = vunpack.c.h.b16 %v532
      %v602 = vunpack.c.l.b16 %v533
      %v603 = vunpack.c.h.b16 %v533
      %v604 = vunpack.c.l.b16 %v534
      %v605 = vunpack.c.h.b16 %v534
      %v606 = vunpack.c.l.b16 %v535
      %v607 = vunpack.c.h.b16 %v535
      %v608 = vunpack.c.l.b16 %v536
      %v609 = vunpack.c.h.b16 %v536
      %v610 = vunpack.c.l.b16 %v537
      %v611 = vunpack.c.h.b16 %v537
      %v612 = vunpack.c.l.b16 %v538
      %v613 = vunpack.c.h.b16 %v538
      %v614 = vunpack.c.l.b16 %v539
      %v615 = vunpack.c.h.b16 %v539
      %v616 = vunpack.c.l.b16 %v540
      %v617 = vunpack.c.h.b16 %v540
      %v618 = vunpack.c.l.b16 %v541
      %v619 = vunpack.c.h.b16 %v541
      %v620 = vunpack.c.l.b16 %v542
      %v621 = vunpack.c.h.b16 %v542
      %v622 = vunpack.c.l.b16 %v543
      %v623 = vunpack.c.h.b16 %v543
      %v624 = vunpack.c.l.b16 %v544
      %v625 = vunpack.c.h.b16 %v544
      %v626 = vunpack.c.l.b16 %v545
      %v627 = vunpack.c.h.b16 %v545
      %v628 = vunpack.c.l.b16 %v546
      %v629 = vunpack.c.h.b16 %v546
      %v630 = vunpack.c.l.b16 %v547
      %v631 = vunpack.c.h.b16 %v547
      %v632 = vunpack.c.l.b16 %v548
      %v633 = vunpack.c.h.b16 %v548
      %v634 = vunpack.c.l.b16 %v549
      %v635 = vunpack.c.h.b16 %v549
      %v636 = vunpack.c.l.b16 %v550
      %v637 = vunpack.c.h.b16 %v550
      %v638 = vunpack.c.l.b16 %v551
      %v639 = vunpack.c.h.b16 %v551
      %v640 = vunpack.c.l.b16 %v552
      %v641 = vunpack.c.h.b16 %v552
      %v642 = vunpack.c.l.b16 %v553
      %v643 = vunpack.c.h.b16 %v553
      %v644 = vunpack.c.l.b16 %v554
      %v645 = vunpack.c.h.b16 %v554
      %v646 = vunpack.c.l.b16 %v555
      %v647 = vunpack.c.h.b16 %v555
      %v648 = vunpack.c.l.b16 %v556
      %v649 = vunpack.c.h.b16 %v556
      %v650 = vunpack.c.l.b16 %v557
      %v651 = vunpack.c.h.b16 %v557
      %v652 = vunpack.c.l.b16 %v558
      %v653 = vunpack.c.h.b16 %v558
      %v654 = vunpack.c.l.b16 %v559
      %v655 = vunpack.c.h.b16 %v559
      %v656 = vpack.c.b16 %v596, %v592
      %v657 = vpack.c.b16 %v597, %v593
      %v658 = vpack.c.b16 %v598, %v594
      %v659 = vpack.c.b16 %v599, %v595
      %v660 = vpack.c.b16 %v604, %v600
      %v661 = vpack.c.b16 %v605, %v601
      %v662 = vpack.c.b16 %v606, %v602
      %v663 = vpack.c.b16 %v607, %v603
      %v664 = vpack.c.b16 %v612, %v608
      %v665 = vpack.c.b16 %v613, %v609
      %v666 = vpack.c.b16 %v614, %v610
      %v667 = vpack.c.b16 %v615, %v611
      %v668 = vpack.c.b16 %v620, %v616
      %v669 = vpack.c.b16 %v621, %v617
      %v670 = vpack.c.b16 %v622, %v618
      %v671 = vpack.c.b16 %v623, %v619
      %v672 = vpack.c.b16 %v628, %v624
      %v673 = vpack.c.b16 %v629, %v625
      %v674 = vpack.c.b16 %v630, %v626
      %v675 = vpack.c.b16 %v631, %v627
      %v676 = vpack.c.b16 %v636, %v632
      %v677 = vpack.c.b16 %v637, %v633
      %v678 = vpack.c.b16 %v638, %v634
      %v679 = vpack.c.b16 %v639, %v635
      %v680 = vpack.c.b16 %v644, %v640
      %v681 = vpack.c.b16 %v645, %v641
      %v682 = vpack.c.b16 %v646, %v642
      %v683 = vpack.c.b16 %v647, %v643
      %v684 = vpack.c.b16 %v652, %v648
      %v685 = vpack.c.b16 %v653, %v649
      %v686 = vpack.c.b16 %v654, %v650
      %v687 = vpack.c.b16 %v655, %v651
      %720 = vmatprep.subr.bf16.mxu0 %v685
      %721 = vmatpush1.bf16.msra.mxu0 %v684
      %722 = vmatprep.subr.bf16.mxu0 %v681
      %723 = vmatpush1.bf16.msra.mxu0 %v680
      %724 = vmatprep.subr.bf16.mxu0 %v677
      %725 = vmatpush1.bf16.msra.mxu0 %v676
      %726 = vmatprep.subr.bf16.mxu0 %v673
      %727 = vmatpush1.bf16.msra.mxu0 %v672
      %728 = vmatprep.subr.bf16.mxu0 %v669
      %729 = vmatpush1.bf16.msra.mxu0 %v668
      %730 = vmatprep.subr.bf16.mxu0 %v665
      %731 = vmatpush1.bf16.msra.mxu0 %v664
      %732 = vmatprep.subr.bf16.mxu0 %v661
      %733 = vmatpush1.bf16.msra.mxu0 %v660
      %734 = vmatprep.subr.bf16.mxu0 %v657
      %735 = vmatpush1.bf16.msra.mxu0 %v656
      %736 = vmatprep.subr.bf16.mxu0 0
      %737 = vmatpush2.bf16.msra.mxu0 0
      %738 = vmatprep.subr.bf16.mxu0 0
      %739 = vmatpush2.bf16.msra.mxu0 0
      %740 = vmatprep.subr.bf16.mxu0 0
      %741 = vmatpush2.bf16.msra.mxu0 0
      %742 = vmatprep.subr.bf16.mxu0 0
      %743 = vmatpush2.bf16.msra.mxu0 0
      %744 = vmatprep.subr.bf16.mxu0 0
      %745 = vmatpush2.bf16.msra.mxu0 0
      %746 = vmatprep.subr.bf16.mxu0 0
      %747 = vmatpush2.bf16.msra.mxu0 0
      %748 = vmatprep.subr.bf16.mxu0 0
      %749 = vmatpush2.bf16.msra.mxu0 0
      %750 = vmatprep.subr.bf16.mxu0 0
      %751 = vmatpush2.bf16.msra.mxu0 0
      %752 = vmatprep.mubr.bf16.mxu0 0
      %753 = vmatmul.mubr.bf16.gmra.mxu0 %v527
      %v754 = vpop.f32.mrf.mxu0
      %v755 = vadd.f32 0.0, %v754
      %v756 = vpop.f32.mrf.mxu0
      %v757 = vadd.f32 0.0, %v756
      %v758 = vpop.f32.mrf.mxu0
      %v759 = vpop.f32.mrf.mxu0
      %760 = vdwg.mxu0
      %761 = vmatprep.subr.bf16.mxu0 %v687
      %762 = vmatpush1.bf16.msra.mxu0 %v686
      %763 = vmatprep.subr.bf16.mxu0 %v683
      %764 = vmatpush1.bf16.msra.mxu0 %v682
      %765 = vmatprep.subr.bf16.mxu0 %v679
      %766 = vmatpush1.bf16.msra.mxu0 %v678
      %767 = vmatprep.subr.bf16.mxu0 %v675
      %768 = vmatpush1.bf16.msra.mxu0 %v674
      %769 = vmatprep.subr.bf16.mxu0 %v671
      %770 = vmatpush1.bf16.msra.mxu0 %v670
      %771 = vmatprep.subr.bf16.mxu0 %v667
      %772 = vmatpush1.bf16.msra.mxu0 %v666
      %773 = vmatprep.subr.bf16.mxu0 %v663
      %774 = vmatpush1.bf16.msra.mxu0 %v662
      %775 = vmatprep.subr.bf16.mxu0 %v659
      %776 = vmatpush1.bf16.msra.mxu0 %v658
      %777 = vmatprep.subr.bf16.mxu0 0
      %778 = vmatpush2.bf16.msra.mxu0 0
      %779 = vmatprep.subr.bf16.mxu0 0
      %780 = vmatpush2.bf16.msra.mxu0 0
      %781 = vmatprep.subr.bf16.mxu0 0
      %782 = vmatpush2.bf16.msra.mxu0 0
      %783 = vmatprep.subr.bf16.mxu0 0
      %784 = vmatpush2.bf16.msra.mxu0 0
      %785 = vmatprep.subr.bf16.mxu0 0
      %786 = vmatpush2.bf16.msra.mxu0 0
      %787 = vmatprep.subr.bf16.mxu0 0
      %788 = vmatpush2.bf16.msra.mxu0 0
      %789 = vmatprep.subr.bf16.mxu0 0
      %790 = vmatpush2.bf16.msra.mxu0 0
      %791 = vmatprep.subr.bf16.mxu0 0
      %792 = vmatpush2.bf16.msra.mxu0 0
      %793 = vmatprep.mubr.bf16.mxu0 0
      %794 = vmatmul.mubr.bf16.gmra.mxu0 %v527
      %v795 = vpop.f32.mrf.mxu0
      %v796 = vadd.f32 0.0, %v795
      %v797 = vpop.f32.mrf.mxu0
      %v798 = vadd.f32 0.0, %v797
      %v799 = vpop.f32.mrf.mxu0
      %v800 = vpop.f32.mrf.mxu0
      %801 = vdwg.mxu0
      %v802 = vadd.f32 %v522, %v755
      %v803 = vadd.f32 %v523, %v757
      %v804 = vadd.f32 %v524, %v796
      %v805 = vadd.f32 %v525, %v798
      %v806 = vmul.f32 %v802, 0.5
      %v807 = vtanh.pop %v806
      %v808 = vmul.f32 %v807, 0.5
      %v809 = vadd.f32 %v808, 0.5
      %v810 = vmul.f32 %v803, 0.5
      %v811 = vtanh.pop %v810
      %v812 = vmul.f32 %v811, 0.5
      %v813 = vadd.f32 %v812, 0.5
      %v814 = vtanh.pop %v804
      %v815 = vmul.f32 %v805, 0.5
      %v816 = vtanh.pop %v815
      %v817 = vmul.f32 %v816, 0.5
      %v818 = vadd.f32 %v817, 0.5
      %v819 = vld [vmem:[#allocation4] sm:$0xff]
      %v820 = vmul.f32 %v813, %v819
      %v821 = vmul.f32 %v809, %v814
      %v822 = vadd.f32 %v820, %v821
      %v823 = vtanh.pop %v822
      %v824 = vmul.f32 %v818, %v823
      %v825 = vstv %s91
      %vm826 = vcmp.lt.s32.totalorder %v825, %v521
      %v827 = vsel %vm826, 1, 0
      %828 = vset.pattern.permute.xlu0 0
      %829 = vperm.xlu0 %828, %v827
      %v830 = vpop.permute.xlu0 %829
      %vm831 = vcmp.eq.s32.totalorder %v830, 1
      %v832 = vsel %vm831, %v822, %v819
      %833 = vst [vmem:[#allocation4] sm:$0xff] %v832
      %v834 = vld [vmem:[#allocation3] sm:$0xff]
      %v835 = vsel %vm831, %v824, %v834
      %836 = vst [vmem:[#allocation3] sm:$0xff] %v835
      %s837 = scalar_lea.vmem [#allocation2], 32
      %v838 = vld [vmem:[%s837] sm:$0xff]
      %v839 = vld [vmem:[%s837 + $0x8] sm:$0xff]
      %v840 = vld [vmem:[%s837 + $0x10] sm:$0xff]
      %v841 = vld [vmem:[%s837 + $0x18] sm:$0xff]
      %v842 = vld [vmem:[#allocation3] sm:$0xff]
      %v843 = vpack.c.bf16 %v842, %v842
      %v844 = vld [vmem:[#allocation12] sm:$0xff]
      %v845 = vld [vmem:[#allocation12 + $0x8] sm:$0xff]
      %v846 = vld [vmem:[#allocation12 + $0x10] sm:$0xff]
      %v847 = vld [vmem:[#allocation12 + $0x18] sm:$0xff]
      %v848 = vld [vmem:[#allocation12 + $0x20] sm:$0xff]
      %v849 = vld [vmem:[#allocation12 + $0x28] sm:$0xff]
      %v850 = vld [vmem:[#allocation12 + $0x30] sm:$0xff]
      %v851 = vld [vmem:[#allocation12 + $0x38] sm:$0xff]
      %v852 = vld [vmem:[#allocation12 + $0x40] sm:$0xff]
      %v853 = vld [vmem:[#allocation12 + $0x48] sm:$0xff]
      %v854 = vld [vmem:[#allocation12 + $0x50] sm:$0xff]
      %v855 = vld [vmem:[#allocation12 + $0x58] sm:$0xff]
      %v856 = vld [vmem:[#allocation12 + $0x60] sm:$0xff]
      %v857 = vld [vmem:[#allocation12 + $0x68] sm:$0xff]
      %v858 = vld [vmem:[#allocation12 + $0x70] sm:$0xff]
      %v859 = vld [vmem:[#allocation12 + $0x78] sm:$0xff]
      %v860 = vld [vmem:[#allocation12 + $0x80] sm:$0xff]
      %v861 = vld [vmem:[#allocation12 + $0x88] sm:$0xff]
      %v862 = vld [vmem:[#allocation12 + $0x90] sm:$0xff]
      %v863 = vld [vmem:[#allocation12 + $0x98] sm:$0xff]
      %v864 = vld [vmem:[#allocation12 + $0xa0] sm:$0xff]
      %v865 = vld [vmem:[#allocation12 + $0xa8] sm:$0xff]
      %v866 = vld [vmem:[#allocation12 + $0xb0] sm:$0xff]
      %v867 = vld [vmem:[#allocation12 + $0xb8] sm:$0xff]
      %v868 = vld [vmem:[#allocation12 + $0xc0] sm:$0xff]
      %v869 = vld [vmem:[#allocation12 + $0xc8] sm:$0xff]
      %v870 = vld [vmem:[#allocation12 + $0xd0] sm:$0xff]
      %v871 = vld [vmem:[#allocation12 + $0xd8] sm:$0xff]
      %v872 = vld [vmem:[#allocation12 + $0xe0] sm:$0xff]
      %v873 = vld [vmem:[#allocation12 + $0xe8] sm:$0xff]
      %v874 = vld [vmem:[#allocation12 + $0xf0] sm:$0xff]
      %v875 = vld [vmem:[#allocation12 + $0xf8] sm:$0xff]
      %v908 = vunpack.c.l.b16 %v844
      %v909 = vunpack.c.h.b16 %v844
      %v910 = vunpack.c.l.b16 %v845
      %v911 = vunpack.c.h.b16 %v845
      %v912 = vunpack.c.l.b16 %v846
      %v913 = vunpack.c.h.b16 %v846
      %v914 = vunpack.c.l.b16 %v847
      %v915 = vunpack.c.h.b16 %v847
      %v916 = vunpack.c.l.b16 %v848
      %v917 = vunpack.c.h.b16 %v848
      %v918 = vunpack.c.l.b16 %v849
      %v919 = vunpack.c.h.b16 %v849
      %v920 = vunpack.c.l.b16 %v850
      %v921 = vunpack.c.h.b16 %v850
      %v922 = vunpack.c.l.b16 %v851
      %v923 = vunpack.c.h.b16 %v851
      %v924 = vunpack.c.l.b16 %v852
      %v925 = vunpack.c.h.b16 %v852
      %v926 = vunpack.c.l.b16 %v853
      %v927 = vunpack.c.h.b16 %v853
      %v928 = vunpack.c.l.b16 %v854
      %v929 = vunpack.c.h.b16 %v854
      %v930 = vunpack.c.l.b16 %v855
      %v931 = vunpack.c.h.b16 %v855
      %v932 = vunpack.c.l.b16 %v856
      %v933 = vunpack.c.h.b16 %v856
      %v934 = vunpack.c.l.b16 %v857
      %v935 = vunpack.c.h.b16 %v857
      %v936 = vunpack.c.l.b16 %v858
      %v937 = vunpack.c.h.b16 %v858
      %v938 = vunpack.c.l.b16 %v859
      %v939 = vunpack.c.h.b16 %v859
      %v940 = vunpack.c.l.b16 %v860
      %v941 = vunpack.c.h.b16 %v860
      %v942 = vunpack.c.l.b16 %v861
      %v943 = vunpack.c.h.b16 %v861
      %v944 = vunpack.c.l.b16 %v862
      %v945 = vunpack.c.h.b16 %v862
      %v946 = vunpack.c.l.b16 %v863
      %v947 = vunpack.c.h.b16 %v863
      %v948 = vunpack.c.l.b16 %v864
      %v949 = vunpack.c.h.b16 %v864
      %v950 = vunpack.c.l.b16 %v865
      %v951 = vunpack.c.h.b16 %v865
      %v952 = vunpack.c.l.b16 %v866
      %v953 = vunpack.c.h.b16 %v866
      %v954 = vunpack.c.l.b16 %v867
      %v955 = vunpack.c.h.b16 %v867
      %v956 = vunpack.c.l.b16 %v868
      %v957 = vunpack.c.h.b16 %v868
      %v958 = vunpack.c.l.b16 %v869
      %v959 = vunpack.c.h.b16 %v869
      %v960 = vunpack.c.l.b16 %v870
      %v961 = vunpack.c.h.b16 %v870
      %v962 = vunpack.c.l.b16 %v871
      %v963 = vunpack.c.h.b16 %v871
      %v964 = vunpack.c.l.b16 %v872
      %v965 = vunpack.c.h.b16 %v872
      %v966 = vunpack.c.l.b16 %v873
      %v967 = vunpack.c.h.b16 %v873
      %v968 = vunpack.c.l.b16 %v874
      %v969 = vunpack.c.h.b16 %v874
      %v970 = vunpack.c.l.b16 %v875
      %v971 = vunpack.c.h.b16 %v875
      %v972 = vpack.c.b16 %v912, %v908
      %v973 = vpack.c.b16 %v913, %v909
      %v974 = vpack.c.b16 %v914, %v910
      %v975 = vpack.c.b16 %v915, %v911
      %v976 = vpack.c.b16 %v920, %v916
      %v977 = vpack.c.b16 %v921, %v917
      %v978 = vpack.c.b16 %v922, %v918
      %v979 = vpack.c.b16 %v923, %v919
      %v980 = vpack.c.b16 %v928, %v924
      %v981 = vpack.c.b16 %v929, %v925
      %v982 = vpack.c.b16 %v930, %v926
      %v983 = vpack.c.b16 %v931, %v927
      %v984 = vpack.c.b16 %v936, %v932
      %v985 = vpack.c.b16 %v937, %v933
      %v986 = vpack.c.b16 %v938, %v934
      %v987 = vpack.c.b16 %v939, %v935
      %v988 = vpack.c.b16 %v944, %v940
      %v989 = vpack.c.b16 %v945, %v941
      %v990 = vpack.c.b16 %v946, %v942
      %v991 = vpack.c.b16 %v947, %v943
      %v992 = vpack.c.b16 %v952, %v948
      %v993 = vpack.c.b16 %v953, %v949
      %v994 = vpack.c.b16 %v954, %v950
      %v995 = vpack.c.b16 %v955, %v951
      %v996 = vpack.c.b16 %v960, %v956
      %v997 = vpack.c.b16 %v961, %v957
      %v998 = vpack.c.b16 %v962, %v958
      %v999 = vpack.c.b16 %v963, %v959
      %v1000 = vpack.c.b16 %v968, %v964
      %v1001 = vpack.c.b16 %v969, %v965
      %v1002 = vpack.c.b16 %v970, %v966
      %v1003 = vpack.c.b16 %v971, %v967
      %1036 = vmatprep.subr.bf16.mxu0 %v1001
      %1037 = vmatpush1.bf16.msra.mxu0 %v1000
      %1038 = vmatprep.subr.bf16.mxu0 %v997
      %1039 = vmatpush1.bf16.msra.mxu0 %v996
      %1040 = vmatprep.subr.bf16.mxu0 %v993
      %1041 = vmatpush1.bf16.msra.mxu0 %v992
      %1042 = vmatprep.subr.bf16.mxu0 %v989
      %1043 = vmatpush1.bf16.msra.mxu0 %v988
      %1044 = vmatprep.subr.bf16.mxu0 %v985
      %1045 = vmatpush1.bf16.msra.mxu0 %v984
      %1046 = vmatprep.subr.bf16.mxu0 %v981
      %1047 = vmatpush1.bf16.msra.mxu0 %v980
      %1048 = vmatprep.subr.bf16.mxu0 %v977
      %1049 = vmatpush1.bf16.msra.mxu0 %v976
      %1050 = vmatprep.subr.bf16.mxu0 %v973
      %1051 = vmatpush1.bf16.msra.mxu0 %v972
      %1052 = vmatprep.subr.bf16.mxu0 0
      %1053 = vmatpush2.bf16.msra.mxu0 0
      %1054 = vmatprep.subr.bf16.mxu0 0
      %1055 = vmatpush2.bf16.msra.mxu0 0
      %1056 = vmatprep.subr.bf16.mxu0 0
      %1057 = vmatpush2.bf16.msra.mxu0 0
      %1058 = vmatprep.subr.bf16.mxu0 0
      %1059 = vmatpush2.bf16.msra.mxu0 0
      %1060 = vmatprep.subr.bf16.mxu0 0
      %1061 = vmatpush2.bf16.msra.mxu0 0
      %1062 = vmatprep.subr.bf16.mxu0 0
      %1063 = vmatpush2.bf16.msra.mxu0 0
      %1064 = vmatprep.subr.bf16.mxu0 0
      %1065 = vmatpush2.bf16.msra.mxu0 0
      %1066 = vmatprep.subr.bf16.mxu0 0
      %1067 = vmatpush2.bf16.msra.mxu0 0
      %1068 = vmatprep.mubr.bf16.mxu0 0
      %1069 = vmatmul.mubr.bf16.gmra.mxu0 %v843
      %v1070 = vpop.f32.mrf.mxu0
      %v1071 = vadd.f32 0.0, %v1070
      %v1072 = vpop.f32.mrf.mxu0
      %v1073 = vadd.f32 0.0, %v1072
      %v1074 = vpop.f32.mrf.mxu0
      %v1075 = vpop.f32.mrf.mxu0
      %1076 = vdwg.mxu0
      %1077 = vmatprep.subr.bf16.mxu0 %v1003
      %1078 = vmatpush1.bf16.msra.mxu0 %v1002
      %1079 = vmatprep.subr.bf16.mxu0 %v999
      %1080 = vmatpush1.bf16.msra.mxu0 %v998
      %1081 = vmatprep.subr.bf16.mxu0 %v995
      %1082 = vmatpush1.bf16.msra.mxu0 %v994
      %1083 = vmatprep.subr.bf16.mxu0 %v991
      %1084 = vmatpush1.bf16.msra.mxu0 %v990
      %1085 = vmatprep.subr.bf16.mxu0 %v987
      %1086 = vmatpush1.bf16.msra.mxu0 %v986
      %1087 = vmatprep.subr.bf16.mxu0 %v983
      %1088 = vmatpush1.bf16.msra.mxu0 %v982
      %1089 = vmatprep.subr.bf16.mxu0 %v979
      %1090 = vmatpush1.bf16.msra.mxu0 %v978
      %1091 = vmatprep.subr.bf16.mxu0 %v975
      %1092 = vmatpush1.bf16.msra.mxu0 %v974
      %1093 = vmatprep.subr.bf16.mxu0 0
      %1094 = vmatpush2.bf16.msra.mxu0 0
      %1095 = vmatprep.subr.bf16.mxu0 0
      %1096 = vmatpush2.bf16.msra.mxu0 0
      %1097 = vmatprep.subr.bf16.mxu0 0
      %1098 = vmatpush2.bf16.msra.mxu0 0
      %1099 = vmatprep.subr.bf16.mxu0 0
      %1100 = vmatpush2.bf16.msra.mxu0 0
      %1101 = vmatprep.subr.bf16.mxu0 0
      %1102 = vmatpush2.bf16.msra.mxu0 0
      %1103 = vmatprep.subr.bf16.mxu0 0
      %1104 = vmatpush2.bf16.msra.mxu0 0
      %1105 = vmatprep.subr.bf16.mxu0 0
      %1106 = vmatpush2.bf16.msra.mxu0 0
      %1107 = vmatprep.subr.bf16.mxu0 0
      %1108 = vmatpush2.bf16.msra.mxu0 0
      %1109 = vmatprep.mubr.bf16.mxu0 0
      %1110 = vmatmul.mubr.bf16.gmra.mxu0 %v843
      %v1111 = vpop.f32.mrf.mxu0
      %v1112 = vadd.f32 0.0, %v1111
      %v1113 = vpop.f32.mrf.mxu0
      %v1114 = vadd.f32 0.0, %v1113
      %v1115 = vpop.f32.mrf.mxu0
      %v1116 = vpop.f32.mrf.mxu0
      %1117 = vdwg.mxu0
      %v1118 = vadd.f32 %v838, %v1071
      %v1119 = vadd.f32 %v839, %v1073
      %v1120 = vadd.f32 %v840, %v1112
      %v1121 = vadd.f32 %v841, %v1114
      %v1122 = vmul.f32 %v1118, 0.5
      %v1123 = vtanh.pop %v1122
      %v1124 = vmul.f32 %v1123, 0.5
      %v1125 = vadd.f32 %v1124, 0.5
      %v1126 = vmul.f32 %v1119, 0.5
      %v1127 = vtanh.pop %v1126
      %v1128 = vmul.f32 %v1127, 0.5
      %v1129 = vadd.f32 %v1128, 0.5
      %v1130 = vtanh.pop %v1120
      %v1131 = vmul.f32 %v1121, 0.5
      %v1132 = vtanh.pop %v1131
      %v1133 = vmul.f32 %v1132, 0.5
      %v1134 = vadd.f32 %v1133, 0.5
      %v1135 = vld [vmem:[#allocation4] sm:$0xff]
      %v1136 = vmul.f32 %v1129, %v1135
      %v1137 = vmul.f32 %v1125, %v1130
      %v1138 = vadd.f32 %v1136, %v1137
      %v1139 = vtanh.pop %v1138
      %v1140 = vmul.f32 %v1134, %v1139
      %s1141 = sadd.s32 %s91, 1
      %v1142 = vstv %s1141
      %vm1143 = vcmp.lt.s32.totalorder %v1142, %v521
      %v1144 = vsel %vm1143, 1, 0
      %1145 = vset.pattern.permute.xlu0 0
      %1146 = vperm.xlu0 %1145, %v1144
      %v1147 = vpop.permute.xlu0 %1146
      %vm1148 = vcmp.eq.s32.totalorder %v1147, 1
      %v1149 = vsel %vm1148, %v1138, %v1135
      %1150 = vst [vmem:[#allocation4] sm:$0xff] %v1149
      %v1151 = vld [vmem:[#allocation3] sm:$0xff]
      %v1152 = vsel %vm1148, %v1140, %v1151
      %1153 = vst [vmem:[#allocation3] sm:$0xff] %v1152
      %s1154 = scalar_lea.vmem [#allocation2], 64
      %v1155 = vld [vmem:[%s1154] sm:$0xff]
      %v1156 = vld [vmem:[%s1154 + $0x8] sm:$0xff]
      %v1157 = vld [vmem:[%s1154 + $0x10] sm:$0xff]
      %v1158 = vld [vmem:[%s1154 + $0x18] sm:$0xff]
      %v1159 = vld [vmem:[#allocation3] sm:$0xff]
      %v1160 = vpack.c.bf16 %v1159, %v1159
      %v1161 = vld [vmem:[#allocation12] sm:$0xff]
      %v1162 = vld [vmem:[#allocation12 + $0x8] sm:$0xff]
      %v1163 = vld [vmem:[#allocation12 + $0x10] sm:$0xff]
      %v1164 = vld [vmem:[#allocation12 + $0x18] sm:$0xff]
      %v1165 = vld [vmem:[#allocation12 + $0x20] sm:$0xff]
      %v1166 = vld [vmem:[#allocation12 + $0x28] sm:$0xff]
      %v1167 = vld [vmem:[#allocation12 + $0x30] sm:$0xff]
      %v1168 = vld [vmem:[#allocation12 + $0x38] sm:$0xff]
      %v1169 = vld [vmem:[#allocation12 + $0x40] sm:$0xff]
      %v1170 = vld [vmem:[#allocation12 + $0x48] sm:$0xff]
      %v1171 = vld [vmem:[#allocation12 + $0x50] sm:$0xff]
      %v1172 = vld [vmem:[#allocation12 + $0x58] sm:$0xff]
      %v1173 = vld [vmem:[#allocation12 + $0x60] sm:$0xff]
      %v1174 = vld [vmem:[#allocation12 + $0x68] sm:$0xff]
      %v1175 = vld [vmem:[#allocation12 + $0x70] sm:$0xff]
      %v1176 = vld [vmem:[#allocation12 + $0x78] sm:$0xff]
      %v1177 = vld [vmem:[#allocation12 + $0x80] sm:$0xff]
      %v1178 = vld [vmem:[#allocation12 + $0x88] sm:$0xff]
      %v1179 = vld [vmem:[#allocation12 + $0x90] sm:$0xff]
      %v1180 = vld [vmem:[#allocation12 + $0x98] sm:$0xff]
      %v1181 = vld [vmem:[#allocation12 + $0xa0] sm:$0xff]
      %v1182 = vld [vmem:[#allocation12 + $0xa8] sm:$0xff]
      %v1183 = vld [vmem:[#allocation12 + $0xb0] sm:$0xff]
      %v1184 = vld [vmem:[#allocation12 + $0xb8] sm:$0xff]
      %v1185 = vld [vmem:[#allocation12 + $0xc0] sm:$0xff]
      %v1186 = vld [vmem:[#allocation12 + $0xc8] sm:$0xff]
      %v1187 = vld [vmem:[#allocation12 + $0xd0] sm:$0xff]
      %v1188 = vld [vmem:[#allocation12 + $0xd8] sm:$0xff]
      %v1189 = vld [vmem:[#allocation12 + $0xe0] sm:$0xff]
      %v1190 = vld [vmem:[#allocation12 + $0xe8] sm:$0xff]
      %v1191 = vld [vmem:[#allocation12 + $0xf0] sm:$0xff]
      %v1192 = vld [vmem:[#allocation12 + $0xf8] sm:$0xff]
      %v1225 = vunpack.c.l.b16 %v1161
      %v1226 = vunpack.c.h.b16 %v1161
      %v1227 = vunpack.c.l.b16 %v1162
      %v1228 = vunpack.c.h.b16 %v1162
      %v1229 = vunpack.c.l.b16 %v1163
      %v1230 = vunpack.c.h.b16 %v1163
      %v1231 = vunpack.c.l.b16 %v1164
      %v1232 = vunpack.c.h.b16 %v1164
      %v1233 = vunpack.c.l.b16 %v1165
      %v1234 = vunpack.c.h.b16 %v1165
      %v1235 = vunpack.c.l.b16 %v1166
      %v1236 = vunpack.c.h.b16 %v1166
      %v1237 = vunpack.c.l.b16 %v1167
      %v1238 = vunpack.c.h.b16 %v1167
      %v1239 = vunpack.c.l.b16 %v1168
      %v1240 = vunpack.c.h.b16 %v1168
      %v1241 = vunpack.c.l.b16 %v1169
      %v1242 = vunpack.c.h.b16 %v1169
      %v1243 = vunpack.c.l.b16 %v1170
      %v1244 = vunpack.c.h.b16 %v1170
      %v1245 = vunpack.c.l.b16 %v1171
      %v1246 = vunpack.c.h.b16 %v1171
      %v1247 = vunpack.c.l.b16 %v1172
      %v1248 = vunpack.c.h.b16 %v1172
      %v1249 = vunpack.c.l.b16 %v1173
      %v1250 = vunpack.c.h.b16 %v1173
      %v1251 = vunpack.c.l.b16 %v1174
      %v1252 = vunpack.c.h.b16 %v1174
      %v1253 = vunpack.c.l.b16 %v1175
      %v1254 = vunpack.c.h.b16 %v1175
      %v1255 = vunpack.c.l.b16 %v1176
      %v1256 = vunpack.c.h.b16 %v1176
      %v1257 = vunpack.c.l.b16 %v1177
      %v1258 = vunpack.c.h.b16 %v1177
      %v1259 = vunpack.c.l.b16 %v1178
      %v1260 = vunpack.c.h.b16 %v1178
      %v1261 = vunpack.c.l.b16 %v1179
      %v1262 = vunpack.c.h.b16 %v1179
      %v1263 = vunpack.c.l.b16 %v1180
      %v1264 = vunpack.c.h.b16 %v1180
      %v1265 = vunpack.c.l.b16 %v1181
      %v1266 = vunpack.c.h.b16 %v1181
      %v1267 = vunpack.c.l.b16 %v1182
      %v1268 = vunpack.c.h.b16 %v1182
      %v1269 = vunpack.c.l.b16 %v1183
      %v1270 = vunpack.c.h.b16 %v1183
      %v1271 = vunpack.c.l.b16 %v1184
      %v1272 = vunpack.c.h.b16 %v1184
      %v1273 = vunpack.c.l.b16 %v1185
      %v1274 = vunpack.c.h.b16 %v1185
      %v1275 = vunpack.c.l.b16 %v1186
      %v1276 = vunpack.c.h.b16 %v1186
      %v1277 = vunpack.c.l.b16 %v1187
      %v1278 = vunpack.c.h.b16 %v1187
      %v1279 = vunpack.c.l.b16 %v1188
      %v1280 = vunpack.c.h.b16 %v1188
      %v1281 = vunpack.c.l.b16 %v1189
      %v1282 = vunpack.c.h.b16 %v1189
      %v1283 = vunpack.c.l.b16 %v1190
      %v1284 = vunpack.c.h.b16 %v1190
      %v1285 = vunpack.c.l.b16 %v1191
      %v1286 = vunpack.c.h.b16 %v1191
      %v1287 = vunpack.c.l.b16 %v1192
      %v1288 = vunpack.c.h.b16 %v1192
      %v1289 = vpack.c.b16 %v1229, %v1225
      %v1290 = vpack.c.b16 %v1230, %v1226
      %v1291 = vpack.c.b16 %v1231, %v1227
      %v1292 = vpack.c.b16 %v1232, %v1228
      %v1293 = vpack.c.b16 %v1237, %v1233
      %v1294 = vpack.c.b16 %v1238, %v1234
      %v1295 = vpack.c.b16 %v1239, %v1235
      %v1296 = vpack.c.b16 %v1240, %v1236
      %v1297 = vpack.c.b16 %v1245, %v1241
      %v1298 = vpack.c.b16 %v1246, %v1242
      %v1299 = vpack.c.b16 %v1247, %v1243
      %v1300 = vpack.c.b16 %v1248, %v1244
      %v1301 = vpack.c.b16 %v1253, %v1249
      %v1302 = vpack.c.b16 %v1254, %v1250
      %v1303 = vpack.c.b16 %v1255, %v1251
      %v1304 = vpack.c.b16 %v1256, %v1252
      %v1305 = vpack.c.b16 %v1261, %v1257
      %v1306 = vpack.c.b16 %v1262, %v1258
      %v1307 = vpack.c.b16 %v1263, %v1259
      %v1308 = vpack.c.b16 %v1264, %v1260
      %v1309 = vpack.c.b16 %v1269, %v1265
      %v1310 = vpack.c.b16 %v1270, %v1266
      %v1311 = vpack.c.b16 %v1271, %v1267
      %v1312 = vpack.c.b16 %v1272, %v1268
      %v1313 = vpack.c.b16 %v1277, %v1273
      %v1314 = vpack.c.b16 %v1278, %v1274
      %v1315 = vpack.c.b16 %v1279, %v1275
      %v1316 = vpack.c.b16 %v1280, %v1276
      %v1317 = vpack.c.b16 %v1285, %v1281
      %v1318 = vpack.c.b16 %v1286, %v1282
      %v1319 = vpack.c.b16 %v1287, %v1283
      %v1320 = vpack.c.b16 %v1288, %v1284
      %1353 = vmatprep.subr.bf16.mxu0 %v1318
      %1354 = vmatpush1.bf16.msra.mxu0 %v1317
      %1355 = vmatprep.subr.bf16.mxu0 %v1314
      %1356 = vmatpush1.bf16.msra.mxu0 %v1313
      %1357 = vmatprep.subr.bf16.mxu0 %v1310
      %1358 = vmatpush1.bf16.msra.mxu0 %v1309
      %1359 = vmatprep.subr.bf16.mxu0 %v1306
      %1360 = vmatpush1.bf16.msra.mxu0 %v1305
      %1361 = vmatprep.subr.bf16.mxu0 %v1302
      %1362 = vmatpush1.bf16.msra.mxu0 %v1301
      %1363 = vmatprep.subr.bf16.mxu0 %v1298
      %1364 = vmatpush1.bf16.msra.mxu0 %v1297
      %1365 = vmatprep.subr.bf16.mxu0 %v1294
      %1366 = vmatpush1.bf16.msra.mxu0 %v1293
      %1367 = vmatprep.subr.bf16.mxu0 %v1290
      %1368 = vmatpush1.bf16.msra.mxu0 %v1289
      %1369 = vmatprep.subr.bf16.mxu0 0
      %1370 = vmatpush2.bf16.msra.mxu0 0
      %1371 = vmatprep.subr.bf16.mxu0 0
      %1372 = vmatpush2.bf16.msra.mxu0 0
      %1373 = vmatprep.subr.bf16.mxu0 0
      %1374 = vmatpush2.bf16.msra.mxu0 0
      %1375 = vmatprep.subr.bf16.mxu0 0
      %1376 = vmatpush2.bf16.msra.mxu0 0
      %1377 = vmatprep.subr.bf16.mxu0 0
      %1378 = vmatpush2.bf16.msra.mxu0 0
      %1379 = vmatprep.subr.bf16.mxu0 0
      %1380 = vmatpush2.bf16.msra.mxu0 0
      %1381 = vmatprep.subr.bf16.mxu0 0
      %1382 = vmatpush2.bf16.msra.mxu0 0
      %1383 = vmatprep.subr.bf16.mxu0 0
      %1384 = vmatpush2.bf16.msra.mxu0 0
      %1385 = vmatprep.mubr.bf16.mxu0 0
      %1386 = vmatmul.mubr.bf16.gmra.mxu0 %v1160
      %v1387 = vpop.f32.mrf.mxu0
      %v1388 = vadd.f32 0.0, %v1387
      %v1389 = vpop.f32.mrf.mxu0
      %v1390 = vadd.f32 0.0, %v1389
      %v1391 = vpop.f32.mrf.mxu0
      %v1392 = vpop.f32.mrf.mxu0
      %1393 = vdwg.mxu0
      %1394 = vmatprep.subr.bf16.mxu0 %v1320
      %1395 = vmatpush1.bf16.msra.mxu0 %v1319
      %1396 = vmatprep.subr.bf16.mxu0 %v1316
      %1397 = vmatpush1.bf16.msra.mxu0 %v1315
      %1398 = vmatprep.subr.bf16.mxu0 %v1312
      %1399 = vmatpush1.bf16.msra.mxu0 %v1311
      %1400 = vmatprep.subr.bf16.mxu0 %v1308
      %1401 = vmatpush1.bf16.msra.mxu0 %v1307
      %1402 = vmatprep.subr.bf16.mxu0 %v1304
      %1403 = vmatpush1.bf16.msra.mxu0 %v1303
      %1404 = vmatprep.subr.bf16.mxu0 %v1300
      %1405 = vmatpush1.bf16.msra.mxu0 %v1299
      %1406 = vmatprep.subr.bf16.mxu0 %v1296
      %1407 = vmatpush1.bf16.msra.mxu0 %v1295
      %1408 = vmatprep.subr.bf16.mxu0 %v1292
      %1409 = vmatpush1.bf16.msra.mxu0 %v1291
      %1410 = vmatprep.subr.bf16.mxu0 0
      %1411 = vmatpush2.bf16.msra.mxu0 0
      %1412 = vmatprep.subr.bf16.mxu0 0
      %1413 = vmatpush2.bf16.msra.mxu0 0
      %1414 = vmatprep.subr.bf16.mxu0 0
      %1415 = vmatpush2.bf16.msra.mxu0 0
      %1416 = vmatprep.subr.bf16.mxu0 0
      %1417 = vmatpush2.bf16.msra.mxu0 0
      %1418 = vmatprep.subr.bf16.mxu0 0
      %1419 = vmatpush2.bf16.msra.mxu0 0
      %1420 = vmatprep.subr.bf16.mxu0 0
      %1421 = vmatpush2.bf16.msra.mxu0 0
      %1422 = vmatprep.subr.bf16.mxu0 0
      %1423 = vmatpush2.bf16.msra.mxu0 0
      %1424 = vmatprep.subr.bf16.mxu0 0
      %1425 = vmatpush2.bf16.msra.mxu0 0
      %1426 = vmatprep.mubr.bf16.mxu0 0
      %1427 = vmatmul.mubr.bf16.gmra.mxu0 %v1160
      %v1428 = vpop.f32.mrf.mxu0
      %v1429 = vadd.f32 0.0, %v1428
      %v1430 = vpop.f32.mrf.mxu0
      %v1431 = vadd.f32 0.0, %v1430
      %v1432 = vpop.f32.mrf.mxu0
      %v1433 = vpop.f32.mrf.mxu0
      %1434 = vdwg.mxu0
      %v1435 = vadd.f32 %v1155, %v1388
      %v1436 = vadd.f32 %v1156, %v1390
      %v1437 = vadd.f32 %v1157, %v1429
      %v1438 = vadd.f32 %v1158, %v1431
      %v1439 = vmul.f32 %v1435, 0.5
      %v1440 = vtanh.pop %v1439
      %v1441 = vmul.f32 %v1440, 0.5
      %v1442 = vadd.f32 %v1441, 0.5
      %v1443 = vmul.f32 %v1436, 0.5
      %v1444 = vtanh.pop %v1443
      %v1445 = vmul.f32 %v1444, 0.5
      %v1446 = vadd.f32 %v1445, 0.5
      %v1447 = vtanh.pop %v1437
      %v1448 = vmul.f32 %v1438, 0.5
      %v1449 = vtanh.pop %v1448
      %v1450 = vmul.f32 %v1449, 0.5
      %v1451 = vadd.f32 %v1450, 0.5
      %v1452 = vld [vmem:[#allocation4] sm:$0xff]
      %v1453 = vmul.f32 %v1446, %v1452
      %v1454 = vmul.f32 %v1442, %v1447
      %v1455 = vadd.f32 %v1453, %v1454
      %v1456 = vtanh.pop %v1455
      %v1457 = vmul.f32 %v1451, %v1456
      %s1458 = sadd.s32 %s91, 2
      %v1459 = vstv %s1458
      %vm1460 = vcmp.lt.s32.totalorder %v1459, %v521
      %v1461 = vsel %vm1460, 1, 0
      %1462 = vset.pattern.permute.xlu0 0
      %1463 = vperm.xlu0 %1462, %v1461
      %v1464 = vpop.permute.xlu0 %1463
      %vm1465 = vcmp.eq.s32.totalorder %v1464, 1
      %v1466 = vsel %vm1465, %v1455, %v1452
      %1467 = vst [vmem:[#allocation4] sm:$0xff] %v1466
      %v1468 = vld [vmem:[#allocation3] sm:$0xff]
      %v1469 = vsel %vm1465, %v1457, %v1468
      %1470 = vst [vmem:[#allocation3] sm:$0xff] %v1469
      %s1471 = scalar_lea.vmem [#allocation2], 96
      %v1472 = vld [vmem:[%s1471] sm:$0xff]
      %v1473 = vld [vmem:[%s1471 + $0x8] sm:$0xff]
      %v1474 = vld [vmem:[%s1471 + $0x10] sm:$0xff]
      %v1475 = vld [vmem:[%s1471 + $0x18] sm:$0xff]
      %v1476 = vld [vmem:[#allocation3] sm:$0xff]
      %v1477 = vpack.c.bf16 %v1476, %v1476
      %v1478 = vld [vmem:[#allocation12] sm:$0xff]
      %v1479 = vld [vmem:[#allocation12 + $0x8] sm:$0xff]
      %v1480 = vld [vmem:[#allocation12 + $0x10] sm:$0xff]
      %v1481 = vld [vmem:[#allocation12 + $0x18] sm:$0xff]
      %v1482 = vld [vmem:[#allocation12 + $0x20] sm:$0xff]
      %v1483 = vld [vmem:[#allocation12 + $0x28] sm:$0xff]
      %v1484 = vld [vmem:[#allocation12 + $0x30] sm:$0xff]
      %v1485 = vld [vmem:[#allocation12 + $0x38] sm:$0xff]
      %v1486 = vld [vmem:[#allocation12 + $0x40] sm:$0xff]
      %v1487 = vld [vmem:[#allocation12 + $0x48] sm:$0xff]
      %v1488 = vld [vmem:[#allocation12 + $0x50] sm:$0xff]
      %v1489 = vld [vmem:[#allocation12 + $0x58] sm:$0xff]
      %v1490 = vld [vmem:[#allocation12 + $0x60] sm:$0xff]
      %v1491 = vld [vmem:[#allocation12 + $0x68] sm:$0xff]
      %v1492 = vld [vmem:[#allocation12 + $0x70] sm:$0xff]
      %v1493 = vld [vmem:[#allocation12 + $0x78] sm:$0xff]
      %v1494 = vld [vmem:[#allocation12 + $0x80] sm:$0xff]
      %v1495 = vld [vmem:[#allocation12 + $0x88] sm:$0xff]
      %v1496 = vld [vmem:[#allocation12 + $0x90] sm:$0xff]
      %v1497 = vld [vmem:[#allocation12 + $0x98] sm:$0xff]
      %v1498 = vld [vmem:[#allocation12 + $0xa0] sm:$0xff]
      %v1499 = vld [vmem:[#allocation12 + $0xa8] sm:$0xff]
      %v1500 = vld [vmem:[#allocation12 + $0xb0] sm:$0xff]
      %v1501 = vld [vmem:[#allocation12 + $0xb8] sm:$0xff]
      %v1502 = vld [vmem:[#allocation12 + $0xc0] sm:$0xff]
      %v1503 = vld [vmem:[#allocation12 + $0xc8] sm:$0xff]
      %v1504 = vld [vmem:[#allocation12 + $0xd0] sm:$0xff]
      %v1505 = vld [vmem:[#allocation12 + $0xd8] sm:$0xff]
      %v1506 = vld [vmem:[#allocation12 + $0xe0] sm:$0xff]
      %v1507 = vld [vmem:[#allocation12 + $0xe8] sm:$0xff]
      %v1508 = vld [vmem:[#allocation12 + $0xf0] sm:$0xff]
      %v1509 = vld [vmem:[#allocation12 + $0xf8] sm:$0xff]
      %v1542 = vunpack.c.l.b16 %v1478
      %v1543 = vunpack.c.h.b16 %v1478
      %v1544 = vunpack.c.l.b16 %v1479
      %v1545 = vunpack.c.h.b16 %v1479
      %v1546 = vunpack.c.l.b16 %v1480
      %v1547 = vunpack.c.h.b16 %v1480
      %v1548 = vunpack.c.l.b16 %v1481
      %v1549 = vunpack.c.h.b16 %v1481
      %v1550 = vunpack.c.l.b16 %v1482
      %v1551 = vunpack.c.h.b16 %v1482
      %v1552 = vunpack.c.l.b16 %v1483
      %v1553 = vunpack.c.h.b16 %v1483
      %v1554 = vunpack.c.l.b16 %v1484
      %v1555 = vunpack.c.h.b16 %v1484
      %v1556 = vunpack.c.l.b16 %v1485
      %v1557 = vunpack.c.h.b16 %v1485
      %v1558 = vunpack.c.l.b16 %v1486
      %v1559 = vunpack.c.h.b16 %v1486
      %v1560 = vunpack.c.l.b16 %v1487
      %v1561 = vunpack.c.h.b16 %v1487
      %v1562 = vunpack.c.l.b16 %v1488
      %v1563 = vunpack.c.h.b16 %v1488
      %v1564 = vunpack.c.l.b16 %v1489
      %v1565 = vunpack.c.h.b16 %v1489
      %v1566 = vunpack.c.l.b16 %v1490
      %v1567 = vunpack.c.h.b16 %v1490
      %v1568 = vunpack.c.l.b16 %v1491
      %v1569 = vunpack.c.h.b16 %v1491
      %v1570 = vunpack.c.l.b16 %v1492
      %v1571 = vunpack.c.h.b16 %v1492
      %v1572 = vunpack.c.l.b16 %v1493
      %v1573 = vunpack.c.h.b16 %v1493
      %v1574 = vunpack.c.l.b16 %v1494
      %v1575 = vunpack.c.h.b16 %v1494
      %v1576 = vunpack.c.l.b16 %v1495
      %v1577 = vunpack.c.h.b16 %v1495
      %v1578 = vunpack.c.l.b16 %v1496
      %v1579 = vunpack.c.h.b16 %v1496
      %v1580 = vunpack.c.l.b16 %v1497
      %v1581 = vunpack.c.h.b16 %v1497
      %v1582 = vunpack.c.l.b16 %v1498
      %v1583 = vunpack.c.h.b16 %v1498
      %v1584 = vunpack.c.l.b16 %v1499
      %v1585 = vunpack.c.h.b16 %v1499
      %v1586 = vunpack.c.l.b16 %v1500
      %v1587 = vunpack.c.h.b16 %v1500
      %v1588 = vunpack.c.l.b16 %v1501
      %v1589 = vunpack.c.h.b16 %v1501
      %v1590 = vunpack.c.l.b16 %v1502
      %v1591 = vunpack.c.h.b16 %v1502
      %v1592 = vunpack.c.l.b16 %v1503
      %v1593 = vunpack.c.h.b16 %v1503
      %v1594 = vunpack.c.l.b16 %v1504
      %v1595 = vunpack.c.h.b16 %v1504
      %v1596 = vunpack.c.l.b16 %v1505
      %v1597 = vunpack.c.h.b16 %v1505
      %v1598 = vunpack.c.l.b16 %v1506
      %v1599 = vunpack.c.h.b16 %v1506
      %v1600 = vunpack.c.l.b16 %v1507
      %v1601 = vunpack.c.h.b16 %v1507
      %v1602 = vunpack.c.l.b16 %v1508
      %v1603 = vunpack.c.h.b16 %v1508
      %v1604 = vunpack.c.l.b16 %v1509
      %v1605 = vunpack.c.h.b16 %v1509
      %v1606 = vpack.c.b16 %v1546, %v1542
      %v1607 = vpack.c.b16 %v1547, %v1543
      %v1608 = vpack.c.b16 %v1548, %v1544
      %v1609 = vpack.c.b16 %v1549, %v1545
      %v1610 = vpack.c.b16 %v1554, %v1550
      %v1611 = vpack.c.b16 %v1555, %v1551
      %v1612 = vpack.c.b16 %v1556, %v1552
      %v1613 = vpack.c.b16 %v1557, %v1553
      %v1614 = vpack.c.b16 %v1562, %v1558
      %v1615 = vpack.c.b16 %v1563, %v1559
      %v1616 = vpack.c.b16 %v1564, %v1560
      %v1617 = vpack.c.b16 %v1565, %v1561
      %v1618 = vpack.c.b16 %v1570, %v1566
      %v1619 = vpack.c.b16 %v1571, %v1567
      %v1620 = vpack.c.b16 %v1572, %v1568
      %v1621 = vpack.c.b16 %v1573, %v1569
      %v1622 = vpack.c.b16 %v1578, %v1574
      %v1623 = vpack.c.b16 %v1579, %v1575
      %v1624 = vpack.c.b16 %v1580, %v1576
      %v1625 = vpack.c.b16 %v1581, %v1577
      %v1626 = vpack.c.b16 %v1586, %v1582
      %v1627 = vpack.c.b16 %v1587, %v1583
      %v1628 = vpack.c.b16 %v1588, %v1584
      %v1629 = vpack.c.b16 %v1589, %v1585
      %v1630 = vpack.c.b16 %v1594, %v1590
      %v1631 = vpack.c.b16 %v1595, %v1591
      %v1632 = vpack.c.b16 %v1596, %v1592
      %v1633 = vpack.c.b16 %v1597, %v1593
      %v1634 = vpack.c.b16 %v1602, %v1598
      %v1635 = vpack.c.b16 %v1603, %v1599
      %v1636 = vpack.c.b16 %v1604, %v1600
      %v1637 = vpack.c.b16 %v1605, %v1601
      %1670 = vmatprep.subr.bf16.mxu0 %v1635
      %1671 = vmatpush1.bf16.msra.mxu0 %v1634
      %1672 = vmatprep.subr.bf16.mxu0 %v1631
      %1673 = vmatpush1.bf16.msra.mxu0 %v1630
      %1674 = vmatprep.subr.bf16.mxu0 %v1627
      %1675 = vmatpush1.bf16.msra.mxu0 %v1626
      %1676 = vmatprep.subr.bf16.mxu0 %v1623
      %1677 = vmatpush1.bf16.msra.mxu0 %v1622
      %1678 = vmatprep.subr.bf16.mxu0 %v1619
      %1679 = vmatpush1.bf16.msra.mxu0 %v1618
      %1680 = vmatprep.subr.bf16.mxu0 %v1615
      %1681 = vmatpush1.bf16.msra.mxu0 %v1614
      %1682 = vmatprep.subr.bf16.mxu0 %v1611
      %1683 = vmatpush1.bf16.msra.mxu0 %v1610
      %1684 = vmatprep.subr.bf16.mxu0 %v1607
      %1685 = vmatpush1.bf16.msra.mxu0 %v1606
      %1686 = vmatprep.subr.bf16.mxu0 0
      %1687 = vmatpush2.bf16.msra.mxu0 0
      %1688 = vmatprep.subr.bf16.mxu0 0
      %1689 = vmatpush2.bf16.msra.mxu0 0
      %1690 = vmatprep.subr.bf16.mxu0 0
      %1691 = vmatpush2.bf16.msra.mxu0 0
      %1692 = vmatprep.subr.bf16.mxu0 0
      %1693 = vmatpush2.bf16.msra.mxu0 0
      %1694 = vmatprep.subr.bf16.mxu0 0
      %1695 = vmatpush2.bf16.msra.mxu0 0
      %1696 = vmatprep.subr.bf16.mxu0 0
      %1697 = vmatpush2.bf16.msra.mxu0 0
      %1698 = vmatprep.subr.bf16.mxu0 0
      %1699 = vmatpush2.bf16.msra.mxu0 0
      %1700 = vmatprep.subr.bf16.mxu0 0
      %1701 = vmatpush2.bf16.msra.mxu0 0
      %1702 = vmatprep.mubr.bf16.mxu0 0
      %1703 = vmatmul.mubr.bf16.gmra.mxu0 %v1477
      %v1704 = vpop.f32.mrf.mxu0
      %v1705 = vadd.f32 0.0, %v1704
      %v1706 = vpop.f32.mrf.mxu0
      %v1707 = vadd.f32 0.0, %v1706
      %v1708 = vpop.f32.mrf.mxu0
      %v1709 = vpop.f32.mrf.mxu0
      %1710 = vdwg.mxu0
      %1711 = vmatprep.subr.bf16.mxu0 %v1637
      %1712 = vmatpush1.bf16.msra.mxu0 %v1636
      %1713 = vmatprep.subr.bf16.mxu0 %v1633
      %1714 = vmatpush1.bf16.msra.mxu0 %v1632
      %1715 = vmatprep.subr.bf16.mxu0 %v1629
      %1716 = vmatpush1.bf16.msra.mxu0 %v1628
      %1717 = vmatprep.subr.bf16.mxu0 %v1625
      %1718 = vmatpush1.bf16.msra.mxu0 %v1624
      %1719 = vmatprep.subr.bf16.mxu0 %v1621
      %1720 = vmatpush1.bf16.msra.mxu0 %v1620
      %1721 = vmatprep.subr.bf16.mxu0 %v1617
      %1722 = vmatpush1.bf16.msra.mxu0 %v1616
      %1723 = vmatprep.subr.bf16.mxu0 %v1613
      %1724 = vmatpush1.bf16.msra.mxu0 %v1612
      %1725 = vmatprep.subr.bf16.mxu0 %v1609
      %1726 = vmatpush1.bf16.msra.mxu0 %v1608
      %1727 = vmatprep.subr.bf16.mxu0 0
      %1728 = vmatpush2.bf16.msra.mxu0 0
      %1729 = vmatprep.subr.bf16.mxu0 0
      %1730 = vmatpush2.bf16.msra.mxu0 0
      %1731 = vmatprep.subr.bf16.mxu0 0
      %1732 = vmatpush2.bf16.msra.mxu0 0
      %1733 = vmatprep.subr.bf16.mxu0 0
      %1734 = vmatpush2.bf16.msra.mxu0 0
      %1735 = vmatprep.subr.bf16.mxu0 0
      %1736 = vmatpush2.bf16.msra.mxu0 0
      %1737 = vmatprep.subr.bf16.mxu0 0
      %1738 = vmatpush2.bf16.msra.mxu0 0
      %1739 = vmatprep.subr.bf16.mxu0 0
      %1740 = vmatpush2.bf16.msra.mxu0 0
      %1741 = vmatprep.subr.bf16.mxu0 0
      %1742 = vmatpush2.bf16.msra.mxu0 0
      %1743 = vmatprep.mubr.bf16.mxu0 0
      %1744 = vmatmul.mubr.bf16.gmra.mxu0 %v1477
      %v1745 = vpop.f32.mrf.mxu0
      %v1746 = vadd.f32 0.0, %v1745
      %v1747 = vpop.f32.mrf.mxu0
      %v1748 = vadd.f32 0.0, %v1747
      %v1749 = vpop.f32.mrf.mxu0
      %v1750 = vpop.f32.mrf.mxu0
      %1751 = vdwg.mxu0
      %v1752 = vadd.f32 %v1472, %v1705
      %v1753 = vadd.f32 %v1473, %v1707
      %v1754 = vadd.f32 %v1474, %v1746
      %v1755 = vadd.f32 %v1475, %v1748
      %v1756 = vmul.f32 %v1752, 0.5
      %v1757 = vtanh.pop %v1756
      %v1758 = vmul.f32 %v1757, 0.5
      %v1759 = vadd.f32 %v1758, 0.5
      %v1760 = vmul.f32 %v1753, 0.5
      %v1761 = vtanh.pop %v1760
      %v1762 = vmul.f32 %v1761, 0.5
      %v1763 = vadd.f32 %v1762, 0.5
      %v1764 = vtanh.pop %v1754
      %v1765 = vmul.f32 %v1755, 0.5
      %v1766 = vtanh.pop %v1765
      %v1767 = vmul.f32 %v1766, 0.5
      %v1768 = vadd.f32 %v1767, 0.5
      %v1769 = vld [vmem:[#allocation4] sm:$0xff]
      %v1770 = vmul.f32 %v1763, %v1769
      %v1771 = vmul.f32 %v1759, %v1764
      %v1772 = vadd.f32 %v1770, %v1771
      %v1773 = vtanh.pop %v1772
      %v1774 = vmul.f32 %v1768, %v1773
      %s1775 = sadd.s32 %s91, 3
      %v1776 = vstv %s1775
      %vm1777 = vcmp.lt.s32.totalorder %v1776, %v521
      %v1778 = vsel %vm1777, 1, 0
      %1779 = vset.pattern.permute.xlu0 0
      %1780 = vperm.xlu0 %1779, %v1778
      %v1781 = vpop.permute.xlu0 %1780
      %vm1782 = vcmp.eq.s32.totalorder %v1781, 1
      %v1783 = vsel %vm1782, %v1772, %v1769
      %1784 = vst [vmem:[#allocation4] sm:$0xff] %v1783
      %v1785 = vld [vmem:[#allocation3] sm:$0xff]
      %v1786 = vsel %vm1782, %v1774, %v1785
      %1787 = vst [vmem:[#allocation3] sm:$0xff] %v1786
      %s1788 = scalar_lea.vmem [#allocation2], 128
      %v1789 = vld [vmem:[%s1788] sm:$0xff]
      %v1790 = vld [vmem:[%s1788 + $0x8] sm:$0xff]
      %v1791 = vld [vmem:[%s1788 + $0x10] sm:$0xff]
      %v1792 = vld [vmem:[%s1788 + $0x18] sm:$0xff]
      %v1793 = vld [vmem:[#allocation3] sm:$0xff]
      %v1794 = vpack.c.bf16 %v1793, %v1793
      %v1795 = vld [vmem:[#allocation12] sm:$0xff]
      %v1796 = vld [vmem:[#allocation12 + $0x8] sm:$0xff]
      %v1797 = vld [vmem:[#allocation12 + $0x10] sm:$0xff]
      %v1798 = vld [vmem:[#allocation12 + $0x18] sm:$0xff]
      %v1799 = vld [vmem:[#allocation12 + $0x20] sm:$0xff]
      %v1800 = vld [vmem:[#allocation12 + $0x28] sm:$0xff]
      %v1801 = vld [vmem:[#allocation12 + $0x30] sm:$0xff]
      %v1802 = vld [vmem:[#allocation12 + $0x38] sm:$0xff]
      %v1803 = vld [vmem:[#allocation12 + $0x40] sm:$0xff]
      %v1804 = vld [vmem:[#allocation12 + $0x48] sm:$0xff]
      %v1805 = vld [vmem:[#allocation12 + $0x50] sm:$0xff]
      %v1806 = vld [vmem:[#allocation12 + $0x58] sm:$0xff]
      %v1807 = vld [vmem:[#allocation12 + $0x60] sm:$0xff]
      %v1808 = vld [vmem:[#allocation12 + $0x68] sm:$0xff]
      %v1809 = vld [vmem:[#allocation12 + $0x70] sm:$0xff]
      %v1810 = vld [vmem:[#allocation12 + $0x78] sm:$0xff]
      %v1811 = vld [vmem:[#allocation12 + $0x80] sm:$0xff]
      %v1812 = vld [vmem:[#allocation12 + $0x88] sm:$0xff]
      %v1813 = vld [vmem:[#allocation12 + $0x90] sm:$0xff]
      %v1814 = vld [vmem:[#allocation12 + $0x98] sm:$0xff]
      %v1815 = vld [vmem:[#allocation12 + $0xa0] sm:$0xff]
      %v1816 = vld [vmem:[#allocation12 + $0xa8] sm:$0xff]
      %v1817 = vld [vmem:[#allocation12 + $0xb0] sm:$0xff]
      %v1818 = vld [vmem:[#allocation12 + $0xb8] sm:$0xff]
      %v1819 = vld [vmem:[#allocation12 + $0xc0] sm:$0xff]
      %v1820 = vld [vmem:[#allocation12 + $0xc8] sm:$0xff]
      %v1821 = vld [vmem:[#allocation12 + $0xd0] sm:$0xff]
      %v1822 = vld [vmem:[#allocation12 + $0xd8] sm:$0xff]
      %v1823 = vld [vmem:[#allocation12 + $0xe0] sm:$0xff]
      %v1824 = vld [vmem:[#allocation12 + $0xe8] sm:$0xff]
      %v1825 = vld [vmem:[#allocation12 + $0xf0] sm:$0xff]
      %v1826 = vld [vmem:[#allocation12 + $0xf8] sm:$0xff]
      %v1859 = vunpack.c.l.b16 %v1795
      %v1860 = vunpack.c.h.b16 %v1795
      %v1861 = vunpack.c.l.b16 %v1796
      %v1862 = vunpack.c.h.b16 %v1796
      %v1863 = vunpack.c.l.b16 %v1797
      %v1864 = vunpack.c.h.b16 %v1797
      %v1865 = vunpack.c.l.b16 %v1798
      %v1866 = vunpack.c.h.b16 %v1798
      %v1867 = vunpack.c.l.b16 %v1799
      %v1868 = vunpack.c.h.b16 %v1799
      %v1869 = vunpack.c.l.b16 %v1800
      %v1870 = vunpack.c.h.b16 %v1800
      %v1871 = vunpack.c.l.b16 %v1801
      %v1872 = vunpack.c.h.b16 %v1801
      %v1873 = vunpack.c.l.b16 %v1802
      %v1874 = vunpack.c.h.b16 %v1802
      %v1875 = vunpack.c.l.b16 %v1803
      %v1876 = vunpack.c.h.b16 %v1803
      %v1877 = vunpack.c.l.b16 %v1804
      %v1878 = vunpack.c.h.b16 %v1804
      %v1879 = vunpack.c.l.b16 %v1805
      %v1880 = vunpack.c.h.b16 %v1805
      %v1881 = vunpack.c.l.b16 %v1806
      %v1882 = vunpack.c.h.b16 %v1806
      %v1883 = vunpack.c.l.b16 %v1807
      %v1884 = vunpack.c.h.b16 %v1807
      %v1885 = vunpack.c.l.b16 %v1808
      %v1886 = vunpack.c.h.b16 %v1808
      %v1887 = vunpack.c.l.b16 %v1809
      %v1888 = vunpack.c.h.b16 %v1809
      %v1889 = vunpack.c.l.b16 %v1810
      %v1890 = vunpack.c.h.b16 %v1810
      %v1891 = vunpack.c.l.b16 %v1811
      %v1892 = vunpack.c.h.b16 %v1811
      %v1893 = vunpack.c.l.b16 %v1812
      %v1894 = vunpack.c.h.b16 %v1812
      %v1895 = vunpack.c.l.b16 %v1813
      %v1896 = vunpack.c.h.b16 %v1813
      %v1897 = vunpack.c.l.b16 %v1814
      %v1898 = vunpack.c.h.b16 %v1814
      %v1899 = vunpack.c.l.b16 %v1815
      %v1900 = vunpack.c.h.b16 %v1815
      %v1901 = vunpack.c.l.b16 %v1816
      %v1902 = vunpack.c.h.b16 %v1816
      %v1903 = vunpack.c.l.b16 %v1817
      %v1904 = vunpack.c.h.b16 %v1817
      %v1905 = vunpack.c.l.b16 %v1818
      %v1906 = vunpack.c.h.b16 %v1818
      %v1907 = vunpack.c.l.b16 %v1819
      %v1908 = vunpack.c.h.b16 %v1819
      %v1909 = vunpack.c.l.b16 %v1820
      %v1910 = vunpack.c.h.b16 %v1820
      %v1911 = vunpack.c.l.b16 %v1821
      %v1912 = vunpack.c.h.b16 %v1821
      %v1913 = vunpack.c.l.b16 %v1822
      %v1914 = vunpack.c.h.b16 %v1822
      %v1915 = vunpack.c.l.b16 %v1823
      %v1916 = vunpack.c.h.b16 %v1823
      %v1917 = vunpack.c.l.b16 %v1824
      %v1918 = vunpack.c.h.b16 %v1824
      %v1919 = vunpack.c.l.b16 %v1825
      %v1920 = vunpack.c.h.b16 %v1825
      %v1921 = vunpack.c.l.b16 %v1826
      %v1922 = vunpack.c.h.b16 %v1826
      %v1923 = vpack.c.b16 %v1863, %v1859
      %v1924 = vpack.c.b16 %v1864, %v1860
      %v1925 = vpack.c.b16 %v1865, %v1861
      %v1926 = vpack.c.b16 %v1866, %v1862
      %v1927 = vpack.c.b16 %v1871, %v1867
      %v1928 = vpack.c.b16 %v1872, %v1868
      %v1929 = vpack.c.b16 %v1873, %v1869
      %v1930 = vpack.c.b16 %v1874, %v1870
      %v1931 = vpack.c.b16 %v1879, %v1875
      %v1932 = vpack.c.b16 %v1880, %v1876
      %v1933 = vpack.c.b16 %v1881, %v1877
      %v1934 = vpack.c.b16 %v1882, %v1878
      %v1935 = vpack.c.b16 %v1887, %v1883
      %v1936 = vpack.c.b16 %v1888, %v1884
      %v1937 = vpack.c.b16 %v1889, %v1885
      %v1938 = vpack.c.b16 %v1890, %v1886
      %v1939 = vpack.c.b16 %v1895, %v1891
      %v1940 = vpack.c.b16 %v1896, %v1892
      %v1941 = vpack.c.b16 %v1897, %v1893
      %v1942 = vpack.c.b16 %v1898, %v1894
      %v1943 = vpack.c.b16 %v1903, %v1899
      %v1944 = vpack.c.b16 %v1904, %v1900
      %v1945 = vpack.c.b16 %v1905, %v1901
      %v1946 = vpack.c.b16 %v1906, %v1902
      %v1947 = vpack.c.b16 %v1911, %v1907
      %v1948 = vpack.c.b16 %v1912, %v1908
      %v1949 = vpack.c.b16 %v1913, %v1909
      %v1950 = vpack.c.b16 %v1914, %v1910
      %v1951 = vpack.c.b16 %v1919, %v1915
      %v1952 = vpack.c.b16 %v1920, %v1916
      %v1953 = vpack.c.b16 %v1921, %v1917
      %v1954 = vpack.c.b16 %v1922, %v1918
      %1987 = vmatprep.subr.bf16.mxu0 %v1952
      %1988 = vmatpush1.bf16.msra.mxu0 %v1951
      %1989 = vmatprep.subr.bf16.mxu0 %v1948
      %1990 = vmatpush1.bf16.msra.mxu0 %v1947
      %1991 = vmatprep.subr.bf16.mxu0 %v1944
      %1992 = vmatpush1.bf16.msra.mxu0 %v1943
      %1993 = vmatprep.subr.bf16.mxu0 %v1940
      %1994 = vmatpush1.bf16.msra.mxu0 %v1939
      %1995 = vmatprep.subr.bf16.mxu0 %v1936
      %1996 = vmatpush1.bf16.msra.mxu0 %v1935
      %1997 = vmatprep.subr.bf16.mxu0 %v1932
      %1998 = vmatpush1.bf16.msra.mxu0 %v1931
      %1999 = vmatprep.subr.bf16.mxu0 %v1928
      %2000 = vmatpush1.bf16.msra.mxu0 %v1927
      %2001 = vmatprep.subr.bf16.mxu0 %v1924
      %2002 = vmatpush1.bf16.msra.mxu0 %v1923
      %2003 = vmatprep.subr.bf16.mxu0 0
      %2004 = vmatpush2.bf16.msra.mxu0 0
      %2005 = vmatprep.subr.bf16.mxu0 0
      %2006 = vmatpush2.bf16.msra.mxu0 0
      %2007 = vmatprep.subr.bf16.mxu0 0
      %2008 = vmatpush2.bf16.msra.mxu0 0
      %2009 = vmatprep.subr.bf16.mxu0 0
      %2010 = vmatpush2.bf16.msra.mxu0 0
      %2011 = vmatprep.subr.bf16.mxu0 0
      %2012 = vmatpush2.bf16.msra.mxu0 0
      %2013 = vmatprep.subr.bf16.mxu0 0
      %2014 = vmatpush2.bf16.msra.mxu0 0
      %2015 = vmatprep.subr.bf16.mxu0 0
      %2016 = vmatpush2.bf16.msra.mxu0 0
      %2017 = vmatprep.subr.bf16.mxu0 0
      %2018 = vmatpush2.bf16.msra.mxu0 0
      %2019 = vmatprep.mubr.bf16.mxu0 0
      %2020 = vmatmul.mubr.bf16.gmra.mxu0 %v1794
      %v2021 = vpop.f32.mrf.mxu0
      %v2022 = vadd.f32 0.0, %v2021
      %v2023 = vpop.f32.mrf.mxu0
      %v2024 = vadd.f32 0.0, %v2023
      %v2025 = vpop.f32.mrf.mxu0
      %v2026 = vpop.f32.mrf.mxu0
      %2027 = vdwg.mxu0
      %2028 = vmatprep.subr.bf16.mxu0 %v1954
      %2029 = vmatpush1.bf16.msra.mxu0 %v1953
      %2030 = vmatprep.subr.bf16.mxu0 %v1950
      %2031 = vmatpush1.bf16.msra.mxu0 %v1949
      %2032 = vmatprep.subr.bf16.mxu0 %v1946
      %2033 = vmatpush1.bf16.msra.mxu0 %v1945
      %2034 = vmatprep.subr.bf16.mxu0 %v1942
      %2035 = vmatpush1.bf16.msra.mxu0 %v1941
      %2036 = vmatprep.subr.bf16.mxu0 %v1938
      %2037 = vmatpush1.bf16.msra.mxu0 %v1937
      %2038 = vmatprep.subr.bf16.mxu0 %v1934
      %2039 = vmatpush1.bf16.msra.mxu0 %v1933
      %2040 = vmatprep.subr.bf16.mxu0 %v1930
      %2041 = vmatpush1.bf16.msra.mxu0 %v1929
      %2042 = vmatprep.subr.bf16.mxu0 %v1926
      %2043 = vmatpush1.bf16.msra.mxu0 %v1925
      %2044 = vmatprep.subr.bf16.mxu0 0
      %2045 = vmatpush2.bf16.msra.mxu0 0
      %2046 = vmatprep.subr.bf16.mxu0 0
      %2047 = vmatpush2.bf16.msra.mxu0 0
      %2048 = vmatprep.subr.bf16.mxu0 0
      %2049 = vmatpush2.bf16.msra.mxu0 0
      %2050 = vmatprep.subr.bf16.mxu0 0
      %2051 = vmatpush2.bf16.msra.mxu0 0
      %2052 = vmatprep.subr.bf16.mxu0 0
      %2053 = vmatpush2.bf16.msra.mxu0 0
      %2054 = vmatprep.subr.bf16.mxu0 0
      %2055 = vmatpush2.bf16.msra.mxu0 0
      %2056 = vmatprep.subr.bf16.mxu0 0
      %2057 = vmatpush2.bf16.msra.mxu0 0
      %2058 = vmatprep.subr.bf16.mxu0 0
      %2059 = vmatpush2.bf16.msra.mxu0 0
      %2060 = vmatprep.mubr.bf16.mxu0 0
      %2061 = vmatmul.mubr.bf16.gmra.mxu0 %v1794
      %v2062 = vpop.f32.mrf.mxu0
      %v2063 = vadd.f32 0.0, %v2062
      %v2064 = vpop.f32.mrf.mxu0
      %v2065 = vadd.f32 0.0, %v2064
      %v2066 = vpop.f32.mrf.mxu0
      %v2067 = vpop.f32.mrf.mxu0
      %2068 = vdwg.mxu0
      %v2069 = vadd.f32 %v1789, %v2022
      %v2070 = vadd.f32 %v1790, %v2024
      %v2071 = vadd.f32 %v1791, %v2063
      %v2072 = vadd.f32 %v1792, %v2065
      %v2073 = vmul.f32 %v2069, 0.5
      %v2074 = vtanh.pop %v2073
      %v2075 = vmul.f32 %v2074, 0.5
      %v2076 = vadd.f32 %v2075, 0.5
      %v2077 = vmul.f32 %v2070, 0.5
      %v2078 = vtanh.pop %v2077
      %v2079 = vmul.f32 %v2078, 0.5
      %v2080 = vadd.f32 %v2079, 0.5
      %v2081 = vtanh.pop %v2071
      %v2082 = vmul.f32 %v2072, 0.5
      %v2083 = vtanh.pop %v2082
      %v2084 = vmul.f32 %v2083, 0.5
      %v2085 = vadd.f32 %v2084, 0.5
      %v2086 = vld [vmem:[#allocation4] sm:$0xff]
      %v2087 = vmul.f32 %v2080, %v2086
      %v2088 = vmul.f32 %v2076, %v2081
      %v2089 = vadd.f32 %v2087, %v2088
      %v2090 = vtanh.pop %v2089
      %v2091 = vmul.f32 %v2085, %v2090
      %s2092 = sadd.s32 %s91, 4
      %v2093 = vstv %s2092
      %vm2094 = vcmp.lt.s32.totalorder %v2093, %v521
      %v2095 = vsel %vm2094, 1, 0
      %2096 = vset.pattern.permute.xlu0 0
      %2097 = vperm.xlu0 %2096, %v2095
      %v2098 = vpop.permute.xlu0 %2097
      %vm2099 = vcmp.eq.s32.totalorder %v2098, 1
      %v2100 = vsel %vm2099, %v2089, %v2086
      %2101 = vst [vmem:[#allocation4] sm:$0xff] %v2100
      %v2102 = vld [vmem:[#allocation3] sm:$0xff]
      %v2103 = vsel %vm2099, %v2091, %v2102
      %2104 = vst [vmem:[#allocation3] sm:$0xff] %v2103
      %s2105 = scalar_lea.vmem [#allocation2], 160
      %v2106 = vld [vmem:[%s2105] sm:$0xff]
      %v2107 = vld [vmem:[%s2105 + $0x8] sm:$0xff]
      %v2108 = vld [vmem:[%s2105 + $0x10] sm:$0xff]
      %v2109 = vld [vmem:[%s2105 + $0x18] sm:$0xff]
      %v2110 = vld [vmem:[#allocation3] sm:$0xff]
      %v2111 = vpack.c.bf16 %v2110, %v2110
      %v2112 = vld [vmem:[#allocation12] sm:$0xff]
      %v2113 = vld [vmem:[#allocation12 + $0x8] sm:$0xff]
      %v2114 = vld [vmem:[#allocation12 + $0x10] sm:$0xff]
      %v2115 = vld [vmem:[#allocation12 + $0x18] sm:$0xff]
      %v2116 = vld [vmem:[#allocation12 + $0x20] sm:$0xff]
      %v2117 = vld [vmem:[#allocation12 + $0x28] sm:$0xff]
      %v2118 = vld [vmem:[#allocation12 + $0x30] sm:$0xff]
      %v2119 = vld [vmem:[#allocation12 + $0x38] sm:$0xff]
      %v2120 = vld [vmem:[#allocation12 + $0x40] sm:$0xff]
      %v2121 = vld [vmem:[#allocation12 + $0x48] sm:$0xff]
      %v2122 = vld [vmem:[#allocation12 + $0x50] sm:$0xff]
      %v2123 = vld [vmem:[#allocation12 + $0x58] sm:$0xff]
      %v2124 = vld [vmem:[#allocation12 + $0x60] sm:$0xff]
      %v2125 = vld [vmem:[#allocation12 + $0x68] sm:$0xff]
      %v2126 = vld [vmem:[#allocation12 + $0x70] sm:$0xff]
      %v2127 = vld [vmem:[#allocation12 + $0x78] sm:$0xff]
      %v2128 = vld [vmem:[#allocation12 + $0x80] sm:$0xff]
      %v2129 = vld [vmem:[#allocation12 + $0x88] sm:$0xff]
      %v2130 = vld [vmem:[#allocation12 + $0x90] sm:$0xff]
      %v2131 = vld [vmem:[#allocation12 + $0x98] sm:$0xff]
      %v2132 = vld [vmem:[#allocation12 + $0xa0] sm:$0xff]
      %v2133 = vld [vmem:[#allocation12 + $0xa8] sm:$0xff]
      %v2134 = vld [vmem:[#allocation12 + $0xb0] sm:$0xff]
      %v2135 = vld [vmem:[#allocation12 + $0xb8] sm:$0xff]
      %v2136 = vld [vmem:[#allocation12 + $0xc0] sm:$0xff]
      %v2137 = vld [vmem:[#allocation12 + $0xc8] sm:$0xff]
      %v2138 = vld [vmem:[#allocation12 + $0xd0] sm:$0xff]
      %v2139 = vld [vmem:[#allocation12 + $0xd8] sm:$0xff]
      %v2140 = vld [vmem:[#allocation12 + $0xe0] sm:$0xff]
      %v2141 = vld [vmem:[#allocation12 + $0xe8] sm:$0xff]
      %v2142 = vld [vmem:[#allocation12 + $0xf0] sm:$0xff]
      %v2143 = vld [vmem:[#allocation12 + $0xf8] sm:$0xff]
      %v2176 = vunpack.c.l.b16 %v2112
      %v2177 = vunpack.c.h.b16 %v2112
      %v2178 = vunpack.c.l.b16 %v2113
      %v2179 = vunpack.c.h.b16 %v2113
      %v2180 = vunpack.c.l.b16 %v2114
      %v2181 = vunpack.c.h.b16 %v2114
      %v2182 = vunpack.c.l.b16 %v2115
      %v2183 = vunpack.c.h.b16 %v2115
      %v2184 = vunpack.c.l.b16 %v2116
      %v2185 = vunpack.c.h.b16 %v2116
      %v2186 = vunpack.c.l.b16 %v2117
      %v2187 = vunpack.c.h.b16 %v2117
      %v2188 = vunpack.c.l.b16 %v2118
      %v2189 = vunpack.c.h.b16 %v2118
      %v2190 = vunpack.c.l.b16 %v2119
      %v2191 = vunpack.c.h.b16 %v2119
      %v2192 = vunpack.c.l.b16 %v2120
      %v2193 = vunpack.c.h.b16 %v2120
      %v2194 = vunpack.c.l.b16 %v2121
      %v2195 = vunpack.c.h.b16 %v2121
      %v2196 = vunpack.c.l.b16 %v2122
      %v2197 = vunpack.c.h.b16 %v2122
      %v2198 = vunpack.c.l.b16 %v2123
      %v2199 = vunpack.c.h.b16 %v2123
      %v2200 = vunpack.c.l.b16 %v2124
      %v2201 = vunpack.c.h.b16 %v2124
      %v2202 = vunpack.c.l.b16 %v2125
      %v2203 = vunpack.c.h.b16 %v2125
      %v2204 = vunpack.c.l.b16 %v2126
      %v2205 = vunpack.c.h.b16 %v2126
      %v2206 = vunpack.c.l.b16 %v2127
      %v2207 = vunpack.c.h.b16 %v2127
      %v2208 = vunpack.c.l.b16 %v2128
      %v2209 = vunpack.c.h.b16 %v2128
      %v2210 = vunpack.c.l.b16 %v2129
      %v2211 = vunpack.c.h.b16 %v2129
      %v2212 = vunpack.c.l.b16 %v2130
      %v2213 = vunpack.c.h.b16 %v2130
      %v2214 = vunpack.c.l.b16 %v2131
      %v2215 = vunpack.c.h.b16 %v2131
      %v2216 = vunpack.c.l.b16 %v2132
      %v2217 = vunpack.c.h.b16 %v2132
      %v2218 = vunpack.c.l.b16 %v2133
      %v2219 = vunpack.c.h.b16 %v2133
      %v2220 = vunpack.c.l.b16 %v2134
      %v2221 = vunpack.c.h.b16 %v2134
      %v2222 = vunpack.c.l.b16 %v2135
      %v2223 = vunpack.c.h.b16 %v2135
      %v2224 = vunpack.c.l.b16 %v2136
      %v2225 = vunpack.c.h.b16 %v2136
      %v2226 = vunpack.c.l.b16 %v2137
      %v2227 = vunpack.c.h.b16 %v2137
      %v2228 = vunpack.c.l.b16 %v2138
      %v2229 = vunpack.c.h.b16 %v2138
      %v2230 = vunpack.c.l.b16 %v2139
      %v2231 = vunpack.c.h.b16 %v2139
      %v2232 = vunpack.c.l.b16 %v2140
      %v2233 = vunpack.c.h.b16 %v2140
      %v2234 = vunpack.c.l.b16 %v2141
      %v2235 = vunpack.c.h.b16 %v2141
      %v2236 = vunpack.c.l.b16 %v2142
      %v2237 = vunpack.c.h.b16 %v2142
      %v2238 = vunpack.c.l.b16 %v2143
      %v2239 = vunpack.c.h.b16 %v2143
      %v2240 = vpack.c.b16 %v2180, %v2176
      %v2241 = vpack.c.b16 %v2181, %v2177
      %v2242 = vpack.c.b16 %v2182, %v2178
      %v2243 = vpack.c.b16 %v2183, %v2179
      %v2244 = vpack.c.b16 %v2188, %v2184
      %v2245 = vpack.c.b16 %v2189, %v2185
      %v2246 = vpack.c.b16 %v2190, %v2186
      %v2247 = vpack.c.b16 %v2191, %v2187
      %v2248 = vpack.c.b16 %v2196, %v2192
      %v2249 = vpack.c.b16 %v2197, %v2193
      %v2250 = vpack.c.b16 %v2198, %v2194
      %v2251 = vpack.c.b16 %v2199, %v2195
      %v2252 = vpack.c.b16 %v2204, %v2200
      %v2253 = vpack.c.b16 %v2205, %v2201
      %v2254 = vpack.c.b16 %v2206, %v2202
      %v2255 = vpack.c.b16 %v2207, %v2203
      %v2256 = vpack.c.b16 %v2212, %v2208
      %v2257 = vpack.c.b16 %v2213, %v2209
      %v2258 = vpack.c.b16 %v2214, %v2210
      %v2259 = vpack.c.b16 %v2215, %v2211
      %v2260 = vpack.c.b16 %v2220, %v2216
      %v2261 = vpack.c.b16 %v2221, %v2217
      %v2262 = vpack.c.b16 %v2222, %v2218
      %v2263 = vpack.c.b16 %v2223, %v2219
      %v2264 = vpack.c.b16 %v2228, %v2224
      %v2265 = vpack.c.b16 %v2229, %v2225
      %v2266 = vpack.c.b16 %v2230, %v2226
      %v2267 = vpack.c.b16 %v2231, %v2227
      %v2268 = vpack.c.b16 %v2236, %v2232
      %v2269 = vpack.c.b16 %v2237, %v2233
      %v2270 = vpack.c.b16 %v2238, %v2234
      %v2271 = vpack.c.b16 %v2239, %v2235
      %2304 = vmatprep.subr.bf16.mxu0 %v2269
      %2305 = vmatpush1.bf16.msra.mxu0 %v2268
      %2306 = vmatprep.subr.bf16.mxu0 %v2265
      %2307 = vmatpush1.bf16.msra.mxu0 %v2264
      %2308 = vmatprep.subr.bf16.mxu0 %v2261
      %2309 = vmatpush1.bf16.msra.mxu0 %v2260
      %2310 = vmatprep.subr.bf16.mxu0 %v2257
      %2311 = vmatpush1.bf16.msra.mxu0 %v2256
      %2312 = vmatprep.subr.bf16.mxu0 %v2253
      %2313 = vmatpush1.bf16.msra.mxu0 %v2252
      %2314 = vmatprep.subr.bf16.mxu0 %v2249
      %2315 = vmatpush1.bf16.msra.mxu0 %v2248
      %2316 = vmatprep.subr.bf16.mxu0 %v2245
      %2317 = vmatpush1.bf16.msra.mxu0 %v2244
      %2318 = vmatprep.subr.bf16.mxu0 %v2241
      %2319 = vmatpush1.bf16.msra.mxu0 %v2240
      %2320 = vmatprep.subr.bf16.mxu0 0
      %2321 = vmatpush2.bf16.msra.mxu0 0
      %2322 = vmatprep.subr.bf16.mxu0 0
      %2323 = vmatpush2.bf16.msra.mxu0 0
      %2324 = vmatprep.subr.bf16.mxu0 0
      %2325 = vmatpush2.bf16.msra.mxu0 0
      %2326 = vmatprep.subr.bf16.mxu0 0
      %2327 = vmatpush2.bf16.msra.mxu0 0
      %2328 = vmatprep.subr.bf16.mxu0 0
      %2329 = vmatpush2.bf16.msra.mxu0 0
      %2330 = vmatprep.subr.bf16.mxu0 0
      %2331 = vmatpush2.bf16.msra.mxu0 0
      %2332 = vmatprep.subr.bf16.mxu0 0
      %2333 = vmatpush2.bf16.msra.mxu0 0
      %2334 = vmatprep.subr.bf16.mxu0 0
      %2335 = vmatpush2.bf16.msra.mxu0 0
      %2336 = vmatprep.mubr.bf16.mxu0 0
      %2337 = vmatmul.mubr.bf16.gmra.mxu0 %v2111
      %v2338 = vpop.f32.mrf.mxu0
      %v2339 = vadd.f32 0.0, %v2338
      %v2340 = vpop.f32.mrf.mxu0
      %v2341 = vadd.f32 0.0, %v2340
      %v2342 = vpop.f32.mrf.mxu0
      %v2343 = vpop.f32.mrf.mxu0
      %2344 = vdwg.mxu0
      %2345 = vmatprep.subr.bf16.mxu0 %v2271
      %2346 = vmatpush1.bf16.msra.mxu0 %v2270
      %2347 = vmatprep.subr.bf16.mxu0 %v2267
      %2348 = vmatpush1.bf16.msra.mxu0 %v2266
      %2349 = vmatprep.subr.bf16.mxu0 %v2263
      %2350 = vmatpush1.bf16.msra.mxu0 %v2262
      %2351 = vmatprep.subr.bf16.mxu0 %v2259
      %2352 = vmatpush1.bf16.msra.mxu0 %v2258
      %2353 = vmatprep.subr.bf16.mxu0 %v2255
      %2354 = vmatpush1.bf16.msra.mxu0 %v2254
      %2355 = vmatprep.subr.bf16.mxu0 %v2251
      %2356 = vmatpush1.bf16.msra.mxu0 %v2250
      %2357 = vmatprep.subr.bf16.mxu0 %v2247
      %2358 = vmatpush1.bf16.msra.mxu0 %v2246
      %2359 = vmatprep.subr.bf16.mxu0 %v2243
      %2360 = vmatpush1.bf16.msra.mxu0 %v2242
      %2361 = vmatprep.subr.bf16.mxu0 0
      %2362 = vmatpush2.bf16.msra.mxu0 0
      %2363 = vmatprep.subr.bf16.mxu0 0
      %2364 = vmatpush2.bf16.msra.mxu0 0
      %2365 = vmatprep.subr.bf16.mxu0 0
      %2366 = vmatpush2.bf16.msra.mxu0 0
      %2367 = vmatprep.subr.bf16.mxu0 0
      %2368 = vmatpush2.bf16.msra.mxu0 0
      %2369 = vmatprep.subr.bf16.mxu0 0
      %2370 = vmatpush2.bf16.msra.mxu0 0
      %2371 = vmatprep.subr.bf16.mxu0 0
      %2372 = vmatpush2.bf16.msra.mxu0 0
      %2373 = vmatprep.subr.bf16.mxu0 0
      %2374 = vmatpush2.bf16.msra.mxu0 0
      %2375 = vmatprep.subr.bf16.mxu0 0
      %2376 = vmatpush2.bf16.msra.mxu0 0
      %2377 = vmatprep.mubr.bf16.mxu0 0
      %2378 = vmatmul.mubr.bf16.gmra.mxu0 %v2111
      %v2379 = vpop.f32.mrf.mxu0
      %v2380 = vadd.f32 0.0, %v2379
      %v2381 = vpop.f32.mrf.mxu0
      %v2382 = vadd.f32 0.0, %v2381
      %v2383 = vpop.f32.mrf.mxu0
      %v2384 = vpop.f32.mrf.mxu0
      %2385 = vdwg.mxu0
      %v2386 = vadd.f32 %v2106, %v2339
      %v2387 = vadd.f32 %v2107, %v2341
      %v2388 = vadd.f32 %v2108, %v2380
      %v2389 = vadd.f32 %v2109, %v2382
      %v2390 = vmul.f32 %v2386, 0.5
      %v2391 = vtanh.pop %v2390
      %v2392 = vmul.f32 %v2391, 0.5
      %v2393 = vadd.f32 %v2392, 0.5
      %v2394 = vmul.f32 %v2387, 0.5
      %v2395 = vtanh.pop %v2394
      %v2396 = vmul.f32 %v2395, 0.5
      %v2397 = vadd.f32 %v2396, 0.5
      %v2398 = vtanh.pop %v2388
      %v2399 = vmul.f32 %v2389, 0.5
      %v2400 = vtanh.pop %v2399
      %v2401 = vmul.f32 %v2400, 0.5
      %v2402 = vadd.f32 %v2401, 0.5
      %v2403 = vld [vmem:[#allocation4] sm:$0xff]
      %v2404 = vmul.f32 %v2397, %v2403
      %v2405 = vmul.f32 %v2393, %v2398
      %v2406 = vadd.f32 %v2404, %v2405
      %v2407 = vtanh.pop %v2406
      %v2408 = vmul.f32 %v2402, %v2407
      %s2409 = sadd.s32 %s91, 5
      %v2410 = vstv %s2409
      %vm2411 = vcmp.lt.s32.totalorder %v2410, %v521
      %v2412 = vsel %vm2411, 1, 0
      %2413 = vset.pattern.permute.xlu0 0
      %2414 = vperm.xlu0 %2413, %v2412
      %v2415 = vpop.permute.xlu0 %2414
      %vm2416 = vcmp.eq.s32.totalorder %v2415, 1
      %v2417 = vsel %vm2416, %v2406, %v2403
      %2418 = vst [vmem:[#allocation4] sm:$0xff] %v2417
      %v2419 = vld [vmem:[#allocation3] sm:$0xff]
      %v2420 = vsel %vm2416, %v2408, %v2419
      %2421 = vst [vmem:[#allocation3] sm:$0xff] %v2420
      %s2422 = scalar_lea.vmem [#allocation2], 192
      %v2423 = vld [vmem:[%s2422] sm:$0xff]
      %v2424 = vld [vmem:[%s2422 + $0x8] sm:$0xff]
      %v2425 = vld [vmem:[%s2422 + $0x10] sm:$0xff]
      %v2426 = vld [vmem:[%s2422 + $0x18] sm:$0xff]
      %v2427 = vld [vmem:[#allocation3] sm:$0xff]
      %v2428 = vpack.c.bf16 %v2427, %v2427
      %v2429 = vld [vmem:[#allocation12] sm:$0xff]
      %v2430 = vld [vmem:[#allocation12 + $0x8] sm:$0xff]
      %v2431 = vld [vmem:[#allocation12 + $0x10] sm:$0xff]
      %v2432 = vld [vmem:[#allocation12 + $0x18] sm:$0xff]
      %v2433 = vld [vmem:[#allocation12 + $0x20] sm:$0xff]
      %v2434 = vld [vmem:[#allocation12 + $0x28] sm:$0xff]
      %v2435 = vld [vmem:[#allocation12 + $0x30] sm:$0xff]
      %v2436 = vld [vmem:[#allocation12 + $0x38] sm:$0xff]
      %v2437 = vld [vmem:[#allocation12 + $0x40] sm:$0xff]
      %v2438 = vld [vmem:[#allocation12 + $0x48] sm:$0xff]
      %v2439 = vld [vmem:[#allocation12 + $0x50] sm:$0xff]
      %v2440 = vld [vmem:[#allocation12 + $0x58] sm:$0xff]
      %v2441 = vld [vmem:[#allocation12 + $0x60] sm:$0xff]
      %v2442 = vld [vmem:[#allocation12 + $0x68] sm:$0xff]
      %v2443 = vld [vmem:[#allocation12 + $0x70] sm:$0xff]
      %v2444 = vld [vmem:[#allocation12 + $0x78] sm:$0xff]
      %v2445 = vld [vmem:[#allocation12 + $0x80] sm:$0xff]
      %v2446 = vld [vmem:[#allocation12 + $0x88] sm:$0xff]
      %v2447 = vld [vmem:[#allocation12 + $0x90] sm:$0xff]
      %v2448 = vld [vmem:[#allocation12 + $0x98] sm:$0xff]
      %v2449 = vld [vmem:[#allocation12 + $0xa0] sm:$0xff]
      %v2450 = vld [vmem:[#allocation12 + $0xa8] sm:$0xff]
      %v2451 = vld [vmem:[#allocation12 + $0xb0] sm:$0xff]
      %v2452 = vld [vmem:[#allocation12 + $0xb8] sm:$0xff]
      %v2453 = vld [vmem:[#allocation12 + $0xc0] sm:$0xff]
      %v2454 = vld [vmem:[#allocation12 + $0xc8] sm:$0xff]
      %v2455 = vld [vmem:[#allocation12 + $0xd0] sm:$0xff]
      %v2456 = vld [vmem:[#allocation12 + $0xd8] sm:$0xff]
      %v2457 = vld [vmem:[#allocation12 + $0xe0] sm:$0xff]
      %v2458 = vld [vmem:[#allocation12 + $0xe8] sm:$0xff]
      %v2459 = vld [vmem:[#allocation12 + $0xf0] sm:$0xff]
      %v2460 = vld [vmem:[#allocation12 + $0xf8] sm:$0xff]
      %v2493 = vunpack.c.l.b16 %v2429
      %v2494 = vunpack.c.h.b16 %v2429
      %v2495 = vunpack.c.l.b16 %v2430
      %v2496 = vunpack.c.h.b16 %v2430
      %v2497 = vunpack.c.l.b16 %v2431
      %v2498 = vunpack.c.h.b16 %v2431
      %v2499 = vunpack.c.l.b16 %v2432
      %v2500 = vunpack.c.h.b16 %v2432
      %v2501 = vunpack.c.l.b16 %v2433
      %v2502 = vunpack.c.h.b16 %v2433
      %v2503 = vunpack.c.l.b16 %v2434
      %v2504 = vunpack.c.h.b16 %v2434
      %v2505 = vunpack.c.l.b16 %v2435
      %v2506 = vunpack.c.h.b16 %v2435
      %v2507 = vunpack.c.l.b16 %v2436
      %v2508 = vunpack.c.h.b16 %v2436
      %v2509 = vunpack.c.l.b16 %v2437
      %v2510 = vunpack.c.h.b16 %v2437
      %v2511 = vunpack.c.l.b16 %v2438
      %v2512 = vunpack.c.h.b16 %v2438
      %v2513 = vunpack.c.l.b16 %v2439
      %v2514 = vunpack.c.h.b16 %v2439
      %v2515 = vunpack.c.l.b16 %v2440
      %v2516 = vunpack.c.h.b16 %v2440
      %v2517 = vunpack.c.l.b16 %v2441
      %v2518 = vunpack.c.h.b16 %v2441
      %v2519 = vunpack.c.l.b16 %v2442
      %v2520 = vunpack.c.h.b16 %v2442
      %v2521 = vunpack.c.l.b16 %v2443
      %v2522 = vunpack.c.h.b16 %v2443
      %v2523 = vunpack.c.l.b16 %v2444
      %v2524 = vunpack.c.h.b16 %v2444
      %v2525 = vunpack.c.l.b16 %v2445
      %v2526 = vunpack.c.h.b16 %v2445
      %v2527 = vunpack.c.l.b16 %v2446
      %v2528 = vunpack.c.h.b16 %v2446
      %v2529 = vunpack.c.l.b16 %v2447
      %v2530 = vunpack.c.h.b16 %v2447
      %v2531 = vunpack.c.l.b16 %v2448
      %v2532 = vunpack.c.h.b16 %v2448
      %v2533 = vunpack.c.l.b16 %v2449
      %v2534 = vunpack.c.h.b16 %v2449
      %v2535 = vunpack.c.l.b16 %v2450
      %v2536 = vunpack.c.h.b16 %v2450
      %v2537 = vunpack.c.l.b16 %v2451
      %v2538 = vunpack.c.h.b16 %v2451
      %v2539 = vunpack.c.l.b16 %v2452
      %v2540 = vunpack.c.h.b16 %v2452
      %v2541 = vunpack.c.l.b16 %v2453
      %v2542 = vunpack.c.h.b16 %v2453
      %v2543 = vunpack.c.l.b16 %v2454
      %v2544 = vunpack.c.h.b16 %v2454
      %v2545 = vunpack.c.l.b16 %v2455
      %v2546 = vunpack.c.h.b16 %v2455
      %v2547 = vunpack.c.l.b16 %v2456
      %v2548 = vunpack.c.h.b16 %v2456
      %v2549 = vunpack.c.l.b16 %v2457
      %v2550 = vunpack.c.h.b16 %v2457
      %v2551 = vunpack.c.l.b16 %v2458
      %v2552 = vunpack.c.h.b16 %v2458
      %v2553 = vunpack.c.l.b16 %v2459
      %v2554 = vunpack.c.h.b16 %v2459
      %v2555 = vunpack.c.l.b16 %v2460
      %v2556 = vunpack.c.h.b16 %v2460
      %v2557 = vpack.c.b16 %v2497, %v2493
      %v2558 = vpack.c.b16 %v2498, %v2494
      %v2559 = vpack.c.b16 %v2499, %v2495
      %v2560 = vpack.c.b16 %v2500, %v2496
      %v2561 = vpack.c.b16 %v2505, %v2501
      %v2562 = vpack.c.b16 %v2506, %v2502
      %v2563 = vpack.c.b16 %v2507, %v2503
      %v2564 = vpack.c.b16 %v2508, %v2504
      %v2565 = vpack.c.b16 %v2513, %v2509
      %v2566 = vpack.c.b16 %v2514, %v2510
      %v2567 = vpack.c.b16 %v2515, %v2511
      %v2568 = vpack.c.b16 %v2516, %v2512
      %v2569 = vpack.c.b16 %v2521, %v2517
      %v2570 = vpack.c.b16 %v2522, %v2518
      %v2571 = vpack.c.b16 %v2523, %v2519
      %v2572 = vpack.c.b16 %v2524, %v2520
      %v2573 = vpack.c.b16 %v2529, %v2525
      %v2574 = vpack.c.b16 %v2530, %v2526
      %v2575 = vpack.c.b16 %v2531, %v2527
      %v2576 = vpack.c.b16 %v2532, %v2528
      %v2577 = vpack.c.b16 %v2537, %v2533
      %v2578 = vpack.c.b16 %v2538, %v2534
      %v2579 = vpack.c.b16 %v2539, %v2535
      %v2580 = vpack.c.b16 %v2540, %v2536
      %v2581 = vpack.c.b16 %v2545, %v2541
      %v2582 = vpack.c.b16 %v2546, %v2542
      %v2583 = vpack.c.b16 %v2547, %v2543
      %v2584 = vpack.c.b16 %v2548, %v2544
      %v2585 = vpack.c.b16 %v2553, %v2549
      %v2586 = vpack.c.b16 %v2554, %v2550
      %v2587 = vpack.c.b16 %v2555, %v2551
      %v2588 = vpack.c.b16 %v2556, %v2552
      %2621 = vmatprep.subr.bf16.mxu0 %v2586
      %2622 = vmatpush1.bf16.msra.mxu0 %v2585
      %2623 = vmatprep.subr.bf16.mxu0 %v2582
      %2624 = vmatpush1.bf16.msra.mxu0 %v2581
      %2625 = vmatprep.subr.bf16.mxu0 %v2578
      %2626 = vmatpush1.bf16.msra.mxu0 %v2577
      %2627 = vmatprep.subr.bf16.mxu0 %v2574
      %2628 = vmatpush1.bf16.msra.mxu0 %v2573
      %2629 = vmatprep.subr.bf16.mxu0 %v2570
      %2630 = vmatpush1.bf16.msra.mxu0 %v2569
      %2631 = vmatprep.subr.bf16.mxu0 %v2566
      %2632 = vmatpush1.bf16.msra.mxu0 %v2565
      %2633 = vmatprep.subr.bf16.mxu0 %v2562
      %2634 = vmatpush1.bf16.msra.mxu0 %v2561
      %2635 = vmatprep.subr.bf16.mxu0 %v2558
      %2636 = vmatpush1.bf16.msra.mxu0 %v2557
      %2637 = vmatprep.subr.bf16.mxu0 0
      %2638 = vmatpush2.bf16.msra.mxu0 0
      %2639 = vmatprep.subr.bf16.mxu0 0
      %2640 = vmatpush2.bf16.msra.mxu0 0
      %2641 = vmatprep.subr.bf16.mxu0 0
      %2642 = vmatpush2.bf16.msra.mxu0 0
      %2643 = vmatprep.subr.bf16.mxu0 0
      %2644 = vmatpush2.bf16.msra.mxu0 0
      %2645 = vmatprep.subr.bf16.mxu0 0
      %2646 = vmatpush2.bf16.msra.mxu0 0
      %2647 = vmatprep.subr.bf16.mxu0 0
      %2648 = vmatpush2.bf16.msra.mxu0 0
      %2649 = vmatprep.subr.bf16.mxu0 0
      %2650 = vmatpush2.bf16.msra.mxu0 0
      %2651 = vmatprep.subr.bf16.mxu0 0
      %2652 = vmatpush2.bf16.msra.mxu0 0
      %2653 = vmatprep.mubr.bf16.mxu0 0
      %2654 = vmatmul.mubr.bf16.gmra.mxu0 %v2428
      %v2655 = vpop.f32.mrf.mxu0
      %v2656 = vadd.f32 0.0, %v2655
      %v2657 = vpop.f32.mrf.mxu0
      %v2658 = vadd.f32 0.0, %v2657
      %v2659 = vpop.f32.mrf.mxu0
      %v2660 = vpop.f32.mrf.mxu0
      %2661 = vdwg.mxu0
      %2662 = vmatprep.subr.bf16.mxu0 %v2588
      %2663 = vmatpush1.bf16.msra.mxu0 %v2587
      %2664 = vmatprep.subr.bf16.mxu0 %v2584
      %2665 = vmatpush1.bf16.msra.mxu0 %v2583
      %2666 = vmatprep.subr.bf16.mxu0 %v2580
      %2667 = vmatpush1.bf16.msra.mxu0 %v2579
      %2668 = vmatprep.subr.bf16.mxu0 %v2576
      %2669 = vmatpush1.bf16.msra.mxu0 %v2575
      %2670 = vmatprep.subr.bf16.mxu0 %v2572
      %2671 = vmatpush1.bf16.msra.mxu0 %v2571
      %2672 = vmatprep.subr.bf16.mxu0 %v2568
      %2673 = vmatpush1.bf16.msra.mxu0 %v2567
      %2674 = vmatprep.subr.bf16.mxu0 %v2564
      %2675 = vmatpush1.bf16.msra.mxu0 %v2563
      %2676 = vmatprep.subr.bf16.mxu0 %v2560
      %2677 = vmatpush1.bf16.msra.mxu0 %v2559
      %2678 = vmatprep.subr.bf16.mxu0 0
      %2679 = vmatpush2.bf16.msra.mxu0 0
      %2680 = vmatprep.subr.bf16.mxu0 0
      %2681 = vmatpush2.bf16.msra.mxu0 0
      %2682 = vmatprep.subr.bf16.mxu0 0
      %2683 = vmatpush2.bf16.msra.mxu0 0
      %2684 = vmatprep.subr.bf16.mxu0 0
      %2685 = vmatpush2.bf16.msra.mxu0 0
      %2686 = vmatprep.subr.bf16.mxu0 0
      %2687 = vmatpush2.bf16.msra.mxu0 0
      %2688 = vmatprep.subr.bf16.mxu0 0
      %2689 = vmatpush2.bf16.msra.mxu0 0
      %2690 = vmatprep.subr.bf16.mxu0 0
      %2691 = vmatpush2.bf16.msra.mxu0 0
      %2692 = vmatprep.subr.bf16.mxu0 0
      %2693 = vmatpush2.bf16.msra.mxu0 0
      %2694 = vmatprep.mubr.bf16.mxu0 0
      %2695 = vmatmul.mubr.bf16.gmra.mxu0 %v2428
      %v2696 = vpop.f32.mrf.mxu0
      %v2697 = vadd.f32 0.0, %v2696
      %v2698 = vpop.f32.mrf.mxu0
      %v2699 = vadd.f32 0.0, %v2698
      %v2700 = vpop.f32.mrf.mxu0
      %v2701 = vpop.f32.mrf.mxu0
      %2702 = vdwg.mxu0
      %v2703 = vadd.f32 %v2423, %v2656
      %v2704 = vadd.f32 %v2424, %v2658
      %v2705 = vadd.f32 %v2425, %v2697
      %v2706 = vadd.f32 %v2426, %v2699
      %v2707 = vmul.f32 %v2703, 0.5
      %v2708 = vtanh.pop %v2707
      %v2709 = vmul.f32 %v2708, 0.5
      %v2710 = vadd.f32 %v2709, 0.5
      %v2711 = vmul.f32 %v2704, 0.5
      %v2712 = vtanh.pop %v2711
      %v2713 = vmul.f32 %v2712, 0.5
      %v2714 = vadd.f32 %v2713, 0.5
      %v2715 = vtanh.pop %v2705
      %v2716 = vmul.f32 %v2706, 0.5
      %v2717 = vtanh.pop %v2716
      %v2718 = vmul.f32 %v2717, 0.5
      %v2719 = vadd.f32 %v2718, 0.5
      %v2720 = vld [vmem:[#allocation4] sm:$0xff]
      %v2721 = vmul.f32 %v2714, %v2720
      %v2722 = vmul.f32 %v2710, %v2715
      %v2723 = vadd.f32 %v2721, %v2722
      %v2724 = vtanh.pop %v2723
      %v2725 = vmul.f32 %v2719, %v2724
      %s2726 = sadd.s32 %s91, 6
      %v2727 = vstv %s2726
      %vm2728 = vcmp.lt.s32.totalorder %v2727, %v521
      %v2729 = vsel %vm2728, 1, 0
      %2730 = vset.pattern.permute.xlu0 0
      %2731 = vperm.xlu0 %2730, %v2729
      %v2732 = vpop.permute.xlu0 %2731
      %vm2733 = vcmp.eq.s32.totalorder %v2732, 1
      %v2734 = vsel %vm2733, %v2723, %v2720
      %2735 = vst [vmem:[#allocation4] sm:$0xff] %v2734
      %v2736 = vld [vmem:[#allocation3] sm:$0xff]
      %v2737 = vsel %vm2733, %v2725, %v2736
      %2738 = vst [vmem:[#allocation3] sm:$0xff] %v2737
      %s2739 = scalar_lea.vmem [#allocation2], 224
      %v2740 = vld [vmem:[%s2739] sm:$0xff]
      %v2741 = vld [vmem:[%s2739 + $0x8] sm:$0xff]
      %v2742 = vld [vmem:[%s2739 + $0x10] sm:$0xff]
      %v2743 = vld [vmem:[%s2739 + $0x18] sm:$0xff]
      %v2744 = vld [vmem:[#allocation3] sm:$0xff]
      %v2745 = vpack.c.bf16 %v2744, %v2744
      %v2746 = vld [vmem:[#allocation12] sm:$0xff]
      %v2747 = vld [vmem:[#allocation12 + $0x8] sm:$0xff]
      %v2748 = vld [vmem:[#allocation12 + $0x10] sm:$0xff]
      %v2749 = vld [vmem:[#allocation12 + $0x18] sm:$0xff]
      %v2750 = vld [vmem:[#allocation12 + $0x20] sm:$0xff]
      %v2751 = vld [vmem:[#allocation12 + $0x28] sm:$0xff]
      %v2752 = vld [vmem:[#allocation12 + $0x30] sm:$0xff]
      %v2753 = vld [vmem:[#allocation12 + $0x38] sm:$0xff]
      %v2754 = vld [vmem:[#allocation12 + $0x40] sm:$0xff]
      %v2755 = vld [vmem:[#allocation12 + $0x48] sm:$0xff]
      %v2756 = vld [vmem:[#allocation12 + $0x50] sm:$0xff]
      %v2757 = vld [vmem:[#allocation12 + $0x58] sm:$0xff]
      %v2758 = vld [vmem:[#allocation12 + $0x60] sm:$0xff]
      %v2759 = vld [vmem:[#allocation12 + $0x68] sm:$0xff]
      %v2760 = vld [vmem:[#allocation12 + $0x70] sm:$0xff]
      %v2761 = vld [vmem:[#allocation12 + $0x78] sm:$0xff]
      %v2762 = vld [vmem:[#allocation12 + $0x80] sm:$0xff]
      %v2763 = vld [vmem:[#allocation12 + $0x88] sm:$0xff]
      %v2764 = vld [vmem:[#allocation12 + $0x90] sm:$0xff]
      %v2765 = vld [vmem:[#allocation12 + $0x98] sm:$0xff]
      %v2766 = vld [vmem:[#allocation12 + $0xa0] sm:$0xff]
      %v2767 = vld [vmem:[#allocation12 + $0xa8] sm:$0xff]
      %v2768 = vld [vmem:[#allocation12 + $0xb0] sm:$0xff]
      %v2769 = vld [vmem:[#allocation12 + $0xb8] sm:$0xff]
      %v2770 = vld [vmem:[#allocation12 + $0xc0] sm:$0xff]
      %v2771 = vld [vmem:[#allocation12 + $0xc8] sm:$0xff]
      %v2772 = vld [vmem:[#allocation12 + $0xd0] sm:$0xff]
      %v2773 = vld [vmem:[#allocation12 + $0xd8] sm:$0xff]
      %v2774 = vld [vmem:[#allocation12 + $0xe0] sm:$0xff]
      %v2775 = vld [vmem:[#allocation12 + $0xe8] sm:$0xff]
      %v2776 = vld [vmem:[#allocation12 + $0xf0] sm:$0xff]
      %v2777 = vld [vmem:[#allocation12 + $0xf8] sm:$0xff]
      %v2810 = vunpack.c.l.b16 %v2746
      %v2811 = vunpack.c.h.b16 %v2746
      %v2812 = vunpack.c.l.b16 %v2747
      %v2813 = vunpack.c.h.b16 %v2747
      %v2814 = vunpack.c.l.b16 %v2748
      %v2815 = vunpack.c.h.b16 %v2748
      %v2816 = vunpack.c.l.b16 %v2749
      %v2817 = vunpack.c.h.b16 %v2749
      %v2818 = vunpack.c.l.b16 %v2750
      %v2819 = vunpack.c.h.b16 %v2750
      %v2820 = vunpack.c.l.b16 %v2751
      %v2821 = vunpack.c.h.b16 %v2751
      %v2822 = vunpack.c.l.b16 %v2752
      %v2823 = vunpack.c.h.b16 %v2752
      %v2824 = vunpack.c.l.b16 %v2753
      %v2825 = vunpack.c.h.b16 %v2753
      %v2826 = vunpack.c.l.b16 %v2754
      %v2827 = vunpack.c.h.b16 %v2754
      %v2828 = vunpack.c.l.b16 %v2755
      %v2829 = vunpack.c.h.b16 %v2755
      %v2830 = vunpack.c.l.b16 %v2756
      %v2831 = vunpack.c.h.b16 %v2756
      %v2832 = vunpack.c.l.b16 %v2757
      %v2833 = vunpack.c.h.b16 %v2757
      %v2834 = vunpack.c.l.b16 %v2758
      %v2835 = vunpack.c.h.b16 %v2758
      %v2836 = vunpack.c.l.b16 %v2759
      %v2837 = vunpack.c.h.b16 %v2759
      %v2838 = vunpack.c.l.b16 %v2760
      %v2839 = vunpack.c.h.b16 %v2760
      %v2840 = vunpack.c.l.b16 %v2761
      %v2841 = vunpack.c.h.b16 %v2761
      %v2842 = vunpack.c.l.b16 %v2762
      %v2843 = vunpack.c.h.b16 %v2762
      %v2844 = vunpack.c.l.b16 %v2763
      %v2845 = vunpack.c.h.b16 %v2763
      %v2846 = vunpack.c.l.b16 %v2764
      %v2847 = vunpack.c.h.b16 %v2764
      %v2848 = vunpack.c.l.b16 %v2765
      %v2849 = vunpack.c.h.b16 %v2765
      %v2850 = vunpack.c.l.b16 %v2766
      %v2851 = vunpack.c.h.b16 %v2766
      %v2852 = vunpack.c.l.b16 %v2767
      %v2853 = vunpack.c.h.b16 %v2767
      %v2854 = vunpack.c.l.b16 %v2768
      %v2855 = vunpack.c.h.b16 %v2768
      %v2856 = vunpack.c.l.b16 %v2769
      %v2857 = vunpack.c.h.b16 %v2769
      %v2858 = vunpack.c.l.b16 %v2770
      %v2859 = vunpack.c.h.b16 %v2770
      %v2860 = vunpack.c.l.b16 %v2771
      %v2861 = vunpack.c.h.b16 %v2771
      %v2862 = vunpack.c.l.b16 %v2772
      %v2863 = vunpack.c.h.b16 %v2772
      %v2864 = vunpack.c.l.b16 %v2773
      %v2865 = vunpack.c.h.b16 %v2773
      %v2866 = vunpack.c.l.b16 %v2774
      %v2867 = vunpack.c.h.b16 %v2774
      %v2868 = vunpack.c.l.b16 %v2775
      %v2869 = vunpack.c.h.b16 %v2775
      %v2870 = vunpack.c.l.b16 %v2776
      %v2871 = vunpack.c.h.b16 %v2776
      %v2872 = vunpack.c.l.b16 %v2777
      %v2873 = vunpack.c.h.b16 %v2777
      %v2874 = vpack.c.b16 %v2814, %v2810
      %v2875 = vpack.c.b16 %v2815, %v2811
      %v2876 = vpack.c.b16 %v2816, %v2812
      %v2877 = vpack.c.b16 %v2817, %v2813
      %v2878 = vpack.c.b16 %v2822, %v2818
      %v2879 = vpack.c.b16 %v2823, %v2819
      %v2880 = vpack.c.b16 %v2824, %v2820
      %v2881 = vpack.c.b16 %v2825, %v2821
      %v2882 = vpack.c.b16 %v2830, %v2826
      %v2883 = vpack.c.b16 %v2831, %v2827
      %v2884 = vpack.c.b16 %v2832, %v2828
      %v2885 = vpack.c.b16 %v2833, %v2829
      %v2886 = vpack.c.b16 %v2838, %v2834
      %v2887 = vpack.c.b16 %v2839, %v2835
      %v2888 = vpack.c.b16 %v2840, %v2836
      %v2889 = vpack.c.b16 %v2841, %v2837
      %v2890 = vpack.c.b16 %v2846, %v2842
      %v2891 = vpack.c.b16 %v2847, %v2843
      %v2892 = vpack.c.b16 %v2848, %v2844
      %v2893 = vpack.c.b16 %v2849, %v2845
      %v2894 = vpack.c.b16 %v2854, %v2850
      %v2895 = vpack.c.b16 %v2855, %v2851
      %v2896 = vpack.c.b16 %v2856, %v2852
      %v2897 = vpack.c.b16 %v2857, %v2853
      %v2898 = vpack.c.b16 %v2862, %v2858
      %v2899 = vpack.c.b16 %v2863, %v2859
      %v2900 = vpack.c.b16 %v2864, %v2860
      %v2901 = vpack.c.b16 %v2865, %v2861
      %v2902 = vpack.c.b16 %v2870, %v2866
      %v2903 = vpack.c.b16 %v2871, %v2867
      %v2904 = vpack.c.b16 %v2872, %v2868
      %v2905 = vpack.c.b16 %v2873, %v2869
      %2938 = vmatprep.subr.bf16.mxu0 %v2903
      %2939 = vmatpush1.bf16.msra.mxu0 %v2902
      %2940 = vmatprep.subr.bf16.mxu0 %v2899
      %2941 = vmatpush1.bf16.msra.mxu0 %v2898
      %2942 = vmatprep.subr.bf16.mxu0 %v2895
      %2943 = vmatpush1.bf16.msra.mxu0 %v2894
      %2944 = vmatprep.subr.bf16.mxu0 %v2891
      %2945 = vmatpush1.bf16.msra.mxu0 %v2890
      %2946 = vmatprep.subr.bf16.mxu0 %v2887
      %2947 = vmatpush1.bf16.msra.mxu0 %v2886
      %2948 = vmatprep.subr.bf16.mxu0 %v2883
      %2949 = vmatpush1.bf16.msra.mxu0 %v2882
      %2950 = vmatprep.subr.bf16.mxu0 %v2879
      %2951 = vmatpush1.bf16.msra.mxu0 %v2878
      %2952 = vmatprep.subr.bf16.mxu0 %v2875
      %2953 = vmatpush1.bf16.msra.mxu0 %v2874
      %2954 = vmatprep.subr.bf16.mxu0 0
      %2955 = vmatpush2.bf16.msra.mxu0 0
      %2956 = vmatprep.subr.bf16.mxu0 0
      %2957 = vmatpush2.bf16.msra.mxu0 0
      %2958 = vmatprep.subr.bf16.mxu0 0
      %2959 = vmatpush2.bf16.msra.mxu0 0
      %2960 = vmatprep.subr.bf16.mxu0 0
      %2961 = vmatpush2.bf16.msra.mxu0 0
      %2962 = vmatprep.subr.bf16.mxu0 0
      %2963 = vmatpush2.bf16.msra.mxu0 0
      %2964 = vmatprep.subr.bf16.mxu0 0
      %2965 = vmatpush2.bf16.msra.mxu0 0
      %2966 = vmatprep.subr.bf16.mxu0 0
      %2967 = vmatpush2.bf16.msra.mxu0 0
      %2968 = vmatprep.subr.bf16.mxu0 0
      %2969 = vmatpush2.bf16.msra.mxu0 0
      %2970 = vmatprep.mubr.bf16.mxu0 0
      %2971 = vmatmul.mubr.bf16.gmra.mxu0 %v2745
      %v2972 = vpop.f32.mrf.mxu0
      %v2973 = vadd.f32 0.0, %v2972
      %v2974 = vpop.f32.mrf.mxu0
      %v2975 = vadd.f32 0.0, %v2974
      %v2976 = vpop.f32.mrf.mxu0
      %v2977 = vpop.f32.mrf.mxu0
      %2978 = vdwg.mxu0
      %2979 = vmatprep.subr.bf16.mxu0 %v2905
      %2980 = vmatpush1.bf16.msra.mxu0 %v2904
      %2981 = vmatprep.subr.bf16.mxu0 %v2901
      %2982 = vmatpush1.bf16.msra.mxu0 %v2900
      %2983 = vmatprep.subr.bf16.mxu0 %v2897
      %2984 = vmatpush1.bf16.msra.mxu0 %v2896
      %2985 = vmatprep.subr.bf16.mxu0 %v2893
      %2986 = vmatpush1.bf16.msra.mxu0 %v2892
      %2987 = vmatprep.subr.bf16.mxu0 %v2889
      %2988 = vmatpush1.bf16.msra.mxu0 %v2888
      %2989 = vmatprep.subr.bf16.mxu0 %v2885
      %2990 = vmatpush1.bf16.msra.mxu0 %v2884
      %2991 = vmatprep.subr.bf16.mxu0 %v2881
      %2992 = vmatpush1.bf16.msra.mxu0 %v2880
      %2993 = vmatprep.subr.bf16.mxu0 %v2877
      %2994 = vmatpush1.bf16.msra.mxu0 %v2876
      %2995 = vmatprep.subr.bf16.mxu0 0
      %2996 = vmatpush2.bf16.msra.mxu0 0
      %2997 = vmatprep.subr.bf16.mxu0 0
      %2998 = vmatpush2.bf16.msra.mxu0 0
      %2999 = vmatprep.subr.bf16.mxu0 0
      %3000 = vmatpush2.bf16.msra.mxu0 0
      %3001 = vmatprep.subr.bf16.mxu0 0
      %3002 = vmatpush2.bf16.msra.mxu0 0
      %3003 = vmatprep.subr.bf16.mxu0 0
      %3004 = vmatpush2.bf16.msra.mxu0 0
      %3005 = vmatprep.subr.bf16.mxu0 0
      %3006 = vmatpush2.bf16.msra.mxu0 0
      %3007 = vmatprep.subr.bf16.mxu0 0
      %3008 = vmatpush2.bf16.msra.mxu0 0
      %3009 = vmatprep.subr.bf16.mxu0 0
      %3010 = vmatpush2.bf16.msra.mxu0 0
      %3011 = vmatprep.mubr.bf16.mxu0 0
      %3012 = vmatmul.mubr.bf16.gmra.mxu0 %v2745
      %v3013 = vpop.f32.mrf.mxu0
      %v3014 = vadd.f32 0.0, %v3013
      %v3015 = vpop.f32.mrf.mxu0
      %v3016 = vadd.f32 0.0, %v3015
      %v3017 = vpop.f32.mrf.mxu0
      %v3018 = vpop.f32.mrf.mxu0
      %3019 = vdwg.mxu0
      %v3020 = vadd.f32 %v2740, %v2973
      %v3021 = vadd.f32 %v2741, %v2975
      %v3022 = vadd.f32 %v2742, %v3014
      %v3023 = vadd.f32 %v2743, %v3016
      %v3024 = vmul.f32 %v3020, 0.5
      %v3025 = vtanh.pop %v3024
      %v3026 = vmul.f32 %v3025, 0.5
      %v3027 = vadd.f32 %v3026, 0.5
      %v3028 = vmul.f32 %v3021, 0.5
      %v3029 = vtanh.pop %v3028
      %v3030 = vmul.f32 %v3029, 0.5
      %v3031 = vadd.f32 %v3030, 0.5
      %v3032 = vtanh.pop %v3022
      %v3033 = vmul.f32 %v3023, 0.5
      %v3034 = vtanh.pop %v3033
      %v3035 = vmul.f32 %v3034, 0.5
      %v3036 = vadd.f32 %v3035, 0.5
      %v3037 = vld [vmem:[#allocation4] sm:$0xff]
      %v3038 = vmul.f32 %v3031, %v3037
      %v3039 = vmul.f32 %v3027, %v3032
      %v3040 = vadd.f32 %v3038, %v3039
      %v3041 = vtanh.pop %v3040
      %v3042 = vmul.f32 %v3036, %v3041
      %s3043 = sadd.s32 %s91, 7
      %v3044 = vstv %s3043
      %vm3045 = vcmp.lt.s32.totalorder %v3044, %v521
      %v3046 = vsel %vm3045, 1, 0
      %3047 = vset.pattern.permute.xlu0 0
      %3048 = vperm.xlu0 %3047, %v3046
      %v3049 = vpop.permute.xlu0 %3048
      %vm3050 = vcmp.eq.s32.totalorder %v3049, 1
      %v3051 = vsel %vm3050, %v3040, %v3037
      %3052 = vst [vmem:[#allocation4] sm:$0xff] %v3051
      %v3053 = vld [vmem:[#allocation3] sm:$0xff]
      %v3054 = vsel %vm3050, %v3042, %v3053
      %3055 = vst [vmem:[#allocation3] sm:$0xff] %v3054
    $region53: #{tpu_custom_call.1} parent=1 // pred_fallthru
      _
    // Predicated region
    $region54: #{tpu_custom_call.1} parent=1 // pred_check
      %p3056 = pneg %p85
    $region55: #{tpu_custom_call.1} parent=1 // pred_check_branch
      %3058 = sbr.rel (%p3056) target = $region57
    $region56: #{tpu_custom_call.1} parent=1 // pred_region
      %v3059 = vld [vmem:[#allocation3] sm:$0xff]
      %v3060 = vpack.c.bf16 %v3059, %v3059
      %v3061 = vld [vmem:[#allocation13] sm:$0xf]
      %v3062 = vld [vmem:[#allocation13 + $0x4] sm:$0xf]
      %v3063 = vld [vmem:[#allocation13 + $0x8] sm:$0xf]
      %v3064 = vld [vmem:[#allocation13 + $0xc] sm:$0xf]
      %v3065 = vld [vmem:[#allocation13 + $0x10] sm:$0xf]
      %v3066 = vld [vmem:[#allocation13 + $0x14] sm:$0xf]
      %v3067 = vld [vmem:[#allocation13 + $0x18] sm:$0xf]
      %v3068 = vld [vmem:[#allocation13 + $0x1c] sm:$0xf]
      %v3069 = vld [vmem:[#allocation13 + $0x20] sm:$0xf]
      %v3070 = vld [vmem:[#allocation13 + $0x24] sm:$0xf]
      %v3071 = vld [vmem:[#allocation13 + $0x28] sm:$0xf]
      %v3072 = vld [vmem:[#allocation13 + $0x2c] sm:$0xf]
      %v3073 = vld [vmem:[#allocation13 + $0x30] sm:$0xf]
      %v3074 = vld [vmem:[#allocation13 + $0x34] sm:$0xf]
      %v3075 = vld [vmem:[#allocation13 + $0x38] sm:$0xf]
      %v3076 = vld [vmem:[#allocation13 + $0x3c] sm:$0xf]
      %v3077 = vld [vmem:[%s7] sm:$0x1]
      %v3079 = vlaneseq
      %v3080 = vshrl.u32 %v3079, 7
      %v3081 = vsub.s32 0, %v3080
      %v3082 = vrot.slane %v3077, %v3081
      %v3100 = vunpack.c.l.b16 %v3061
      %v3101 = vunpack.c.l.b16 %v3062
      %v3102 = vunpack.c.l.b16 %v3063
      %v3103 = vunpack.c.l.b16 %v3064
      %v3104 = vunpack.c.l.b16 %v3065
      %v3105 = vunpack.c.l.b16 %v3066
      %v3106 = vunpack.c.l.b16 %v3067
      %v3107 = vunpack.c.l.b16 %v3068
      %v3108 = vunpack.c.l.b16 %v3069
      %v3109 = vunpack.c.l.b16 %v3070
      %v3110 = vunpack.c.l.b16 %v3071
      %v3111 = vunpack.c.l.b16 %v3072
      %v3112 = vunpack.c.l.b16 %v3073
      %v3113 = vunpack.c.l.b16 %v3074
      %v3114 = vunpack.c.l.b16 %v3075
      %v3115 = vunpack.c.l.b16 %v3076
      %v3116 = vpack.c.b16 %v3101, %v3100
      %v3117 = vpack.c.b16 %v3103, %v3102
      %v3118 = vpack.c.b16 %v3105, %v3104
      %v3119 = vpack.c.b16 %v3107, %v3106
      %v3120 = vpack.c.b16 %v3109, %v3108
      %v3121 = vpack.c.b16 %v3111, %v3110
      %v3122 = vpack.c.b16 %v3113, %v3112
      %v3123 = vpack.c.b16 %v3115, %v3114
      %3132 = vmatprep.subr.bf16.mxu0 0
      %3133 = vmatpush1.bf16.msra.mxu0 %v3123
      %3134 = vmatprep.subr.bf16.mxu0 0
      %3135 = vmatpush1.bf16.msra.mxu0 %v3122
      %3136 = vmatprep.subr.bf16.mxu0 0
      %3137 = vmatpush1.bf16.msra.mxu0 %v3121
      %3138 = vmatprep.subr.bf16.mxu0 0
      %3139 = vmatpush1.bf16.msra.mxu0 %v3120
      %3140 = vmatprep.subr.bf16.mxu0 0
      %3141 = vmatpush1.bf16.msra.mxu0 %v3119
      %3142 = vmatprep.subr.bf16.mxu0 0
      %3143 = vmatpush1.bf16.msra.mxu0 %v3118
      %3144 = vmatprep.subr.bf16.mxu0 0
      %3145 = vmatpush1.bf16.msra.mxu0 %v3117
      %3146 = vmatprep.subr.bf16.mxu0 0
      %3147 = vmatpush1.bf16.msra.mxu0 %v3116
      %3148 = vmatprep.subr.bf16.mxu0 0
      %3149 = vmatpush2.bf16.msra.mxu0 0
      %3150 = vmatprep.subr.bf16.mxu0 0
      %3151 = vmatpush2.bf16.msra.mxu0 0
      %3152 = vmatprep.subr.bf16.mxu0 0
      %3153 = vmatpush2.bf16.msra.mxu0 0
      %3154 = vmatprep.subr.bf16.mxu0 0
      %3155 = vmatpush2.bf16.msra.mxu0 0
      %3156 = vmatprep.subr.bf16.mxu0 0
      %3157 = vmatpush2.bf16.msra.mxu0 0
      %3158 = vmatprep.subr.bf16.mxu0 0
      %3159 = vmatpush2.bf16.msra.mxu0 0
      %3160 = vmatprep.subr.bf16.mxu0 0
      %3161 = vmatpush2.bf16.msra.mxu0 0
      %3162 = vmatprep.subr.bf16.mxu0 0
      %3163 = vmatpush2.bf16.msra.mxu0 0
      %3164 = vmatprep.mubr.bf16.mxu0 0
      %3165 = vmatmul.mubr.bf16.gmra.mxu0 %v3060
      %v3166 = vpop.f32.mrf.mxu0
      %v3167 = vadd.f32 %v3082, %v3166
      %v3168 = vpop.f32.mrf.mxu0
      %v3169 = vpop.f32.mrf.mxu0
      %v3170 = vpop.f32.mrf.mxu0
      %3171 = vdwg.mxu0
      %3172 = vst [vmem:[#allocation15] sm:$0xff] %v3167
    $region57: #{tpu_custom_call.1} parent=1 // pred_fallthru
      _
    // Predicated region
    $region58: #{tpu_custom_call.1} parent=1 // pred_check
      _
    $region59: #{tpu_custom_call.1} parent=1 // pred_check_branch
      %3174 = sbr.rel (0) target = $region61
    $region60: #{tpu_custom_call.1} parent=1 // pred_region
      %s3176 = ssub.s32 128, 128
      %3177 = vsyncadd [#allocation9], %s3176
      %s3179 = sshll.u32 [#allocation15], 4
      %s3180 = int_to_ptr.vmem [resolvable:$true] %s3179
      %3182 = dma.vmem_to_hbm [thread:$0]  %s3180, 128, %s8, [#allocation9]
    $region61: #{tpu_custom_call.1} parent=1 // pred_fallthru
      _
    // Predicated region
    $region62: #{tpu_custom_call.1} parent=1 // pred_check
      _
    $region63: #{tpu_custom_call.1} parent=1 // pred_check_branch
      %3184 = sbr.rel (0) target = $region65
    $region64: #{tpu_custom_call.1} parent=1 // pred_region
      %3185 = dma.done [#allocation9], 128
    $region65: #{tpu_custom_call.1} parent=1 // pred_fallthru
      _
    %3186 = vsyncpa [#allocation8], 1
    %3187 = vsyncpa [#allocation11], 1
    %3188 = vsyncpa [#allocation14], 1
    %3189 = vsyncpa [#allocation9], 1

</llo_original>
